<compile_context>
chip_gen: v7x
topology: tpu7x:2x2x1
jax: 0.10.0
libtpu: 0.0.40
codegen_flags: <defaults>
</compile_context>

<pallas_src>
import numpy as np
import jax
import jax.numpy as jnp
from jax.experimental import pallas as pl
from jax.experimental.pallas import tpu as pltpu


# ------------------------------ tiling helpers ------------------------------

def _pick_tile(m, max_tile=2048):
    """Largest multiple of 128 that divides m (<= max_tile); else m itself."""
    if m % 128 != 0:
        return m
    t = min(m, max_tile)
    t -= t % 128
    while m % t != 0:
        t -= 128
    return t


_CP2 = pltpu.CompilerParams(dimension_semantics=("parallel", "parallel"),
                            vmem_limit_bytes=32 * 1024 * 1024)
_CP1 = pltpu.CompilerParams(dimension_semantics=("parallel",),
                            vmem_limit_bytes=32 * 1024 * 1024)


# ------------------------------ Pallas kernels ------------------------------

def _matmul_cf_kernel(x_ref, w_ref, b_ref, o_ref):
    # o = W @ X + b   with X = (K, Tm) pixel tile (lanes), W = (f, K) resident.
    o_ref[0] = (jnp.dot(w_ref[...], x_ref[0],
                        preferred_element_type=jnp.float32) + b_ref[...])


def matmul_bias_cf(x, w, b, tm=None):
    """o[n] = w @ x[n] + b ; x:(N,K,M), w:(f,K), b:(f,1) -> (N,f,M)."""
    N, K, M = x.shape
    f = w.shape[0]
    if tm is None or tm > M or M % tm != 0:
        tm = M
    return pl.pallas_call(
        _matmul_cf_kernel,
        out_shape=jax.ShapeDtypeStruct((N, f, M), jnp.float32),
        grid=(N, M // tm),
        in_specs=[pl.BlockSpec((1, K, tm), lambda n, m: (n, 0, m)),
                  pl.BlockSpec((f, K), lambda n, m: (0, 0)),
                  pl.BlockSpec((f, 1), lambda n, m: (0, 0))],
        out_specs=pl.BlockSpec((1, f, tm), lambda n, m: (n, 0, m)),
        compiler_params=_CP2,
    )(x, w, b)


def _maxpool_kernel(p_ref, o_ref):
    # Pairwise max tree over the 49 window taps -> pure VPU elementwise maxes.
    kk = p_ref.shape[1]
    vals = [p_ref[0, k] for k in range(kk)]           # each (f, Hp*Wp)
    while len(vals) > 1:
        nxt = [jnp.maximum(vals[i], vals[i + 1])
               for i in range(0, len(vals) - 1, 2)]
        if len(vals) % 2:
            nxt.append(vals[-1])
        vals = nxt
    o_ref[0] = vals[0]


def maxpool_windows(p):
    """p: (N, KK, f, M) window taps -> elementwise max over KK -> (N, f, M)."""
    N, KK, f, M = p.shape
    return pl.pallas_call(
        _maxpool_kernel,
        out_shape=jax.ShapeDtypeStruct((N, f, M), jnp.float32),
        grid=(N,),
        in_specs=[pl.BlockSpec((1, KK, f, M), lambda n: (n, 0, 0, 0))],
        out_specs=pl.BlockSpec((1, f, M), lambda n: (n, 0, 0)),
        compiler_params=_CP1,
    )(p)


def _esa_tail_kernel(x_ref, c3_ref, bt_ref, w1_ref, b1_ref, wf_ref, bf_ref,
                     w4_ref, b4_ref, o_ref):
    xb = x_ref[0]                                                     # (C, Tm)
    c1 = jnp.dot(w1_ref[...], xb,
                 preferred_element_type=jnp.float32) + b1_ref[...]    # conv1
    cf = jnp.dot(wf_ref[...], c1,
                 preferred_element_type=jnp.float32) + bf_ref[...]    # conv_f
    c3u = jnp.dot(c3_ref[0], bt_ref[...],
                  preferred_element_type=jnp.float32)                 # bilinear
    c4 = jnp.dot(w4_ref[...], c3u + cf,
                 preferred_element_type=jnp.float32) + b4_ref[...]    # conv4
    o_ref[0] = xb * jax.nn.sigmoid(c4)                                # gate


def esa_tail(x, c3, bt, w1, b1, wf, bf, w4, b4, tm):
    """Fused conv_f + bilinear upsample + conv4 + sigmoid + x*m (conv1 recomputed)."""
    N, C, M = x.shape
    f, KQ = c3.shape[1], c3.shape[2]
    if M % tm != 0:
        tm = M
    return pl.pallas_call(
        _esa_tail_kernel,
        out_shape=jax.ShapeDtypeStruct((N, C, M), jnp.float32),
        grid=(N, M // tm),
        in_specs=[pl.BlockSpec((1, C, tm), lambda n, m: (n, 0, m)),
                  pl.BlockSpec((1, f, KQ), lambda n, m: (n, 0, 0)),
                  pl.BlockSpec((KQ, tm), lambda n, m: (0, m)),
                  pl.BlockSpec((f, C), lambda n, m: (0, 0)),
                  pl.BlockSpec((f, 1), lambda n, m: (0, 0)),
                  pl.BlockSpec((f, f), lambda n, m: (0, 0)),
                  pl.BlockSpec((f, 1), lambda n, m: (0, 0)),
                  pl.BlockSpec((C, f), lambda n, m: (0, 0)),
                  pl.BlockSpec((C, 1), lambda n, m: (0, 0))],
        out_specs=pl.BlockSpec((1, C, tm), lambda n, m: (n, 0, m)),
        compiler_params=_CP2,
    )(x, c3, bt, w1, b1, wf, bf, w4, b4)


# --------------------------------- XLA glue ---------------------------------
# TODO(synk): tap/window extraction below is pure data re-org on the already-
# downsampled maps; done with XLA strided slices rather than in-kernel pl.ds.

def _conv_taps_strided(x4, k, stride):
    """k x k shifted tap views (NCHW). Returns list of (N,C,Ho,Wo), Ho, Wo."""
    N, C, H, W = x4.shape
    Ho = (H - k) // stride + 1
    Wo = (W - k) // stride + 1
    taps = []
    for ky in range(k):
        for kx in range(k):
            taps.append(x4[:, :, ky:ky + stride * (Ho - 1) + 1:stride,
                              kx:kx + stride * (Wo - 1) + 1:stride])
    return taps, Ho, Wo


def _bilinear_matrix(out_size, in_size):
    """PyTorch F.interpolate(mode='bilinear', align_corners=False) 1-D weights."""
    A = np.zeros((out_size, in_size), dtype=np.float32)
    scale = in_size / out_size
    for i in range(out_size):
        src = (i + 0.5) * scale - 0.5
        if src < 0.0:
            src = 0.0
        i0 = min(int(np.floor(src)), in_size - 1)
        i1 = i0 + 1 if i0 < in_size - 1 else i0
        lam = src - i0
        A[i, i0] += 1.0 - lam
        A[i, i1] += lam
    return A


# -------------------------------- ESA forward -------------------------------

def esa_forward(x_nchw, params):
    N, C, H, W = x_nchw.shape
    f = params["w1"].shape[0]
    M = H * W

    x = x_nchw.astype(jnp.float32).reshape(N, C, M)          # pixels -> lanes
    tm = _pick_tile(M)

    # weights in channels-first matmul layout
    w1 = params["w1"][:, :, 0, 0]                            # (f, C)
    b1 = params["b1"].reshape(f, 1)
    wf = params["wf"][:, :, 0, 0]                            # (f, f)
    bf = params["bf"].reshape(f, 1)
    w4 = params["w4"][:, :, 0, 0]                            # (C, f)
    b4 = params["b4"].reshape(C, 1)
    w2 = params["w2"].transpose(0, 2, 3, 1).reshape(f, 9 * f)  # (cout; ky,kx,cin)
    b2 = params["b2"].reshape(f, 1)
    w3 = params["w3"].transpose(0, 2, 3, 1).reshape(f, 9 * f)
    b3 = params["b3"].reshape(f, 1)

    # conv1 (1x1): n_feats -> f (needed at full res by the conv2 branch)
    c1_ = matmul_bias_cf(x, w1, b1, tm)                      # (N, f, M)

    # conv2 (3x3, stride 2, pad 0): stride-2 tap views -> one per-batch matmul
    taps2, Ho, Wo = _conv_taps_strided(c1_.reshape(N, f, H, W), 3, 2)
    p2 = jnp.concatenate(taps2, axis=1).reshape(N, 9 * f, Ho * Wo)
    c1b = matmul_bias_cf(p2, w2, b2)                         # (N, f, Ho*Wo)

    # max_pool2d(kernel=7, stride=3): pairwise-max tree over 49 window views
    mtaps, Hp, Wp = _conv_taps_strided(c1b.reshape(N, f, Ho, Wo), 7, 3)
    mp = jnp.stack(mtaps, axis=1).reshape(N, 49, f, Hp * Wp)
    v_max = maxpool_windows(mp)                              # (N, f, Hp*Wp)

    # conv3 (3x3, stride 1, pad 1) on the tiny pooled map
    vp = jnp.pad(v_max.reshape(N, f, Hp, Wp), ((0, 0), (0, 0), (1, 1), (1, 1)))
    taps3, Hp3, Wp3 = _conv_taps_strided(vp, 3, 1)
    p3 = jnp.concatenate(taps3, axis=1).reshape(N, 9 * f, Hp3 * Wp3)
    c3 = matmul_bias_cf(p3, w3, b3)                          # (N, f, Hp3*Wp3)

    # separable bilinear (align_corners=False) as a (Hp3*Wp3, H*W) tap matrix,
    # consumed directly inside the fused tail kernel (no c3_up in HBM).
    A_h = _bilinear_matrix(H, Hp3)                           # (H, Hp3)
    A_w = _bilinear_matrix(W, Wp3)                           # (W, Wp3)
    bt = jnp.asarray(
        np.einsum("yk,xl->klyx", A_h, A_w).reshape(Hp3 * Wp3, M))  # (taps, M)

    # fused tail: conv1 (recomputed in-register) -> conv_f, bilinear upsample,
    # conv4, sigmoid, x * m
    out = esa_tail(x, c3, bt, w1, b1, wf, bf, w4, b4, tm)    # (N, C, M)
    return out.reshape(N, C, H, W)


def init_params(key, n_feats, f):
    ks = jax.random.split(key, 10)

    def w(k, shape, scale=0.1):
        return jax.random.normal(k, shape, jnp.float32) * scale

    return dict(
        w1=w(ks[0], (f, n_feats, 1, 1)), b1=w(ks[1], (f,), 0.01),
        wf=w(ks[2], (f, f, 1, 1)),       bf=w(ks[3], (f,), 0.01),
        w2=w(ks[4], (f, f, 3, 3)),       b2=w(ks[5], (f,), 0.01),
        w3=w(ks[6], (f, f, 3, 3)),       b3=w(ks[7], (f,), 0.01),
        w4=w(ks[8], (n_feats, f, 1, 1)), b4=w(ks[9], (n_feats,), 0.01),
    )


if __name__ == "__main__":
    key = jax.random.PRNGKey(0)
    k_x, k_p = jax.random.split(key)

    N, n_feats, H, W = 2, 8, 32, 32          # conv2 -> 15x15, pool -> 3x3,
    esa_channels = 4                         # upsample back to 32x32

    x = jax.random.normal(k_x, (N, n_feats, H, W), jnp.float32)
    params = init_params(k_p, n_feats, esa_channels)

    out = jax.jit(esa_forward)(x, params)
    out = jax.block_until_ready(out)

    assert out.shape == (N, n_feats, H, W)
    assert bool(jnp.all(jnp.isfinite(out)))
    print("KERNEL_OK")
</pallas_src>

<mosaic_0001>
module attributes {stable_mosaic.version = 11 : i64} {
  func.func @_matmul_cf_kernel(%arg0: i32, %arg1: i32, %arg2: memref<1x8x1024xf32, #tpu.memory_space<vmem>>, %arg3: memref<4x8xf32, #tpu.memory_space<vmem>>, %arg4: memref<4x1xf32, #tpu.memory_space<vmem>>, %arg5: memref<1x4x1024xf32, #tpu.memory_space<vmem>>) attributes {dimension_semantics = [#tpu.dimension_semantics<parallel>, #tpu.dimension_semantics<parallel>], iteration_bounds = array<i64: 2, 1>, scalar_prefetch = 0 : i64, scratch_operands = 0 : i64, tpu.core_type = #tpu.core_type<tc>, window_params = [{transform_indices = @transform_0, window_bounds = array<i64: 1, 8, 1024>}, {pipeline_mode = #tpu.pipeline_mode<synchronous>, transform_indices = @transform_1, window_bounds = array<i64: 4, 8>}, {pipeline_mode = #tpu.pipeline_mode<synchronous>, transform_indices = @transform_2, window_bounds = array<i64: 4, 1>}, {transform_indices = @transform_3, window_bounds = array<i64: 1, 4, 1024>}]} {
    %c0 = arith.constant 0 : index
    %c0_0 = arith.constant 0 : index
    %0 = vector.load %arg3[%c0, %c0_0] : memref<4x8xf32, #tpu.memory_space<vmem>>, vector<4x8xf32>
    %c0_1 = arith.constant 0 : index
    %c0_2 = arith.constant 0 : index
    %c0_3 = arith.constant 0 : index
    %1 = vector.load %arg2[%c0_1, %c0_2, %c0_3] : memref<1x8x1024xf32, #tpu.memory_space<vmem>>, vector<1x8x1024xf32>
    %2 = vector.shape_cast %1 : vector<1x8x1024xf32> to vector<8x1024xf32>
    %cst = arith.constant dense<0.000000e+00> : vector<4x1024xf32>
    %3 = tpu.matmul %0, %2, %cst {dimension_numbers = #tpu.dot_dimension_numbers<[1], [0], [0], [1], [0, 0, 1, 1], [], []>} : vector<4x8xf32>, vector<8x1024xf32>, vector<4x1024xf32> -> vector<4x1024xf32>
    %c0_4 = arith.constant 0 : index
    %c0_5 = arith.constant 0 : index
    %4 = vector.load %arg4[%c0_4, %c0_5] : memref<4x1xf32, #tpu.memory_space<vmem>>, vector<4x1xf32>
    %5 = vector.broadcast %4 : vector<4x1xf32> to vector<4x1024xf32>
    %6 = arith.addf %3, %5 : vector<4x1024xf32>
    %c0_6 = arith.constant 0 : index
    %c0_7 = arith.constant 0 : index
    %c0_8 = arith.constant 0 : index
    %7 = vector.load %arg5[%c0_6, %c0_7, %c0_8] : memref<1x4x1024xf32, #tpu.memory_space<vmem>>, vector<1x4x1024xf32>
    %8 = vector.shape_cast %7 : vector<1x4x1024xf32> to vector<4x1024xf32>
    %9 = vector.shape_cast %6 : vector<4x1024xf32> to vector<1x4x1024xf32>
    tpu.vector_store %arg5[%c0_6, %c0_7, %c0_8], %9 {strides = array<i32>} : memref<1x4x1024xf32, #tpu.memory_space<vmem>>, vector<1x4x1024xf32>,
    return
  }
  func.func @transform_0(%arg0: i32, %arg1: i32) -> (i32, i32, i32) {
    %c0_i32 = arith.constant 0 : i32
    %c0_i32_0 = arith.constant 0 : i32
    return %arg0, %c0_i32, %arg1 : i32, i32, i32
  }
  func.func @transform_1(%arg0: i32, %arg1: i32) -> (i32, i32) {
    %c0_i32 = arith.constant 0 : i32
    %c0_i32_0 = arith.constant 0 : i32
    %c0_i32_1 = arith.constant 0 : i32
    return %c0_i32, %c0_i32_0 : i32, i32
  }
  func.func @transform_2(%arg0: i32, %arg1: i32) -> (i32, i32) {
    %c0_i32 = arith.constant 0 : i32
    %c0_i32_0 = arith.constant 0 : i32
    %c0_i32_1 = arith.constant 0 : i32
    return %c0_i32, %c0_i32_0 : i32, i32
  }
  func.func @transform_3(%arg0: i32, %arg1: i32) -> (i32, i32, i32) {
    %c0_i32 = arith.constant 0 : i32
    %c0_i32_0 = arith.constant 0 : i32
    return %arg0, %c0_i32, %arg1 : i32, i32, i32
  }
}

module attributes {stable_mosaic.version = 11 : i64} {
  func.func @_matmul_cf_kernel(%arg0: i32, %arg1: i32, %arg2: memref<1x36x225xf32, #tpu.memory_space<vmem>>, %arg3: memref<4x36xf32, #tpu.memory_space<vmem>>, %arg4: memref<4x1xf32, #tpu.memory_space<vmem>>, %arg5: memref<1x4x225xf32, #tpu.memory_space<vmem>>) attributes {dimension_semantics = [#tpu.dimension_semantics<parallel>, #tpu.dimension_semantics<parallel>], iteration_bounds = array<i64: 2, 1>, scalar_prefetch = 0 : i64, scratch_operands = 0 : i64, tpu.core_type = #tpu.core_type<tc>, window_params = [{transform_indices = @transform_0, window_bounds = array<i64: 1, 36, 225>}, {pipeline_mode = #tpu.pipeline_mode<synchronous>, transform_indices = @transform_1, window_bounds = array<i64: 4, 36>}, {pipeline_mode = #tpu.pipeline_mode<synchronous>, transform_indices = @transform_2, window_bounds = array<i64: 4, 1>}, {transform_indices = @transform_3, window_bounds = array<i64: 1, 4, 225>}]} {
    %c0 = arith.constant 0 : index
    %c0_0 = arith.constant 0 : index
    %0 = vector.load %arg3[%c0, %c0_0] : memref<4x36xf32, #tpu.memory_space<vmem>>, vector<4x36xf32>
    %c0_1 = arith.constant 0 : index
    %c0_2 = arith.constant 0 : index
    %c0_3 = arith.constant 0 : index
    %1 = vector.load %arg2[%c0_1, %c0_2, %c0_3] : memref<1x36x225xf32, #tpu.memory_space<vmem>>, vector<1x36x225xf32>
    %2 = vector.shape_cast %1 : vector<1x36x225xf32> to vector<36x225xf32>
    %cst = arith.constant dense<0.000000e+00> : vector<4x225xf32>
    %3 = tpu.matmul %0, %2, %cst {dimension_numbers = #tpu.dot_dimension_numbers<[1], [0], [0], [1], [0, 0, 1, 1], [], []>} : vector<4x36xf32>, vector<36x225xf32>, vector<4x225xf32> -> vector<4x225xf32>
    %c0_4 = arith.constant 0 : index
    %c0_5 = arith.constant 0 : index
    %4 = vector.load %arg4[%c0_4, %c0_5] : memref<4x1xf32, #tpu.memory_space<vmem>>, vector<4x1xf32>
    %5 = vector.broadcast %4 : vector<4x1xf32> to vector<4x225xf32>
    %6 = arith.addf %3, %5 : vector<4x225xf32>
    %c0_6 = arith.constant 0 : index
    %c0_7 = arith.constant 0 : index
    %c0_8 = arith.constant 0 : index
    %7 = vector.load %arg5[%c0_6, %c0_7, %c0_8] : memref<1x4x225xf32, #tpu.memory_space<vmem>>, vector<1x4x225xf32>
    %8 = vector.shape_cast %7 : vector<1x4x225xf32> to vector<4x225xf32>
    %9 = vector.shape_cast %6 : vector<4x225xf32> to vector<1x4x225xf32>
    tpu.vector_store %arg5[%c0_6, %c0_7, %c0_8], %9 {strides = array<i32>} : memref<1x4x225xf32, #tpu.memory_space<vmem>>, vector<1x4x225xf32>,
    return
  }
  func.func @transform_0(%arg0: i32, %arg1: i32) -> (i32, i32, i32) {
    %c0_i32 = arith.constant 0 : i32
    %c0_i32_0 = arith.constant 0 : i32
    return %arg0, %c0_i32, %arg1 : i32, i32, i32
  }
  func.func @transform_1(%arg0: i32, %arg1: i32) -> (i32, i32) {
    %c0_i32 = arith.constant 0 : i32
    %c0_i32_0 = arith.constant 0 : i32
    %c0_i32_1 = arith.constant 0 : i32
    return %c0_i32, %c0_i32_0 : i32, i32
  }
  func.func @transform_2(%arg0: i32, %arg1: i32) -> (i32, i32) {
    %c0_i32 = arith.constant 0 : i32
    %c0_i32_0 = arith.constant 0 : i32
    %c0_i32_1 = arith.constant 0 : i32
    return %c0_i32, %c0_i32_0 : i32, i32
  }
  func.func @transform_3(%arg0: i32, %arg1: i32) -> (i32, i32, i32) {
    %c0_i32 = arith.constant 0 : i32
    %c0_i32_0 = arith.constant 0 : i32
    return %arg0, %c0_i32, %arg1 : i32, i32, i32
  }
}

module attributes {stable_mosaic.version = 11 : i64} {
  func.func @_maxpool_kernel(%arg0: i32, %arg1: memref<1x49x4x9xf32, #tpu.memory_space<vmem>>, %arg2: memref<1x4x9xf32, #tpu.memory_space<vmem>>) attributes {dimension_semantics = [#tpu.dimension_semantics<parallel>], iteration_bounds = array<i64: 2>, scalar_prefetch = 0 : i64, scratch_operands = 0 : i64, tpu.core_type = #tpu.core_type<tc>, window_params = [{transform_indices = @transform_0, window_bounds = array<i64: 1, 49, 4, 9>}, {transform_indices = @transform_1, window_bounds = array<i64: 1, 4, 9>}]} {
    %c0 = arith.constant 0 : index
    %c0_0 = arith.constant 0 : index
    %c0_1 = arith.constant 0 : index
    %c0_2 = arith.constant 0 : index
    %0 = vector.load %arg1[%c0, %c0_0, %c0_1, %c0_2] : memref<1x49x4x9xf32, #tpu.memory_space<vmem>>, vector<1x1x4x9xf32>
    %1 = vector.shape_cast %0 : vector<1x1x4x9xf32> to vector<4x9xf32>
    %c0_3 = arith.constant 0 : index
    %c1 = arith.constant 1 : index
    %c0_4 = arith.constant 0 : index
    %c0_5 = arith.constant 0 : index
    %2 = vector.load %arg1[%c0_3, %c1, %c0_4, %c0_5] : memref<1x49x4x9xf32, #tpu.memory_space<vmem>>, vector<1x1x4x9xf32>
    %3 = vector.shape_cast %2 : vector<1x1x4x9xf32> to vector<4x9xf32>
    %c0_6 = arith.constant 0 : index
    %c2 = arith.constant 2 : index
    %c0_7 = arith.constant 0 : index
    %c0_8 = arith.constant 0 : index
    %4 = vector.load %arg1[%c0_6, %c2, %c0_7, %c0_8] : memref<1x49x4x9xf32, #tpu.memory_space<vmem>>, vector<1x1x4x9xf32>
    %5 = vector.shape_cast %4 : vector<1x1x4x9xf32> to vector<4x9xf32>
    %c0_9 = arith.constant 0 : index
    %c3 = arith.constant 3 : index
    %c0_10 = arith.constant 0 : index
    %c0_11 = arith.constant 0 : index
    %6 = vector.load %arg1[%c0_9, %c3, %c0_10, %c0_11] : memref<1x49x4x9xf32, #tpu.memory_space<vmem>>, vector<1x1x4x9xf32>
    %7 = vector.shape_cast %6 : vector<1x1x4x9xf32> to vector<4x9xf32>
    %c0_12 = arith.constant 0 : index
    %c4 = arith.constant 4 : index
    %c0_13 = arith.constant 0 : index
    %c0_14 = arith.constant 0 : index
    %8 = vector.load %arg1[%c0_12, %c4, %c0_13, %c0_14] : memref<1x49x4x9xf32, #tpu.memory_space<vmem>>, vector<1x1x4x9xf32>
    %9 = vector.shape_cast %8 : vector<1x1x4x9xf32> to vector<4x9xf32>
    %c0_15 = arith.constant 0 : index
    %c5 = arith.constant 5 : index
    %c0_16 = arith.constant 0 : index
    %c0_17 = arith.constant 0 : index
    %10 = vector.load %arg1[%c0_15, %c5, %c0_16, %c0_17] : memref<1x49x4x9xf32, #tpu.memory_space<vmem>>, vector<1x1x4x9xf32>
    %11 = vector.shape_cast %10 : vector<1x1x4x9xf32> to vector<4x9xf32>
    %c0_18 = arith.constant 0 : index
    %c6 = arith.constant 6 : index
    %c0_19 = arith.constant 0 : index
    %c0_20 = arith.constant 0 : index
    %12 = vector.load %arg1[%c0_18, %c6, %c0_19, %c0_20] : memref<1x49x4x9xf32, #tpu.memory_space<vmem>>, vector<1x1x4x9xf32>
    %13 = vector.shape_cast %12 : vector<1x1x4x9xf32> to vector<4x9xf32>
    %c0_21 = arith.constant 0 : index
    %c7 = arith.constant 7 : index
    %c0_22 = arith.constant 0 : index
    %c0_23 = arith.constant 0 : index
    %14 = vector.load %arg1[%c0_21, %c7, %c0_22, %c0_23] : memref<1x49x4x9xf32, #tpu.memory_space<vmem>>, vector<1x1x4x9xf32>
    %15 = vector.shape_cast %14 : vector<1x1x4x9xf32> to vector<4x9xf32>
    %c0_24 = arith.constant 0 : index
    %c8 = arith.constant 8 : index
    %c0_25 = arith.constant 0 : index
    %c0_26 = arith.constant 0 : index
    %16 = vector.load %arg1[%c0_24, %c8, %c0_25, %c0_26] : memref<1x49x4x9xf32, #tpu.memory_space<vmem>>, vector<1x1x4x9xf32>
    %17 = vector.shape_cast %16 : vector<1x1x4x9xf32> to vector<4x9xf32>
    %c0_27 = arith.constant 0 : index
    %c9 = arith.constant 9 : index
    %c0_28 = arith.constant 0 : index
    %c0_29 = arith.constant 0 : index
    %18 = vector.load %arg1[%c0_27, %c9, %c0_28, %c0_29] : memref<1x49x4x9xf32, #tpu.memory_space<vmem>>, vector<1x1x4x9xf32>
    %19 = vector.shape_cast %18 : vector<1x1x4x9xf32> to vector<4x9xf32>
    %c0_30 = arith.constant 0 : index
    %c10 = arith.constant 10 : index
    %c0_31 = arith.constant 0 : index
    %c0_32 = arith.constant 0 : index
    %20 = vector.load %arg1[%c0_30, %c10, %c0_31, %c0_32] : memref<1x49x4x9xf32, #tpu.memory_space<vmem>>, vector<1x1x4x9xf32>
    %21 = vector.shape_cast %20 : vector<1x1x4x9xf32> to vector<4x9xf32>
    %c0_33 = arith.constant 0 : index
    %c11 = arith.constant 11 : index
    %c0_34 = arith.constant 0 : index
    %c0_35 = arith.constant 0 : index
    %22 = vector.load %arg1[%c0_33, %c11, %c0_34, %c0_35] : memref<1x49x4x9xf32, #tpu.memory_space<vmem>>, vector<1x1x4x9xf32>
    %23 = vector.shape_cast %22 : vector<1x1x4x9xf32> to vector<4x9xf32>
    %c0_36 = arith.constant 0 : index
    %c12 = arith.constant 12 : index
    %c0_37 = arith.constant 0 : index
    %c0_38 = arith.constant 0 : index
    %24 = vector.load %arg1[%c0_36, %c12, %c0_37, %c0_38] : memref<1x49x4x9xf32, #tpu.memory_space<vmem>>, vector<1x1x4x9xf32>
    %25 = vector.shape_cast %24 : vector<1x1x4x9xf32> to vector<4x9xf32>
    %c0_39 = arith.constant 0 : index
    %c13 = arith.constant 13 : index
    %c0_40 = arith.constant 0 : index
    %c0_41 = arith.constant 0 : index
    %26 = vector.load %arg1[%c0_39, %c13, %c0_40, %c0_41] : memref<1x49x4x9xf32, #tpu.memory_space<vmem>>, vector<1x1x4x9xf32>
    %27 = vector.shape_cast %26 : vector<1x1x4x9xf32> to vector<4x9xf32>
    %c0_42 = arith.constant 0 : index
    %c14 = arith.constant 14 : index
    %c0_43 = arith.constant 0 : index
    %c0_44 = arith.constant 0 : index
    %28 = vector.load %arg1[%c0_42, %c14, %c0_43, %c0_44] : memref<1x49x4x9xf32, #tpu.memory_space<vmem>>, vector<1x1x4x9xf32>
    %29 = vector.shape_cast %28 : vector<1x1x4x9xf32> to vector<4x9xf32>
    %c0_45 = arith.constant 0 : index
    %c15 = arith.constant 15 : index
    %c0_46 = arith.constant 0 : index
    %c0_47 = arith.constant 0 : index
    %30 = vector.load %arg1[%c0_45, %c15, %c0_46, %c0_47] : memref<1x49x4x9xf32, #tpu.memory_space<vmem>>, vector<1x1x4x9xf32>
    %31 = vector.shape_cast %30 : vector<1x1x4x9xf32> to vector<4x9xf32>
    %c0_48 = arith.constant 0 : index
    %c16 = arith.constant 16 : index
    %c0_49 = arith.constant 0 : index
    %c0_50 = arith.constant 0 : index
    %32 = vector.load %arg1[%c0_48, %c16, %c0_49, %c0_50] : memref<1x49x4x9xf32, #tpu.memory_space<vmem>>, vector<1x1x4x9xf32>
    %33 = vector.shape_cast %32 : vector<1x1x4x9xf32> to vector<4x9xf32>
    %c0_51 = arith.constant 0 : index
    %c17 = arith.constant 17 : index
    %c0_52 = arith.constant 0 : index
    %c0_53 = arith.constant 0 : index
    %34 = vector.load %arg1[%c0_51, %c17, %c0_52, %c0_53] : memref<1x49x4x9xf32, #tpu.memory_space<vmem>>, vector<1x1x4x9xf32>
    %35 = vector.shape_cast %34 : vector<1x1x4x9xf32> to vector<4x9xf32>
    %c0_54 = arith.constant 0 : index
    %c18 = arith.constant 18 : index
    %c0_55 = arith.constant 0 : index
    %c0_56 = arith.constant 0 : index
    %36 = vector.load %arg1[%c0_54, %c18, %c0_55, %c0_56] : memref<1x49x4x9xf32, #tpu.memory_space<vmem>>, vector<1x1x4x9xf32>
    %37 = vector.shape_cast %36 : vector<1x1x4x9xf32> to vector<4x9xf32>
    %c0_57 = arith.constant 0 : index
    %c19 = arith.constant 19 : index
    %c0_58 = arith.constant 0 : index
    %c0_59 = arith.constant 0 : index
    %38 = vector.load %arg1[%c0_57, %c19, %c0_58, %c0_59] : memref<1x49x4x9xf32, #tpu.memory_space<vmem>>, vector<1x1x4x9xf32>
    %39 = vector.shape_cast %38 : vector<1x1x4x9xf32> to vector<4x9xf32>
    %c0_60 = arith.constant 0 : index
    %c20 = arith.constant 20 : index
    %c0_61 = arith.constant 0 : index
    %c0_62 = arith.constant 0 : index
    %40 = vector.load %arg1[%c0_60, %c20, %c0_61, %c0_62] : memref<1x49x4x9xf32, #tpu.memory_space<vmem>>, vector<1x1x4x9xf32>
    %41 = vector.shape_cast %40 : vector<1x1x4x9xf32> to vector<4x9xf32>
    %c0_63 = arith.constant 0 : index
    %c21 = arith.constant 21 : index
    %c0_64 = arith.constant 0 : index
    %c0_65 = arith.constant 0 : index
    %42 = vector.load %arg1[%c0_63, %c21, %c0_64, %c0_65] : memref<1x49x4x9xf32, #tpu.memory_space<vmem>>, vector<1x1x4x9xf32>
    %43 = vector.shape_cast %42 : vector<1x1x4x9xf32> to vector<4x9xf32>
    %c0_66 = arith.constant 0 : index
    %c22 = arith.constant 22 : index
    %c0_67 = arith.constant 0 : index
    %c0_68 = arith.constant 0 : index
    %44 = vector.load %arg1[%c0_66, %c22, %c0_67, %c0_68] : memref<1x49x4x9xf32, #tpu.memory_space<vmem>>, vector<1x1x4x9xf32>
    %45 = vector.shape_cast %44 : vector<1x1x4x9xf32> to vector<4x9xf32>
    %c0_69 = arith.constant 0 : index
    %c23 = arith.constant 23 : index
    %c0_70 = arith.constant 0 : index
    %c0_71 = arith.constant 0 : index
    %46 = vector.load %arg1[%c0_69, %c23, %c0_70, %c0_71] : memref<1x49x4x9xf32, #tpu.memory_space<vmem>>, vector<1x1x4x9xf32>
    %47 = vector.shape_cast %46 : vector<1x1x4x9xf32> to vector<4x9xf32>
    %c0_72 = arith.constant 0 : index
    %c24 = arith.constant 24 : index
    %c0_73 = arith.constant 0 : index
    %c0_74 = arith.constant 0 : index
    %48 = vector.load %arg1[%c0_72, %c24, %c0_73, %c0_74] : memref<1x49x4x9xf32, #tpu.memory_space<vmem>>, vector<1x1x4x9xf32>
    %49 = vector.shape_cast %48 : vector<1x1x4x9xf32> to vector<4x9xf32>
    %c0_75 = arith.constant 0 : index
    %c25 = arith.constant 25 : index
    %c0_76 = arith.constant 0 : index
    %c0_77 = arith.constant 0 : index
    %50 = vector.load %arg1[%c0_75, %c25, %c0_76, %c0_77] : memref<1x49x4x9xf32, #tpu.memory_space<vmem>>, vector<1x1x4x9xf32>
    %51 = vector.shape_cast %50 : vector<1x1x4x9xf32> to vector<4x9xf32>
    %c0_78 = arith.constant 0 : index
    %c26 = arith.constant 26 : index
    %c0_79 = arith.constant 0 : index
    %c0_80 = arith.constant 0 : index
    %52 = vector.load %arg1[%c0_78, %c26, %c0_79, %c0_80] : memref<1x49x4x9xf32, #tpu.memory_space<vmem>>, vector<1x1x4x9xf32>
    %53 = vector.shape_cast %52 : vector<1x1x4x9xf32> to vector<4x9xf32>
    %c0_81 = arith.constant 0 : index
    %c27 = arith.constant 27 : index
    %c0_82 = arith.constant 0 : index
    %c0_83 = arith.constant 0 : index
    %54 = vector.load %arg1[%c0_81, %c27, %c0_82, %c0_83] : memref<1x49x4x9xf32, #tpu.memory_space<vmem>>, vector<1x1x4x9xf32>
    %55 = vector.shape_cast %54 : vector<1x1x4x9xf32> to vector<4x9xf32>
    %c0_84 = arith.constant 0 : index
    %c28 = arith.constant 28 : index
    %c0_85 = arith.constant 0 : index
    %c0_86 = arith.constant 0 : index
    %56 = vector.load %arg1[%c0_84, %c28, %c0_85, %c0_86] : memref<1x49x4x9xf32, #tpu.memory_space<vmem>>, vector<1x1x4x9xf32>
    %57 = vector.shape_cast %56 : vector<1x1x4x9xf32> to vector<4x9xf32>
    %c0_87 = arith.constant 0 : index
    %c29 = arith.constant 29 : index
    %c0_88 = arith.constant 0 : index
    %c0_89 = arith.constant 0 : index
    %58 = vector.load %arg1[%c0_87, %c29, %c0_88, %c0_89] : memref<1x49x4x9xf32, #tpu.memory_space<vmem>>, vector<1x1x4x9xf32>
    %59 = vector.shape_cast %58 : vector<1x1x4x9xf32> to vector<4x9xf32>
    %c0_90 = arith.constant 0 : index
    %c30 = arith.constant 30 : index
    %c0_91 = arith.constant 0 : index
    %c0_92 = arith.constant 0 : index
    %60 = vector.load %arg1[%c0_90, %c30, %c0_91, %c0_92] : memref<1x49x4x9xf32, #tpu.memory_space<vmem>>, vector<1x1x4x9xf32>
    %61 = vector.shape_cast %60 : vector<1x1x4x9xf32> to vector<4x9xf32>
    %c0_93 = arith.constant 0 : index
    %c31 = arith.constant 31 : index
    %c0_94 = arith.constant 0 : index
    %c0_95 = arith.constant 0 : index
    %62 = vector.load %arg1[%c0_93, %c31, %c0_94, %c0_95] : memref<1x49x4x9xf32, #tpu.memory_space<vmem>>, vector<1x1x4x9xf32>
    %63 = vector.shape_cast %62 : vector<1x1x4x9xf32> to vector<4x9xf32>
    %c0_96 = arith.constant 0 : index
    %c32 = arith.constant 32 : index
    %c0_97 = arith.constant 0 : index
    %c0_98 = arith.constant 0 : index
    %64 = vector.load %arg1[%c0_96, %c32, %c0_97, %c0_98] : memref<1x49x4x9xf32, #tpu.memory_space<vmem>>, vector<1x1x4x9xf32>
    %65 = vector.shape_cast %64 : vector<1x1x4x9xf32> to vector<4x9xf32>
    %c0_99 = arith.constant 0 : index
    %c33 = arith.constant 33 : index
    %c0_100 = arith.constant 0 : index
    %c0_101 = arith.constant 0 : index
    %66 = vector.load %arg1[%c0_99, %c33, %c0_100, %c0_101] : memref<1x49x4x9xf32, #tpu.memory_space<vmem>>, vector<1x1x4x9xf32>
    %67 = vector.shape_cast %66 : vector<1x1x4x9xf32> to vector<4x9xf32>
    %c0_102 = arith.constant 0 : index
    %c34 = arith.constant 34 : index
    %c0_103 = arith.constant 0 : index
    %c0_104 = arith.constant 0 : index
    %68 = vector.load %arg1[%c0_102, %c34, %c0_103, %c0_104] : memref<1x49x4x9xf32, #tpu.memory_space<vmem>>, vector<1x1x4x9xf32>
    %69 = vector.shape_cast %68 : vector<1x1x4x9xf32> to vector<4x9xf32>
    %c0_105 = arith.constant 0 : index
    %c35 = arith.constant 35 : index
    %c0_106 = arith.constant 0 : index
    %c0_107 = arith.constant 0 : index
    %70 = vector.load %arg1[%c0_105, %c35, %c0_106, %c0_107] : memref<1x49x4x9xf32, #tpu.memory_space<vmem>>, vector<1x1x4x9xf32>
    %71 = vector.shape_cast %70 : vector<1x1x4x9xf32> to vector<4x9xf32>
    %c0_108 = arith.constant 0 : index
    %c36 = arith.constant 36 : index
    %c0_109 = arith.constant 0 : index
    %c0_110 = arith.constant 0 : index
    %72 = vector.load %arg1[%c0_108, %c36, %c0_109, %c0_110] : memref<1x49x4x9xf32, #tpu.memory_space<vmem>>, vector<1x1x4x9xf32>
    %73 = vector.shape_cast %72 : vector<1x1x4x9xf32> to vector<4x9xf32>
    %c0_111 = arith.constant 0 : index
    %c37 = arith.constant 37 : index
    %c0_112 = arith.constant 0 : index
    %c0_113 = arith.constant 0 : index
    %74 = vector.load %arg1[%c0_111, %c37, %c0_112, %c0_113] : memref<1x49x4x9xf32, #tpu.memory_space<vmem>>, vector<1x1x4x9xf32>
    %75 = vector.shape_cast %74 : vector<1x1x4x9xf32> to vector<4x9xf32>
    %c0_114 = arith.constant 0 : index
    %c38 = arith.constant 38 : index
    %c0_115 = arith.constant 0 : index
    %c0_116 = arith.constant 0 : index
    %76 = vector.load %arg1[%c0_114, %c38, %c0_115, %c0_116] : memref<1x49x4x9xf32, #tpu.memory_space<vmem>>, vector<1x1x4x9xf32>
    %77 = vector.shape_cast %76 : vector<1x1x4x9xf32> to vector<4x9xf32>
    %c0_117 = arith.constant 0 : index
    %c39 = arith.constant 39 : index
    %c0_118 = arith.constant 0 : index
    %c0_119 = arith.constant 0 : index
    %78 = vector.load %arg1[%c0_117, %c39, %c0_118, %c0_119] : memref<1x49x4x9xf32, #tpu.memory_space<vmem>>, vector<1x1x4x9xf32>
    %79 = vector.shape_cast %78 : vector<1x1x4x9xf32> to vector<4x9xf32>
    %c0_120 = arith.constant 0 : index
    %c40 = arith.constant 40 : index
    %c0_121 = arith.constant 0 : index
    %c0_122 = arith.constant 0 : index
    %80 = vector.load %arg1[%c0_120, %c40, %c0_121, %c0_122] : memref<1x49x4x9xf32, #tpu.memory_space<vmem>>, vector<1x1x4x9xf32>
    %81 = vector.shape_cast %80 : vector<1x1x4x9xf32> to vector<4x9xf32>
    %c0_123 = arith.constant 0 : index
    %c41 = arith.constant 41 : index
    %c0_124 = arith.constant 0 : index
    %c0_125 = arith.constant 0 : index
    %82 = vector.load %arg1[%c0_123, %c41, %c0_124, %c0_125] : memref<1x49x4x9xf32, #tpu.memory_space<vmem>>, vector<1x1x4x9xf32>
    %83 = vector.shape_cast %82 : vector<1x1x4x9xf32> to vector<4x9xf32>
    %c0_126 = arith.constant 0 : index
    %c42 = arith.constant 42 : index
    %c0_127 = arith.constant 0 : index
    %c0_128 = arith.constant 0 : index
    %84 = vector.load %arg1[%c0_126, %c42, %c0_127, %c0_128] : memref<1x49x4x9xf32, #tpu.memory_space<vmem>>, vector<1x1x4x9xf32>
    %85 = vector.shape_cast %84 : vector<1x1x4x9xf32> to vector<4x9xf32>
    %c0_129 = arith.constant 0 : index
    %c43 = arith.constant 43 : index
    %c0_130 = arith.constant 0 : index
    %c0_131 = arith.constant 0 : index
    %86 = vector.load %arg1[%c0_129, %c43, %c0_130, %c0_131] : memref<1x49x4x9xf32, #tpu.memory_space<vmem>>, vector<1x1x4x9xf32>
    %87 = vector.shape_cast %86 : vector<1x1x4x9xf32> to vector<4x9xf32>
    %c0_132 = arith.constant 0 : index
    %c44 = arith.constant 44 : index
    %c0_133 = arith.constant 0 : index
    %c0_134 = arith.constant 0 : index
    %88 = vector.load %arg1[%c0_132, %c44, %c0_133, %c0_134] : memref<1x49x4x9xf32, #tpu.memory_space<vmem>>, vector<1x1x4x9xf32>
    %89 = vector.shape_cast %88 : vector<1x1x4x9xf32> to vector<4x9xf32>
    %c0_135 = arith.constant 0 : index
    %c45 = arith.constant 45 : index
    %c0_136 = arith.constant 0 : index
    %c0_137 = arith.constant 0 : index
    %90 = vector.load %arg1[%c0_135, %c45, %c0_136, %c0_137] : memref<1x49x4x9xf32, #tpu.memory_space<vmem>>, vector<1x1x4x9xf32>
    %91 = vector.shape_cast %90 : vector<1x1x4x9xf32> to vector<4x9xf32>
    %c0_138 = arith.constant 0 : index
    %c46 = arith.constant 46 : index
    %c0_139 = arith.constant 0 : index
    %c0_140 = arith.constant 0 : index
    %92 = vector.load %arg1[%c0_138, %c46, %c0_139, %c0_140] : memref<1x49x4x9xf32, #tpu.memory_space<vmem>>, vector<1x1x4x9xf32>
    %93 = vector.shape_cast %92 : vector<1x1x4x9xf32> to vector<4x9xf32>
    %c0_141 = arith.constant 0 : index
    %c47 = arith.constant 47 : index
    %c0_142 = arith.constant 0 : index
    %c0_143 = arith.constant 0 : index
    %94 = vector.load %arg1[%c0_141, %c47, %c0_142, %c0_143] : memref<1x49x4x9xf32, #tpu.memory_space<vmem>>, vector<1x1x4x9xf32>
    %95 = vector.shape_cast %94 : vector<1x1x4x9xf32> to vector<4x9xf32>
    %c0_144 = arith.constant 0 : index
    %c48 = arith.constant 48 : index
    %c0_145 = arith.constant 0 : index
    %c0_146 = arith.constant 0 : index
    %96 = vector.load %arg1[%c0_144, %c48, %c0_145, %c0_146] : memref<1x49x4x9xf32, #tpu.memory_space<vmem>>, vector<1x1x4x9xf32>
    %97 = vector.shape_cast %96 : vector<1x1x4x9xf32> to vector<4x9xf32>
    %98 = arith.maximumf %1, %3 : vector<4x9xf32>
    %99 = arith.maximumf %5, %7 : vector<4x9xf32>
    %100 = arith.maximumf %9, %11 : vector<4x9xf32>
    %101 = arith.maximumf %13, %15 : vector<4x9xf32>
    %102 = arith.maximumf %17, %19 : vector<4x9xf32>
    %103 = arith.maximumf %21, %23 : vector<4x9xf32>
    %104 = arith.maximumf %25, %27 : vector<4x9xf32>
    %105 = arith.maximumf %29, %31 : vector<4x9xf32>
    %106 = arith.maximumf %33, %35 : vector<4x9xf32>
    %107 = arith.maximumf %37, %39 : vector<4x9xf32>
    %108 = arith.maximumf %41, %43 : vector<4x9xf32>
    %109 = arith.maximumf %45, %47 : vector<4x9xf32>
    %110 = arith.maximumf %49, %51 : vector<4x9xf32>
    %111 = arith.maximumf %53, %55 : vector<4x9xf32>
    %112 = arith.maximumf %57, %59 : vector<4x9xf32>
    %113 = arith.maximumf %61, %63 : vector<4x9xf32>
    %114 = arith.maximumf %65, %67 : vector<4x9xf32>
    %115 = arith.maximumf %69, %71 : vector<4x9xf32>
    %116 = arith.maximumf %73, %75 : vector<4x9xf32>
    %117 = arith.maximumf %77, %79 : vector<4x9xf32>
    %118 = arith.maximumf %81, %83 : vector<4x9xf32>
    %119 = arith.maximumf %85, %87 : vector<4x9xf32>
    %120 = arith.maximumf %89, %91 : vector<4x9xf32>
    %121 = arith.maximumf %93, %95 : vector<4x9xf32>
    %122 = arith.maximumf %98, %99 : vector<4x9xf32>
    %123 = arith.maximumf %100, %101 : vector<4x9xf32>
    %124 = arith.maximumf %102, %103 : vector<4x9xf32>
    %125 = arith.maximumf %104, %105 : vector<4x9xf32>
    %126 = arith.maximumf %106, %107 : vector<4x9xf32>
    %127 = arith.maximumf %108, %109 : vector<4x9xf32>
    %128 = arith.maximumf %110, %111 : vector<4x9xf32>
    %129 = arith.maximumf %112, %113 : vector<4x9xf32>
    %130 = arith.maximumf %114, %115 : vector<4x9xf32>
    %131 = arith.maximumf %116, %117 : vector<4x9xf32>
    %132 = arith.maximumf %118, %119 : vector<4x9xf32>
    %133 = arith.maximumf %120, %121 : vector<4x9xf32>
    %134 = arith.maximumf %122, %123 : vector<4x9xf32>
    %135 = arith.maximumf %124, %125 : vector<4x9xf32>
    %136 = arith.maximumf %126, %127 : vector<4x9xf32>
    %137 = arith.maximumf %128, %129 : vector<4x9xf32>
    %138 = arith.maximumf %130, %131 : vector<4x9xf32>
    %139 = arith.maximumf %132, %133 : vector<4x9xf32>
    %140 = arith.maximumf %134, %135 : vector<4x9xf32>
    %141 = arith.maximumf %136, %137 : vector<4x9xf32>
    %142 = arith.maximumf %138, %139 : vector<4x9xf32>
    %143 = arith.maximumf %140, %141 : vector<4x9xf32>
    %144 = arith.maximumf %142, %97 : vector<4x9xf32>
    %145 = arith.maximumf %143, %144 : vector<4x9xf32>
    %c0_147 = arith.constant 0 : index
    %c0_148 = arith.constant 0 : index
    %c0_149 = arith.constant 0 : index
    %146 = vector.load %arg2[%c0_147, %c0_148, %c0_149] : memref<1x4x9xf32, #tpu.memory_space<vmem>>, vector<1x4x9xf32>
    %147 = vector.shape_cast %146 : vector<1x4x9xf32> to vector<4x9xf32>
    %148 = vector.shape_cast %145 : vector<4x9xf32> to vector<1x4x9xf32>
    tpu.vector_store %arg2[%c0_147, %c0_148, %c0_149], %148 {strides = array<i32>} : memref<1x4x9xf32, #tpu.memory_space<vmem>>, vector<1x4x9xf32>,
    return
  }
  func.func @transform_0(%arg0: i32) -> (i32, i32, i32, i32) {
    %c0_i32 = arith.constant 0 : i32
    %c0_i32_0 = arith.constant 0 : i32
    %c0_i32_1 = arith.constant 0 : i32
    %c0_i32_2 = arith.constant 0 : i32
    return %arg0, %c0_i32, %c0_i32_0, %c0_i32_1 : i32, i32, i32, i32
  }
  func.func @transform_1(%arg0: i32) -> (i32, i32, i32) {
    %c0_i32 = arith.constant 0 : i32
    %c0_i32_0 = arith.constant 0 : i32
    %c0_i32_1 = arith.constant 0 : i32
    return %arg0, %c0_i32, %c0_i32_0 : i32, i32, i32
  }
}

module attributes {stable_mosaic.version = 11 : i64} {
  func.func @_matmul_cf_kernel(%arg0: i32, %arg1: i32, %arg2: memref<1x36x9xf32, #tpu.memory_space<vmem>>, %arg3: memref<4x36xf32, #tpu.memory_space<vmem>>, %arg4: memref<4x1xf32, #tpu.memory_space<vmem>>, %arg5: memref<1x4x9xf32, #tpu.memory_space<vmem>>) attributes {dimension_semantics = [#tpu.dimension_semantics<parallel>, #tpu.dimension_semantics<parallel>], iteration_bounds = array<i64: 2, 1>, scalar_prefetch = 0 : i64, scratch_operands = 0 : i64, tpu.core_type = #tpu.core_type<tc>, window_params = [{transform_indices = @transform_0, window_bounds = array<i64: 1, 36, 9>}, {pipeline_mode = #tpu.pipeline_mode<synchronous>, transform_indices = @transform_1, window_bounds = array<i64: 4, 36>}, {pipeline_mode = #tpu.pipeline_mode<synchronous>, transform_indices = @transform_2, window_bounds = array<i64: 4, 1>}, {transform_indices = @transform_3, window_bounds = array<i64: 1, 4, 9>}]} {
    %c0 = arith.constant 0 : index
    %c0_0 = arith.constant 0 : index
    %0 = vector.load %arg3[%c0, %c0_0] : memref<4x36xf32, #tpu.memory_space<vmem>>, vector<4x36xf32>
    %c0_1 = arith.constant 0 : index
    %c0_2 = arith.constant 0 : index
    %c0_3 = arith.constant 0 : index
    %1 = vector.load %arg2[%c0_1, %c0_2, %c0_3] : memref<1x36x9xf32, #tpu.memory_space<vmem>>, vector<1x36x9xf32>
    %2 = vector.shape_cast %1 : vector<1x36x9xf32> to vector<36x9xf32>
    %cst = arith.constant dense<0.000000e+00> : vector<4x9xf32>
    %3 = tpu.matmul %0, %2, %cst {dimension_numbers = #tpu.dot_dimension_numbers<[1], [0], [0], [1], [0, 0, 1, 1], [], []>} : vector<4x36xf32>, vector<36x9xf32>, vector<4x9xf32> -> vector<4x9xf32>
    %c0_4 = arith.constant 0 : index
    %c0_5 = arith.constant 0 : index
    %4 = vector.load %arg4[%c0_4, %c0_5] : memref<4x1xf32, #tpu.memory_space<vmem>>, vector<4x1xf32>
    %5 = vector.broadcast %4 : vector<4x1xf32> to vector<4x9xf32>
    %6 = arith.addf %3, %5 : vector<4x9xf32>
    %c0_6 = arith.constant 0 : index
    %c0_7 = arith.constant 0 : index
    %c0_8 = arith.constant 0 : index
    %7 = vector.load %arg5[%c0_6, %c0_7, %c0_8] : memref<1x4x9xf32, #tpu.memory_space<vmem>>, vector<1x4x9xf32>
    %8 = vector.shape_cast %7 : vector<1x4x9xf32> to vector<4x9xf32>
    %9 = vector.shape_cast %6 : vector<4x9xf32> to vector<1x4x9xf32>
    tpu.vector_store %arg5[%c0_6, %c0_7, %c0_8], %9 {strides = array<i32>} : memref<1x4x9xf32, #tpu.memory_space<vmem>>, vector<1x4x9xf32>,
    return
  }
  func.func @transform_0(%arg0: i32, %arg1: i32) -> (i32, i32, i32) {
    %c0_i32 = arith.constant 0 : i32
    %c0_i32_0 = arith.constant 0 : i32
    return %arg0, %c0_i32, %arg1 : i32, i32, i32
  }
  func.func @transform_1(%arg0: i32, %arg1: i32) -> (i32, i32) {
    %c0_i32 = arith.constant 0 : i32
    %c0_i32_0 = arith.constant 0 : i32
    %c0_i32_1 = arith.constant 0 : i32
    return %c0_i32, %c0_i32_0 : i32, i32
  }
  func.func @transform_2(%arg0: i32, %arg1: i32) -> (i32, i32) {
    %c0_i32 = arith.constant 0 : i32
    %c0_i32_0 = arith.constant 0 : i32
    %c0_i32_1 = arith.constant 0 : i32
    return %c0_i32, %c0_i32_0 : i32, i32
  }
  func.func @transform_3(%arg0: i32, %arg1: i32) -> (i32, i32, i32) {
    %c0_i32 = arith.constant 0 : i32
    %c0_i32_0 = arith.constant 0 : i32
    return %arg0, %c0_i32, %arg1 : i32, i32, i32
  }
}

module attributes {stable_mosaic.version = 11 : i64} {
  func.func @_esa_tail_kernel(%arg0: i32, %arg1: i32, %arg2: memref<1x8x1024xf32, #tpu.memory_space<vmem>>, %arg3: memref<1x4x9xf32, #tpu.memory_space<vmem>>, %arg4: memref<9x1024xf32, #tpu.memory_space<vmem>>, %arg5: memref<4x8xf32, #tpu.memory_space<vmem>>, %arg6: memref<4x1xf32, #tpu.memory_space<vmem>>, %arg7: memref<4x4xf32, #tpu.memory_space<vmem>>, %arg8: memref<4x1xf32, #tpu.memory_space<vmem>>, %arg9: memref<8x4xf32, #tpu.memory_space<vmem>>, %arg10: memref<8x1xf32, #tpu.memory_space<vmem>>, %arg11: memref<1x8x1024xf32, #tpu.memory_space<vmem>>) attributes {dimension_semantics = [#tpu.dimension_semantics<parallel>, #tpu.dimension_semantics<parallel>], iteration_bounds = array<i64: 2, 1>, scalar_prefetch = 0 : i64, scratch_operands = 0 : i64, tpu.core_type = #tpu.core_type<tc>, window_params = [{transform_indices = @transform_0, window_bounds = array<i64: 1, 8, 1024>}, {transform_indices = @transform_1, window_bounds = array<i64: 1, 4, 9>}, {transform_indices = @transform_2, window_bounds = array<i64: 9, 1024>}, {pipeline_mode = #tpu.pipeline_mode<synchronous>, transform_indices = @transform_3, window_bounds = array<i64: 4, 8>}, {pipeline_mode = #tpu.pipeline_mode<synchronous>, transform_indices = @transform_4, window_bounds = array<i64: 4, 1>}, {pipeline_mode = #tpu.pipeline_mode<synchronous>, transform_indices = @transform_5, window_bounds = array<i64: 4, 4>}, {pipeline_mode = #tpu.pipeline_mode<synchronous>, transform_indices = @transform_6, window_bounds = array<i64: 4, 1>}, {pipeline_mode = #tpu.pipeline_mode<synchronous>, transform_indices = @transform_7, window_bounds = array<i64: 8, 4>}, {pipeline_mode = #tpu.pipeline_mode<synchronous>, transform_indices = @transform_8, window_bounds = array<i64: 8, 1>}, {transform_indices = @transform_9, window_bounds = array<i64: 1, 8, 1024>}]} {
    %c0 = arith.constant 0 : index
    %c0_0 = arith.constant 0 : index
    %c0_1 = arith.constant 0 : index
    %0 = vector.load %arg2[%c0, %c0_0, %c0_1] : memref<1x8x1024xf32, #tpu.memory_space<vmem>>, vector<1x8x1024xf32>
    %1 = vector.shape_cast %0 : vector<1x8x1024xf32> to vector<8x1024xf32>
    %c0_2 = arith.constant 0 : index
    %c0_3 = arith.constant 0 : index
    %2 = vector.load %arg5[%c0_2, %c0_3] : memref<4x8xf32, #tpu.memory_space<vmem>>, vector<4x8xf32>
    %cst = arith.constant dense<0.000000e+00> : vector<4x1024xf32>
    %3 = tpu.matmul %2, %1, %cst {dimension_numbers = #tpu.dot_dimension_numbers<[1], [0], [0], [1], [0, 0, 1, 1], [], []>} : vector<4x8xf32>, vector<8x1024xf32>, vector<4x1024xf32> -> vector<4x1024xf32>
    %c0_4 = arith.constant 0 : index
    %c0_5 = arith.constant 0 : index
    %4 = vector.load %arg6[%c0_4, %c0_5] : memref<4x1xf32, #tpu.memory_space<vmem>>, vector<4x1xf32>
    %5 = vector.broadcast %4 : vector<4x1xf32> to vector<4x1024xf32>
    %6 = arith.addf %3, %5 : vector<4x1024xf32>
    %c0_6 = arith.constant 0 : index
    %c0_7 = arith.constant 0 : index
    %7 = vector.load %arg7[%c0_6, %c0_7] : memref<4x4xf32, #tpu.memory_space<vmem>>, vector<4x4xf32>
    %cst_8 = arith.constant dense<0.000000e+00> : vector<4x1024xf32>
    %8 = tpu.matmul %7, %6, %cst_8 {dimension_numbers = #tpu.dot_dimension_numbers<[1], [0], [0], [1], [0, 0, 1, 1], [], []>} : vector<4x4xf32>, vector<4x1024xf32>, vector<4x1024xf32> -> vector<4x1024xf32>
    %c0_9 = arith.constant 0 : index
    %c0_10 = arith.constant 0 : index
    %9 = vector.load %arg8[%c0_9, %c0_10] : memref<4x1xf32, #tpu.memory_space<vmem>>, vector<4x1xf32>
    %10 = vector.broadcast %9 : vector<4x1xf32> to vector<4x1024xf32>
    %11 = arith.addf %8, %10 : vector<4x1024xf32>
    %c0_11 = arith.constant 0 : index
    %c0_12 = arith.constant 0 : index
    %c0_13 = arith.constant 0 : index
    %12 = vector.load %arg3[%c0_11, %c0_12, %c0_13] : memref<1x4x9xf32, #tpu.memory_space<vmem>>, vector<1x4x9xf32>
    %13 = vector.shape_cast %12 : vector<1x4x9xf32> to vector<4x9xf32>
    %c0_14 = arith.constant 0 : index
    %c0_15 = arith.constant 0 : index
    %14 = vector.load %arg4[%c0_14, %c0_15] : memref<9x1024xf32, #tpu.memory_space<vmem>>, vector<9x1024xf32>
    %cst_16 = arith.constant dense<0.000000e+00> : vector<4x1024xf32>
    %15 = tpu.matmul %13, %14, %cst_16 {dimension_numbers = #tpu.dot_dimension_numbers<[1], [0], [0], [1], [0, 0, 1, 1], [], []>} : vector<4x9xf32>, vector<9x1024xf32>, vector<4x1024xf32> -> vector<4x1024xf32>
    %c0_17 = arith.constant 0 : index
    %c0_18 = arith.constant 0 : index
    %16 = vector.load %arg9[%c0_17, %c0_18] : memref<8x4xf32, #tpu.memory_space<vmem>>, vector<8x4xf32>
    %17 = arith.addf %15, %11 : vector<4x1024xf32>
    %cst_19 = arith.constant dense<0.000000e+00> : vector<8x1024xf32>
    %18 = tpu.matmul %16, %17, %cst_19 {dimension_numbers = #tpu.dot_dimension_numbers<[1], [0], [0], [1], [0, 0, 1, 1], [], []>} : vector<8x4xf32>, vector<4x1024xf32>, vector<8x1024xf32> -> vector<8x1024xf32>
    %c0_20 = arith.constant 0 : index
    %c0_21 = arith.constant 0 : index
    %19 = vector.load %arg10[%c0_20, %c0_21] : memref<8x1xf32, #tpu.memory_space<vmem>>, vector<8x1xf32>
    %20 = vector.broadcast %19 : vector<8x1xf32> to vector<8x1024xf32>
    %21 = arith.addf %18, %20 : vector<8x1024xf32>
    %22 = arith.negf %21 : vector<8x1024xf32>
    %23 = math.exp %22 : vector<8x1024xf32>
    %cst_22 = arith.constant 1.000000e+00 : f32
    %24 = vector.broadcast %cst_22 : f32 to vector<8x1024xf32>
    %25 = arith.addf %24, %23 : vector<8x1024xf32>
    %26 = arith.divf %24, %25 : vector<8x1024xf32>
    %27 = arith.mulf %1, %26 : vector<8x1024xf32>
    %c0_23 = arith.constant 0 : index
    %c0_24 = arith.constant 0 : index
    %c0_25 = arith.constant 0 : index
    %28 = vector.load %arg11[%c0_23, %c0_24, %c0_25] : memref<1x8x1024xf32, #tpu.memory_space<vmem>>, vector<1x8x1024xf32>
    %29 = vector.shape_cast %28 : vector<1x8x1024xf32> to vector<8x1024xf32>
    %30 = vector.shape_cast %27 : vector<8x1024xf32> to vector<1x8x1024xf32>
    tpu.vector_store %arg11[%c0_23, %c0_24, %c0_25], %30 {strides = array<i32>} : memref<1x8x1024xf32, #tpu.memory_space<vmem>>, vector<1x8x1024xf32>,
    return
  }
  func.func @transform_0(%arg0: i32, %arg1: i32) -> (i32, i32, i32) {
    %c0_i32 = arith.constant 0 : i32
    %c0_i32_0 = arith.constant 0 : i32
    return %arg0, %c0_i32, %arg1 : i32, i32, i32
  }
  func.func @transform_1(%arg0: i32, %arg1: i32) -> (i32, i32, i32) {
    %c0_i32 = arith.constant 0 : i32
    %c0_i32_0 = arith.constant 0 : i32
    %c0_i32_1 = arith.constant 0 : i32
    return %arg0, %c0_i32, %c0_i32_0 : i32, i32, i32
  }
  func.func @transform_2(%arg0: i32, %arg1: i32) -> (i32, i32) {
    %c0_i32 = arith.constant 0 : i32
    %c0_i32_0 = arith.constant 0 : i32
    return %c0_i32, %arg1 : i32, i32
  }
  func.func @transform_3(%arg0: i32, %arg1: i32) -> (i32, i32) {
    %c0_i32 = arith.constant 0 : i32
    %c0_i32_0 = arith.constant 0 : i32
    %c0_i32_1 = arith.constant 0 : i32
    return %c0_i32, %c0_i32_0 : i32, i32
  }
  func.func @transform_4(%arg0: i32, %arg1: i32) -> (i32, i32) {
    %c0_i32 = arith.constant 0 : i32
    %c0_i32_0 = arith.constant 0 : i32
    %c0_i32_1 = arith.constant 0 : i32
    return %c0_i32, %c0_i32_0 : i32, i32
  }
  func.func @transform_5(%arg0: i32, %arg1: i32) -> (i32, i32) {
    %c0_i32 = arith.constant 0 : i32
    %c0_i32_0 = arith.constant 0 : i32
    %c0_i32_1 = arith.constant 0 : i32
    return %c0_i32, %c0_i32_0 : i32, i32
  }
  func.func @transform_6(%arg0: i32, %arg1: i32) -> (i32, i32) {
    %c0_i32 = arith.constant 0 : i32
    %c0_i32_0 = arith.constant 0 : i32
    %c0_i32_1 = arith.constant 0 : i32
    return %c0_i32, %c0_i32_0 : i32, i32
  }
  func.func @transform_7(%arg0: i32, %arg1: i32) -> (i32, i32) {
    %c0_i32 = arith.constant 0 : i32
    %c0_i32_0 = arith.constant 0 : i32
    %c0_i32_1 = arith.constant 0 : i32
    return %c0_i32, %c0_i32_0 : i32, i32
  }
  func.func @transform_8(%arg0: i32, %arg1: i32) -> (i32, i32) {
    %c0_i32 = arith.constant 0 : i32
    %c0_i32_0 = arith.constant 0 : i32
    %c0_i32_1 = arith.constant 0 : i32
    return %c0_i32, %c0_i32_0 : i32, i32
  }
  func.func @transform_9(%arg0: i32, %arg1: i32) -> (i32, i32, i32) {
    %c0_i32 = arith.constant 0 : i32
    %c0_i32_0 = arith.constant 0 : i32
    return %arg0, %c0_i32, %arg1 : i32, i32, i32
  }
}

</mosaic_0001>

<llo_original>
// kernel: esa_forward.5
$region0: #{esa_forward.5}
  #allocation0 [shape = 'u32[]', space=smem, size = 0x4, offset = 0x4, fixed_abs, tag = 'smem constant byte address 0x4 - core index']
  #allocation1 [shape = 'u32[144,128]{1,0:T(1,128)}', space=vmem, size = 0x12000, scoped, tag = 'internal scratch']
  %s0 = inlined_call_operand.vmem [shape: f32[2,8,1024], index: 0, kind: input, shape index: {}]
  %s1 = inlined_call_operand.vmem [shape: f32[4,8], index: 1, kind: input, shape index: {}]
  %s2 = inlined_call_operand.vmem [shape: f32[4,1], index: 2, kind: input, shape index: {}]
  %s3 = inlined_call_operand.vmem [shape: f32[2,4,1024], index: 3, kind: output, shape index: {}]
  %s4 = sld [smem:[#allocation0]]
  $region45: #{esa_forward.5} parent=0
    _
  %s6 = ssub.s32 1, %s4
  %s7 = scalar_select 0, %s6, %s4
  loop: start=0, step=1, limit=4
  $region2: #{esa_forward.5} parent=0 // loop_pre_header
    _
  $region3: #{esa_forward.5} parent=0 // loop_header
    %s9 = sphi 0, %s13
    %p10 = scmp.ge.s32.totalorder %s9, 4
    %s16 = sphi 0, %s28
    %s17 = sphi 0, %s24
    %s18 = sphi 0, %s16
    %s19 = sphi 0, %s17
    %s20 = sphi 0, %s18
    %s21 = sphi 0, %s19
    %s33 = sphi 0, %s35
    %s36 = sphi 0, %s33
    %s37 = sphi 0, %s36
    %s53 = sphi 0, %s37
    %s57 = sphi 0, %s57
    %s59 = sphi 0, %s57
    %s60 = sphi 0, %s59
    %s74 = sphi 0, %s60
    %s78 = sphi 0, %s78
    %s80 = sphi 0, %s78
    %s81 = sphi 0, %s80
    %s95 = sphi 0, %s81
    %s103 = sphi 0, %s105
    %s106 = sphi 0, %s103
    %s107 = sphi 0, %s106
    %s123 = sphi 0, %s107
  $region4: #{esa_forward.5} parent=0 // loop_header_branch
    %12 = sbr.rel (%p10) target = $region8
  $region5: #{esa_forward.5} parent=0 // loop_body
    %s14 = ssub.s32 %s9, 1
    %s15 = ssub.s32 %s9, 2
    %s22 = sadd.s32 1, %s17
    %p23 = scmp.ge.s32.totalorder %s22, 1
    %s24 = scalar_select %p23, 0, %s22
    %s25 = sadd.s32 1, %s16
    %s26 = scalar_select %p23, %s25, %s16
    %p27 = scmp.ge.s32.totalorder %s26, 2
    %s28 = scalar_select %p27, 0, %s26
    %s29 = ssub.s32 %s16, %s28
    %s30 = ssub.s32 %s17, %s24
    %s31 = sor.u32 %s29, %s30
    %p32 = scmp.eq.s32.totalorder %s31, 0
    %s34 = sadd.s32 %s33, 1
    %s35 = scalar_select %p32, %s33, %s34
    %p38 = pneg %p32
    %p39 = scmp.eq.s32.totalorder %s9, 1
    %p40 = por %p38, %p39
    %p41 = scmp.ne.s32.totalorder %s33, %s36
    %p42 = scmp.eq.s32.totalorder %s9, 0
    %p43 = por %p41, %p42
    %p44 = scmp.ne.s32.totalorder %s33, %s36
    %p45 = scmp.eq.s32.totalorder %s14, 1
    %p46 = por %p44, %p45
    %p47 = scmp.ne.s32.totalorder %s36, %s37
    %p48 = scmp.eq.s32.totalorder %s14, 0
    %p49 = por %p47, %p48
    %p50 = scmp.ne.s32.totalorder %s36, %s37
    %p51 = scmp.eq.s32.totalorder %s15, 1
    %p52 = por %p50, %p51
    %p54 = scmp.ne.s32.totalorder %s37, %s53
    %p55 = scmp.eq.s32.totalorder %s15, 0
    %p56 = por %p54, %p55
    %s58 = sadd.s32 %s57, 1
    %p61 = scmp.eq.s32.totalorder %s9, 1
    %p62 = scmp.ne.s32.totalorder %s57, %s59
    %p63 = scmp.eq.s32.totalorder %s9, 0
    %p64 = por %p62, %p63
    %p65 = scmp.ne.s32.totalorder %s57, %s59
    %p66 = scmp.eq.s32.totalorder %s14, 1
    %p67 = por %p65, %p66
    %p68 = scmp.ne.s32.totalorder %s59, %s60
    %p69 = scmp.eq.s32.totalorder %s14, 0
    %p70 = por %p68, %p69
    %p71 = scmp.ne.s32.totalorder %s59, %s60
    %p72 = scmp.eq.s32.totalorder %s15, 1
    %p73 = por %p71, %p72
    %p75 = scmp.ne.s32.totalorder %s60, %s74
    %p76 = scmp.eq.s32.totalorder %s15, 0
    %p77 = por %p75, %p76
    %s79 = sadd.s32 %s78, 1
    %p82 = scmp.eq.s32.totalorder %s9, 1
    %p83 = scmp.ne.s32.totalorder %s78, %s80
    %p84 = scmp.eq.s32.totalorder %s9, 0
    %p85 = por %p83, %p84
    %p86 = scmp.ne.s32.totalorder %s78, %s80
    %p87 = scmp.eq.s32.totalorder %s14, 1
    %p88 = por %p86, %p87
    %p89 = scmp.ne.s32.totalorder %s80, %s81
    %p90 = scmp.eq.s32.totalorder %s14, 0
    %p91 = por %p89, %p90
    %p92 = scmp.ne.s32.totalorder %s80, %s81
    %p93 = scmp.eq.s32.totalorder %s15, 1
    %p94 = por %p92, %p93
    %p96 = scmp.ne.s32.totalorder %s81, %s95
    %p97 = scmp.eq.s32.totalorder %s15, 0
    %p98 = por %p96, %p97
    %s99 = ssub.s32 %s16, %s28
    %s100 = ssub.s32 %s17, %s24
    %s101 = sor.u32 %s99, %s100
    %p102 = scmp.eq.s32.totalorder %s101, 0
    %s104 = sadd.s32 %s103, 1
    %s105 = scalar_select %p102, %s103, %s104
    %p108 = pneg %p102
    %p109 = scmp.eq.s32.totalorder %s9, 1
    %p110 = por %p108, %p109
    %p111 = scmp.ne.s32.totalorder %s103, %s106
    %p112 = scmp.eq.s32.totalorder %s9, 0
    %p113 = por %p111, %p112
    %p114 = scmp.ne.s32.totalorder %s103, %s106
    %p115 = scmp.eq.s32.totalorder %s14, 1
    %p116 = por %p114, %p115
    %p117 = scmp.ne.s32.totalorder %s106, %s107
    %p118 = scmp.eq.s32.totalorder %s14, 0
    %p119 = por %p117, %p118
    %p120 = scmp.ne.s32.totalorder %s106, %s107
    %p121 = scmp.eq.s32.totalorder %s15, 1
    %p122 = por %p120, %p121
    %p124 = scmp.ne.s32.totalorder %s107, %s123
    %p125 = scmp.eq.s32.totalorder %s15, 0
    %p126 = por %p124, %p125
    %p127 = scmp.le.s32.totalorder 1, %s9
    %p128 = scmp.lt.s32.totalorder %s9, 3
    %p129 = pnand %p127, %p128
    %p130 = pneg %p129
    // Predicated region
    $region9: #{esa_forward.5} parent=5 // pred_check
      _
    $region10: #{esa_forward.5} parent=5 // pred_check_branch
      %132 = sbr.rel (%p129) target = $region12
    $region11: #{esa_forward.5} parent=5 // pred_region
      %s133 = ssub.s32 %s9, 1
      // Predicated region
      $region13: #{esa_forward.5} parent=11 // pred_check
        %p134 = pneg %p70
      $region14: #{esa_forward.5} parent=11 // pred_check_branch
        %136 = sbr.rel (%p134) target = $region16
      $region15: #{esa_forward.5} parent=11 // pred_region
        _
      $region16: #{esa_forward.5} parent=11 // pred_fallthru
        _
      // Predicated region
      $region17: #{esa_forward.5} parent=11 // pred_check
        %p137 = pneg %p91
      $region18: #{esa_forward.5} parent=11 // pred_check_branch
        %139 = sbr.rel (%p137) target = $region20
      $region19: #{esa_forward.5} parent=11 // pred_region
        _
      $region20: #{esa_forward.5} parent=11 // pred_fallthru
        _
    $region12: #{esa_forward.5} parent=5 // pred_fallthru
      _
    %p140 = scmp.lt.s32.totalorder %s9, 2
    // Predicated region
    $region21: #{esa_forward.5} parent=5 // pred_check
      %p141 = pneg %p140
    $region22: #{esa_forward.5} parent=5 // pred_check_branch
      %143 = sbr.rel (%p141) target = $region24
    $region23: #{esa_forward.5} parent=5 // pred_region
      // Predicated region
      $region25: #{esa_forward.5} parent=23 // pred_check
        %p144 = pneg %p43
      $region26: #{esa_forward.5} parent=23 // pred_check_branch
        %146 = sbr.rel (%p144) target = $region28
      $region27: #{esa_forward.5} parent=23 // pred_region
        %s147 = smul.u32 8, %s17
        %p148 = scmp.lt.s32.totalorder %s16, 1
        %s149 = scalar_select %p148, %s16, 1
        %p150 = scmp.lt.s32.totalorder %s147, 7
        %s151 = scalar_select %p150, %s147, 7
        %s152 = smul.addr %s149, 8
        %s153 = sadd.s32 %s151, %s152
        %s154 = smul.addr %s153, 8
        %s155 = scalar_lea.vmem %s0, %s154
        %s156 = smul.u32 8, %s17
      $region28: #{esa_forward.5} parent=23 // pred_fallthru
        _
    $region24: #{esa_forward.5} parent=5 // pred_fallthru
      _
    %p157 = scmp.le.s32.totalorder 1, %s9
    %p158 = scmp.lt.s32.totalorder %s9, 3
    %p159 = pnand %p157, %p158
    %p160 = pneg %p159
    // Predicated region
    $region29: #{esa_forward.5} parent=5 // pred_check
      _
    $region30: #{esa_forward.5} parent=5 // pred_check_branch
      %162 = sbr.rel (%p159) target = $region32
    $region31: #{esa_forward.5} parent=5 // pred_region
      %s163 = ssub.s32 %s9, 1
      %s164 = smul.u32 8, %s19
      %p165 = scmp.lt.s32.totalorder %s18, 1
      %s166 = scalar_select %p165, %s18, 1
      %p167 = scmp.lt.s32.totalorder %s164, 7
      %s168 = scalar_select %p167, %s164, 7
      %s169 = smul.addr %s166, 8
      %s170 = sadd.s32 %s168, %s169
      %s171 = smul.addr %s170, 8
      %s172 = scalar_lea.vmem %s0, %s171
      %p173 = pneg %p49
      %p174 = pneg %p46
      %p175 = pneg %p70
      %p176 = pneg %p67
      %p177 = pneg %p91
      %p178 = pneg %p88
      %p179 = pneg %p119
      %p180 = pneg %p116
      %s181 = smul.u32 8, %s19
      %p182 = scmp.lt.s32.totalorder %s18, 1
      %s183 = scalar_select %p182, %s18, 1
      %p184 = scmp.lt.s32.totalorder %s181, 7
      %s185 = scalar_select %p184, %s181, 7
      %s186 = smul.addr %s183, 8
      %s187 = sadd.s32 %s185, %s186
      %s188 = smul.addr %s187, 4
      %s189 = scalar_lea.vmem %s3, %s188
      %s190 = smul.u32 8, %s19
      %p191 = scmp.lt.s32.totalorder %s18, 1
      %s192 = scalar_select %p191, %s18, 1
      %p193 = scmp.lt.s32.totalorder %s190, 7
      %s194 = scalar_select %p193, %s190, 7
      %s195 = smul.addr %s192, 8
      %s196 = sadd.s32 %s194, %s195
      %s197 = smul.addr %s196, 8
      %s198 = scalar_lea.vmem %s0, %s197
      %s199 = smul.u32 8, %s19
      %s200 = smul.u32 8, %s19
      %p201 = scmp.lt.s32.totalorder %s18, 1
      %s202 = scalar_select %p201, %s18, 1
      %p203 = scmp.lt.s32.totalorder %s200, 7
      %s204 = scalar_select %p203, %s200, 7
      %s205 = smul.addr %s202, 8
      %s206 = sadd.s32 %s204, %s205
      %s207 = smul.addr %s206, 4
      %s208 = scalar_lea.vmem %s3, %s207
      %s209 = smul.u32 8, %s19
      %v210 = vld [vmem:[%s1] sm:$0xf]
      %v211 = vld [vmem:[%s198] sm:$0xff]
      %v212 = vld [vmem:[%s198 + $0x8] sm:$0xff]
      %v213 = vld [vmem:[%s198 + $0x10] sm:$0xff]
      %v214 = vld [vmem:[%s198 + $0x18] sm:$0xff]
      %v215 = vld [vmem:[%s198 + $0x20] sm:$0xff]
      %v216 = vld [vmem:[%s198 + $0x28] sm:$0xff]
      %v217 = vld [vmem:[%s198 + $0x30] sm:$0xff]
      %v218 = vld [vmem:[%s198 + $0x38] sm:$0xff]
      %v219 = vld [vmem:[%s2] sm:$0xf]
      %221 = vset.pattern.permute.xlu0 0
      %222 = vperm.xlu0 %221, %v219
      %v223 = vpop.permute.xlu0 %222
      %vm225 = vcmask 64512
      %v227 = vsel %vm225, %v210, 0
      %229 = vmatprep.subr.mxu0 %v212
      %230 = vmatpush1.msra.mxu0 %v211
      %231 = vmatprep.subr.mxu0 0.0
      %232 = vmatpush1.msra.mxu0 0.0
      %233 = vmatprep.subr.mxu0 0.0
      %234 = vmatpush1.msra.mxu0 0.0
      %235 = vmatprep.subr.mxu0 0.0
      %236 = vmatpush1.msra.mxu0 0.0
      %237 = vmatprep.subr.mxu0 0.0
      %238 = vmatpush1.msra.mxu0 0.0
      %239 = vmatprep.subr.mxu0 0.0
      %240 = vmatpush1.msra.mxu0 0.0
      %241 = vmatprep.subr.mxu0 0.0
      %242 = vmatpush1.msra.mxu0 0.0
      %243 = vmatprep.subr.mxu0 0.0
      %244 = vmatpush1.msra.mxu0 0.0
      %245 = vmatprep.subr.mxu0 0.0
      %246 = vmatpush1.msra.mxu0 0.0
      %247 = vmatprep.subr.mxu0 0.0
      %248 = vmatpush1.msra.mxu0 0.0
      %249 = vmatprep.subr.mxu0 0.0
      %250 = vmatpush1.msra.mxu0 0.0
      %251 = vmatprep.subr.mxu0 0.0
      %252 = vmatpush1.msra.mxu0 0.0
      %253 = vmatprep.subr.mxu0 0.0
      %254 = vmatpush1.msra.mxu0 0.0
      %255 = vmatprep.subr.mxu0 0.0
      %256 = vmatpush1.msra.mxu0 0.0
      %257 = vmatprep.subr.mxu0 0.0
      %258 = vmatpush1.msra.mxu0 0.0
      %259 = vmatprep.subr.mxu0 0.0
      %260 = vmatpush1.msra.mxu0 0.0
      %261 = vmatprep.subr.mxu0 0.0
      %262 = vmatpush1.msra.mxu0 0.0
      %263 = vmatprep.subr.mxu0 0.0
      %264 = vmatpush1.msra.mxu0 0.0
      %265 = vmatprep.subr.mxu0 0.0
      %266 = vmatpush1.msra.mxu0 0.0
      %267 = vmatprep.subr.mxu0 0.0
      %268 = vmatpush1.msra.mxu0 0.0
      %269 = vmatprep.subr.mxu0 0.0
      %270 = vmatpush1.msra.mxu0 0.0
      %271 = vmatprep.subr.mxu0 0.0
      %272 = vmatpush1.msra.mxu0 0.0
      %273 = vmatprep.subr.mxu0 0.0
      %274 = vmatpush1.msra.mxu0 0.0
      %275 = vmatprep.subr.mxu0 0.0
      %276 = vmatpush1.msra.mxu0 0.0
      %277 = vmatprep.subr.mxu0 0.0
      %278 = vmatpush1.msra.mxu0 0.0
      %279 = vmatprep.subr.mxu0 0.0
      %280 = vmatpush1.msra.mxu0 0.0
      %281 = vmatprep.subr.mxu0 0.0
      %282 = vmatpush1.msra.mxu0 0.0
      %283 = vmatprep.subr.mxu0 0.0
      %284 = vmatpush1.msra.mxu0 0.0
      %285 = vmatprep.subr.mxu0 0.0
      %286 = vmatpush1.msra.mxu0 0.0
      %287 = vmatprep.subr.mxu0 0.0
      %288 = vmatpush1.msra.mxu0 0.0
      %289 = vmatprep.subr.mxu0 0.0
      %290 = vmatpush1.msra.mxu0 0.0
      %291 = vmatprep.subr.mxu0 0.0
      %292 = vmatpush1.msra.mxu0 0.0
      %293 = vmatprep.mubr.f32.mxu0 0.0
      %294 = vmatmul.mubr.f32.gmra.mrb[0].mxu0 %v227
      %v295 = vpop.f32.mrb[0].mxu0
      %v296 = vadd.f32 %v223, %v295
      %v297 = vpop.f32.mrb[0].mxu0
      %v298 = vadd.f32 %v223, %v297
      %299 = vdwg.mxu0
      %300 = vmatprep.subr.mxu0 %v214
      %301 = vmatpush1.msra.mxu0 %v213
      %302 = vmatprep.subr.mxu0 0.0
      %303 = vmatpush1.msra.mxu0 0.0
      %304 = vmatprep.subr.mxu0 0.0
      %305 = vmatpush1.msra.mxu0 0.0
      %306 = vmatprep.subr.mxu0 0.0
      %307 = vmatpush1.msra.mxu0 0.0
      %308 = vmatprep.subr.mxu0 0.0
      %309 = vmatpush1.msra.mxu0 0.0
      %310 = vmatprep.subr.mxu0 0.0
      %311 = vmatpush1.msra.mxu0 0.0
      %312 = vmatprep.subr.mxu0 0.0
      %313 = vmatpush1.msra.mxu0 0.0
      %314 = vmatprep.subr.mxu0 0.0
      %315 = vmatpush1.msra.mxu0 0.0
      %316 = vmatprep.subr.mxu0 0.0
      %317 = vmatpush1.msra.mxu0 0.0
      %318 = vmatprep.subr.mxu0 0.0
      %319 = vmatpush1.msra.mxu0 0.0
      %320 = vmatprep.subr.mxu0 0.0
      %321 = vmatpush1.msra.mxu0 0.0
      %322 = vmatprep.subr.mxu0 0.0
      %323 = vmatpush1.msra.mxu0 0.0
      %324 = vmatprep.subr.mxu0 0.0
      %325 = vmatpush1.msra.mxu0 0.0
      %326 = vmatprep.subr.mxu0 0.0
      %327 = vmatpush1.msra.mxu0 0.0
      %328 = vmatprep.subr.mxu0 0.0
      %329 = vmatpush1.msra.mxu0 0.0
      %330 = vmatprep.subr.mxu0 0.0
      %331 = vmatpush1.msra.mxu0 0.0
      %332 = vmatprep.subr.mxu0 0.0
      %333 = vmatpush1.msra.mxu0 0.0
      %334 = vmatprep.subr.mxu0 0.0
      %335 = vmatpush1.msra.mxu0 0.0
      %336 = vmatprep.subr.mxu0 0.0
      %337 = vmatpush1.msra.mxu0 0.0
      %338 = vmatprep.subr.mxu0 0.0
      %339 = vmatpush1.msra.mxu0 0.0
      %340 = vmatprep.subr.mxu0 0.0
      %341 = vmatpush1.msra.mxu0 0.0
      %342 = vmatprep.subr.mxu0 0.0
      %343 = vmatpush1.msra.mxu0 0.0
      %344 = vmatprep.subr.mxu0 0.0
      %345 = vmatpush1.msra.mxu0 0.0
      %346 = vmatprep.subr.mxu0 0.0
      %347 = vmatpush1.msra.mxu0 0.0
      %348 = vmatprep.subr.mxu0 0.0
      %349 = vmatpush1.msra.mxu0 0.0
      %350 = vmatprep.subr.mxu0 0.0
      %351 = vmatpush1.msra.mxu0 0.0
      %352 = vmatprep.subr.mxu0 0.0
      %353 = vmatpush1.msra.mxu0 0.0
      %354 = vmatprep.subr.mxu0 0.0
      %355 = vmatpush1.msra.mxu0 0.0
      %356 = vmatprep.subr.mxu0 0.0
      %357 = vmatpush1.msra.mxu0 0.0
      %358 = vmatprep.subr.mxu0 0.0
      %359 = vmatpush1.msra.mxu0 0.0
      %360 = vmatprep.subr.mxu0 0.0
      %361 = vmatpush1.msra.mxu0 0.0
      %362 = vmatprep.subr.mxu0 0.0
      %363 = vmatpush1.msra.mxu0 0.0
      %364 = vmatprep.mubr.f32.mxu0 0.0
      %365 = vmatmul.mubr.f32.gmra.mrb[0].mxu0 %v227
      %v366 = vpop.f32.mrb[0].mxu0
      %v367 = vadd.f32 %v223, %v366
      %v368 = vpop.f32.mrb[0].mxu0
      %v369 = vadd.f32 %v223, %v368
      %370 = vdwg.mxu0
      %371 = vmatprep.subr.mxu0 %v216
      %372 = vmatpush1.msra.mxu0 %v215
      %373 = vmatprep.subr.mxu0 0.0
      %374 = vmatpush1.msra.mxu0 0.0
      %375 = vmatprep.subr.mxu0 0.0
      %376 = vmatpush1.msra.mxu0 0.0
      %377 = vmatprep.subr.mxu0 0.0
      %378 = vmatpush1.msra.mxu0 0.0
      %379 = vmatprep.subr.mxu0 0.0
      %380 = vmatpush1.msra.mxu0 0.0
      %381 = vmatprep.subr.mxu0 0.0
      %382 = vmatpush1.msra.mxu0 0.0
      %383 = vmatprep.subr.mxu0 0.0
      %384 = vmatpush1.msra.mxu0 0.0
      %385 = vmatprep.subr.mxu0 0.0
      %386 = vmatpush1.msra.mxu0 0.0
      %387 = vmatprep.subr.mxu0 0.0
      %388 = vmatpush1.msra.mxu0 0.0
      %389 = vmatprep.subr.mxu0 0.0
      %390 = vmatpush1.msra.mxu0 0.0
      %391 = vmatprep.subr.mxu0 0.0
      %392 = vmatpush1.msra.mxu0 0.0
      %393 = vmatprep.subr.mxu0 0.0
      %394 = vmatpush1.msra.mxu0 0.0
      %395 = vmatprep.subr.mxu0 0.0
      %396 = vmatpush1.msra.mxu0 0.0
      %397 = vmatprep.subr.mxu0 0.0
      %398 = vmatpush1.msra.mxu0 0.0
      %399 = vmatprep.subr.mxu0 0.0
      %400 = vmatpush1.msra.mxu0 0.0
      %401 = vmatprep.subr.mxu0 0.0
      %402 = vmatpush1.msra.mxu0 0.0
      %403 = vmatprep.subr.mxu0 0.0
      %404 = vmatpush1.msra.mxu0 0.0
      %405 = vmatprep.subr.mxu0 0.0
      %406 = vmatpush1.msra.mxu0 0.0
      %407 = vmatprep.subr.mxu0 0.0
      %408 = vmatpush1.msra.mxu0 0.0
      %409 = vmatprep.subr.mxu0 0.0
      %410 = vmatpush1.msra.mxu0 0.0
      %411 = vmatprep.subr.mxu0 0.0
      %412 = vmatpush1.msra.mxu0 0.0
      %413 = vmatprep.subr.mxu0 0.0
      %414 = vmatpush1.msra.mxu0 0.0
      %415 = vmatprep.subr.mxu0 0.0
      %416 = vmatpush1.msra.mxu0 0.0
      %417 = vmatprep.subr.mxu0 0.0
      %418 = vmatpush1.msra.mxu0 0.0
      %419 = vmatprep.subr.mxu0 0.0
      %420 = vmatpush1.msra.mxu0 0.0
      %421 = vmatprep.subr.mxu0 0.0
      %422 = vmatpush1.msra.mxu0 0.0
      %423 = vmatprep.subr.mxu0 0.0
      %424 = vmatpush1.msra.mxu0 0.0
      %425 = vmatprep.subr.mxu0 0.0
      %426 = vmatpush1.msra.mxu0 0.0
      %427 = vmatprep.subr.mxu0 0.0
      %428 = vmatpush1.msra.mxu0 0.0
      %429 = vmatprep.subr.mxu0 0.0
      %430 = vmatpush1.msra.mxu0 0.0
      %431 = vmatprep.subr.mxu0 0.0
      %432 = vmatpush1.msra.mxu0 0.0
      %433 = vmatprep.subr.mxu0 0.0
      %434 = vmatpush1.msra.mxu0 0.0
      %435 = vmatprep.mubr.f32.mxu0 0.0
      %436 = vmatmul.mubr.f32.gmra.mrb[0].mxu0 %v227
      %v437 = vpop.f32.mrb[0].mxu0
      %v438 = vadd.f32 %v223, %v437
      %v439 = vpop.f32.mrb[0].mxu0
      %v440 = vadd.f32 %v223, %v439
      %441 = vdwg.mxu0
      %442 = vmatprep.subr.mxu0 %v218
      %443 = vmatpush1.msra.mxu0 %v217
      %444 = vmatprep.subr.mxu0 0.0
      %445 = vmatpush1.msra.mxu0 0.0
      %446 = vmatprep.subr.mxu0 0.0
      %447 = vmatpush1.msra.mxu0 0.0
      %448 = vmatprep.subr.mxu0 0.0
      %449 = vmatpush1.msra.mxu0 0.0
      %450 = vmatprep.subr.mxu0 0.0
      %451 = vmatpush1.msra.mxu0 0.0
      %452 = vmatprep.subr.mxu0 0.0
      %453 = vmatpush1.msra.mxu0 0.0
      %454 = vmatprep.subr.mxu0 0.0
      %455 = vmatpush1.msra.mxu0 0.0
      %456 = vmatprep.subr.mxu0 0.0
      %457 = vmatpush1.msra.mxu0 0.0
      %458 = vmatprep.subr.mxu0 0.0
      %459 = vmatpush1.msra.mxu0 0.0
      %460 = vmatprep.subr.mxu0 0.0
      %461 = vmatpush1.msra.mxu0 0.0
      %462 = vmatprep.subr.mxu0 0.0
      %463 = vmatpush1.msra.mxu0 0.0
      %464 = vmatprep.subr.mxu0 0.0
      %465 = vmatpush1.msra.mxu0 0.0
      %466 = vmatprep.subr.mxu0 0.0
      %467 = vmatpush1.msra.mxu0 0.0
      %468 = vmatprep.subr.mxu0 0.0
      %469 = vmatpush1.msra.mxu0 0.0
      %470 = vmatprep.subr.mxu0 0.0
      %471 = vmatpush1.msra.mxu0 0.0
      %472 = vmatprep.subr.mxu0 0.0
      %473 = vmatpush1.msra.mxu0 0.0
      %474 = vmatprep.subr.mxu0 0.0
      %475 = vmatpush1.msra.mxu0 0.0
      %476 = vmatprep.subr.mxu0 0.0
      %477 = vmatpush1.msra.mxu0 0.0
      %478 = vmatprep.subr.mxu0 0.0
      %479 = vmatpush1.msra.mxu0 0.0
      %480 = vmatprep.subr.mxu0 0.0
      %481 = vmatpush1.msra.mxu0 0.0
      %482 = vmatprep.subr.mxu0 0.0
      %483 = vmatpush1.msra.mxu0 0.0
      %484 = vmatprep.subr.mxu0 0.0
      %485 = vmatpush1.msra.mxu0 0.0
      %486 = vmatprep.subr.mxu0 0.0
      %487 = vmatpush1.msra.mxu0 0.0
      %488 = vmatprep.subr.mxu0 0.0
      %489 = vmatpush1.msra.mxu0 0.0
      %490 = vmatprep.subr.mxu0 0.0
      %491 = vmatpush1.msra.mxu0 0.0
      %492 = vmatprep.subr.mxu0 0.0
      %493 = vmatpush1.msra.mxu0 0.0
      %494 = vmatprep.subr.mxu0 0.0
      %495 = vmatpush1.msra.mxu0 0.0
      %496 = vmatprep.subr.mxu0 0.0
      %497 = vmatpush1.msra.mxu0 0.0
      %498 = vmatprep.subr.mxu0 0.0
      %499 = vmatpush1.msra.mxu0 0.0
      %500 = vmatprep.subr.mxu0 0.0
      %501 = vmatpush1.msra.mxu0 0.0
      %502 = vmatprep.subr.mxu0 0.0
      %503 = vmatpush1.msra.mxu0 0.0
      %504 = vmatprep.subr.mxu0 0.0
      %505 = vmatpush1.msra.mxu0 0.0
      %506 = vmatprep.mubr.f32.mxu0 0.0
      %507 = vmatmul.mubr.f32.gmra.mrb[0].mxu0 %v227
      %v508 = vpop.f32.mrb[0].mxu0
      %v509 = vadd.f32 %v223, %v508
      %v510 = vpop.f32.mrb[0].mxu0
      %v511 = vadd.f32 %v223, %v510
      %512 = vdwg.mxu0
      %v521 = vcombine.low %v296, %v298
      %v522 = vcombine.low %v367, %v369
      %v523 = vcombine.low %v438, %v440
      %v524 = vcombine.low %v509, %v511
      %529 = vst [vmem:[%s208] sm:$0xff] %v521
      %530 = vst [vmem:[%s208 + $0x8] sm:$0xff] %v522
      %531 = vst [vmem:[%s208 + $0x10] sm:$0xff] %v523
      %532 = vst [vmem:[%s208 + $0x18] sm:$0xff] %v524
      %s533 = smul.u32 8, %s19
      %p534 = scmp.lt.s32.totalorder %s18, 1
      %s535 = scalar_select %p534, %s18, 1
      %p536 = scmp.lt.s32.totalorder %s533, 7
      %s537 = scalar_select %p536, %s533, 7
      %s538 = smul.addr %s535, 8
      %s539 = sadd.s32 %s537, %s538
      %s540 = smul.addr %s539, 4
      %s541 = scalar_lea.vmem %s3, %s540
      // Predicated region
      $region33: #{esa_forward.5} parent=31 // pred_check
        %p542 = pneg %p116
      $region34: #{esa_forward.5} parent=31 // pred_check_branch
        %544 = sbr.rel (%p542) target = $region36
      $region35: #{esa_forward.5} parent=31 // pred_region
        %s545 = smul.u32 8, %s19
      $region36: #{esa_forward.5} parent=31 // pred_fallthru
        _
    $region32: #{esa_forward.5} parent=5 // pred_fallthru
      _
    %p546 = scmp.le.s32.totalorder 2, %s9
    // Predicated region
    $region37: #{esa_forward.5} parent=5 // pred_check
      %p547 = pneg %p546
    $region38: #{esa_forward.5} parent=5 // pred_check_branch
      %549 = sbr.rel (%p547) target = $region40
    $region39: #{esa_forward.5} parent=5 // pred_region
      %s550 = ssub.s32 %s9, 2
      // Predicated region
      $region41: #{esa_forward.5} parent=39 // pred_check
        %p551 = pneg %p122
      $region42: #{esa_forward.5} parent=39 // pred_check_branch
        %553 = sbr.rel (%p551) target = $region44
      $region43: #{esa_forward.5} parent=39 // pred_region
        %s554 = smul.u32 8, %s21
        %p555 = scmp.lt.s32.totalorder %s20, 1
        %s556 = scalar_select %p555, %s20, 1
        %p557 = scmp.lt.s32.totalorder %s554, 7
        %s558 = scalar_select %p557, %s554, 7
        %s559 = smul.addr %s556, 8
        %s560 = sadd.s32 %s558, %s559
        %s561 = smul.addr %s560, 4
        %s562 = scalar_lea.vmem %s3, %s561
      $region44: #{esa_forward.5} parent=39 // pred_fallthru
        _
    $region40: #{esa_forward.5} parent=5 // pred_fallthru
      _
  $region6: #{esa_forward.5} parent=0 // loop_footer
    %s13 = sadd.s32 1, %s9
  $region7: #{esa_forward.5} parent=0 // loop_footer_branch
    %8 = sbr.rel target = $region3
  $region8: #{esa_forward.5} parent=0 // loop_exit
    _

// kernel: esa_forward.6
$region0: #{esa_forward.6}
  #allocation0 [shape = 'u32[]', space=smem, size = 0x4, offset = 0x4, fixed_abs, tag = 'smem constant byte address 0x4 - core index']
  #allocation1 [shape = 'u32[144,128]{1,0:T(1,128)}', space=vmem, size = 0x12000, scoped, tag = 'internal scratch']
  %s0 = inlined_call_operand.vmem [shape: f32[2,36,225], index: 0, kind: input, shape index: {}]
  %s1 = inlined_call_operand.vmem [shape: f32[4,36], index: 1, kind: input, shape index: {}]
  %s2 = inlined_call_operand.vmem [shape: f32[4,1], index: 2, kind: input, shape index: {}]
  %s3 = inlined_call_operand.vmem [shape: f32[2,4,225], index: 3, kind: output, shape index: {}]
  %s4 = sld [smem:[#allocation0]]
  $region45: #{esa_forward.6} parent=0
    _
  %s6 = ssub.s32 1, %s4
  %s7 = scalar_select 0, %s6, %s4
  loop: start=0, step=1, limit=4
  $region2: #{esa_forward.6} parent=0 // loop_pre_header
    _
  $region3: #{esa_forward.6} parent=0 // loop_header
    %s9 = sphi 0, %s13
    %p10 = scmp.ge.s32.totalorder %s9, 4
    %s16 = sphi 0, %s28
    %s17 = sphi 0, %s24
    %s18 = sphi 0, %s16
    %s19 = sphi 0, %s17
    %s20 = sphi 0, %s18
    %s21 = sphi 0, %s19
    %s33 = sphi 0, %s35
    %s36 = sphi 0, %s33
    %s37 = sphi 0, %s36
    %s53 = sphi 0, %s37
    %s57 = sphi 0, %s57
    %s59 = sphi 0, %s57
    %s60 = sphi 0, %s59
    %s74 = sphi 0, %s60
    %s78 = sphi 0, %s78
    %s80 = sphi 0, %s78
    %s81 = sphi 0, %s80
    %s95 = sphi 0, %s81
    %s103 = sphi 0, %s105
    %s106 = sphi 0, %s103
    %s107 = sphi 0, %s106
    %s123 = sphi 0, %s107
  $region4: #{esa_forward.6} parent=0 // loop_header_branch
    %12 = sbr.rel (%p10) target = $region8
  $region5: #{esa_forward.6} parent=0 // loop_body
    %s14 = ssub.s32 %s9, 1
    %s15 = ssub.s32 %s9, 2
    %s22 = sadd.s32 1, %s17
    %p23 = scmp.ge.s32.totalorder %s22, 1
    %s24 = scalar_select %p23, 0, %s22
    %s25 = sadd.s32 1, %s16
    %s26 = scalar_select %p23, %s25, %s16
    %p27 = scmp.ge.s32.totalorder %s26, 2
    %s28 = scalar_select %p27, 0, %s26
    %s29 = ssub.s32 %s16, %s28
    %s30 = ssub.s32 %s17, %s24
    %s31 = sor.u32 %s29, %s30
    %p32 = scmp.eq.s32.totalorder %s31, 0
    %s34 = sadd.s32 %s33, 1
    %s35 = scalar_select %p32, %s33, %s34
    %p38 = pneg %p32
    %p39 = scmp.eq.s32.totalorder %s9, 1
    %p40 = por %p38, %p39
    %p41 = scmp.ne.s32.totalorder %s33, %s36
    %p42 = scmp.eq.s32.totalorder %s9, 0
    %p43 = por %p41, %p42
    %p44 = scmp.ne.s32.totalorder %s33, %s36
    %p45 = scmp.eq.s32.totalorder %s14, 1
    %p46 = por %p44, %p45
    %p47 = scmp.ne.s32.totalorder %s36, %s37
    %p48 = scmp.eq.s32.totalorder %s14, 0
    %p49 = por %p47, %p48
    %p50 = scmp.ne.s32.totalorder %s36, %s37
    %p51 = scmp.eq.s32.totalorder %s15, 1
    %p52 = por %p50, %p51
    %p54 = scmp.ne.s32.totalorder %s37, %s53
    %p55 = scmp.eq.s32.totalorder %s15, 0
    %p56 = por %p54, %p55
    %s58 = sadd.s32 %s57, 1
    %p61 = scmp.eq.s32.totalorder %s9, 1
    %p62 = scmp.ne.s32.totalorder %s57, %s59
    %p63 = scmp.eq.s32.totalorder %s9, 0
    %p64 = por %p62, %p63
    %p65 = scmp.ne.s32.totalorder %s57, %s59
    %p66 = scmp.eq.s32.totalorder %s14, 1
    %p67 = por %p65, %p66
    %p68 = scmp.ne.s32.totalorder %s59, %s60
    %p69 = scmp.eq.s32.totalorder %s14, 0
    %p70 = por %p68, %p69
    %p71 = scmp.ne.s32.totalorder %s59, %s60
    %p72 = scmp.eq.s32.totalorder %s15, 1
    %p73 = por %p71, %p72
    %p75 = scmp.ne.s32.totalorder %s60, %s74
    %p76 = scmp.eq.s32.totalorder %s15, 0
    %p77 = por %p75, %p76
    %s79 = sadd.s32 %s78, 1
    %p82 = scmp.eq.s32.totalorder %s9, 1
    %p83 = scmp.ne.s32.totalorder %s78, %s80
    %p84 = scmp.eq.s32.totalorder %s9, 0
    %p85 = por %p83, %p84
    %p86 = scmp.ne.s32.totalorder %s78, %s80
    %p87 = scmp.eq.s32.totalorder %s14, 1
    %p88 = por %p86, %p87
    %p89 = scmp.ne.s32.totalorder %s80, %s81
    %p90 = scmp.eq.s32.totalorder %s14, 0
    %p91 = por %p89, %p90
    %p92 = scmp.ne.s32.totalorder %s80, %s81
    %p93 = scmp.eq.s32.totalorder %s15, 1
    %p94 = por %p92, %p93
    %p96 = scmp.ne.s32.totalorder %s81, %s95
    %p97 = scmp.eq.s32.totalorder %s15, 0
    %p98 = por %p96, %p97
    %s99 = ssub.s32 %s16, %s28
    %s100 = ssub.s32 %s17, %s24
    %s101 = sor.u32 %s99, %s100
    %p102 = scmp.eq.s32.totalorder %s101, 0
    %s104 = sadd.s32 %s103, 1
    %s105 = scalar_select %p102, %s103, %s104
    %p108 = pneg %p102
    %p109 = scmp.eq.s32.totalorder %s9, 1
    %p110 = por %p108, %p109
    %p111 = scmp.ne.s32.totalorder %s103, %s106
    %p112 = scmp.eq.s32.totalorder %s9, 0
    %p113 = por %p111, %p112
    %p114 = scmp.ne.s32.totalorder %s103, %s106
    %p115 = scmp.eq.s32.totalorder %s14, 1
    %p116 = por %p114, %p115
    %p117 = scmp.ne.s32.totalorder %s106, %s107
    %p118 = scmp.eq.s32.totalorder %s14, 0
    %p119 = por %p117, %p118
    %p120 = scmp.ne.s32.totalorder %s106, %s107
    %p121 = scmp.eq.s32.totalorder %s15, 1
    %p122 = por %p120, %p121
    %p124 = scmp.ne.s32.totalorder %s107, %s123
    %p125 = scmp.eq.s32.totalorder %s15, 0
    %p126 = por %p124, %p125
    %p127 = scmp.le.s32.totalorder 1, %s9
    %p128 = scmp.lt.s32.totalorder %s9, 3
    %p129 = pnand %p127, %p128
    %p130 = pneg %p129
    // Predicated region
    $region9: #{esa_forward.6} parent=5 // pred_check
      _
    $region10: #{esa_forward.6} parent=5 // pred_check_branch
      %132 = sbr.rel (%p129) target = $region12
    $region11: #{esa_forward.6} parent=5 // pred_region
      %s133 = ssub.s32 %s9, 1
      // Predicated region
      $region13: #{esa_forward.6} parent=11 // pred_check
        %p134 = pneg %p70
      $region14: #{esa_forward.6} parent=11 // pred_check_branch
        %136 = sbr.rel (%p134) target = $region16
      $region15: #{esa_forward.6} parent=11 // pred_region
        _
      $region16: #{esa_forward.6} parent=11 // pred_fallthru
        _
      // Predicated region
      $region17: #{esa_forward.6} parent=11 // pred_check
        %p137 = pneg %p91
      $region18: #{esa_forward.6} parent=11 // pred_check_branch
        %139 = sbr.rel (%p137) target = $region20
      $region19: #{esa_forward.6} parent=11 // pred_region
        _
      $region20: #{esa_forward.6} parent=11 // pred_fallthru
        _
    $region12: #{esa_forward.6} parent=5 // pred_fallthru
      _
    %p140 = scmp.lt.s32.totalorder %s9, 2
    // Predicated region
    $region21: #{esa_forward.6} parent=5 // pred_check
      %p141 = pneg %p140
    $region22: #{esa_forward.6} parent=5 // pred_check_branch
      %143 = sbr.rel (%p141) target = $region24
    $region23: #{esa_forward.6} parent=5 // pred_region
      // Predicated region
      $region25: #{esa_forward.6} parent=23 // pred_check
        %p144 = pneg %p43
      $region26: #{esa_forward.6} parent=23 // pred_check_branch
        %146 = sbr.rel (%p144) target = $region28
      $region27: #{esa_forward.6} parent=23 // pred_region
        %s147 = smul.u32 2, %s17
        %p148 = scmp.lt.s32.totalorder %s16, 1
        %s149 = scalar_select %p148, %s16, 1
        %p150 = scmp.lt.s32.totalorder %s147, 1
        %s151 = scalar_select %p150, %s147, 1
        %s152 = smul.addr %s149, 10
        %s153 = sadd.s32 %s151, %s152
        %s154 = smul.addr %s153, 8
        %s155 = scalar_lea.vmem %s0, %s154
        %s156 = smul.u32 2, %s17
      $region28: #{esa_forward.6} parent=23 // pred_fallthru
        _
    $region24: #{esa_forward.6} parent=5 // pred_fallthru
      _
    %p157 = scmp.le.s32.totalorder 1, %s9
    %p158 = scmp.lt.s32.totalorder %s9, 3
    %p159 = pnand %p157, %p158
    %p160 = pneg %p159
    // Predicated region
    $region29: #{esa_forward.6} parent=5 // pred_check
      _
    $region30: #{esa_forward.6} parent=5 // pred_check_branch
      %162 = sbr.rel (%p159) target = $region32
    $region31: #{esa_forward.6} parent=5 // pred_region
      %s163 = ssub.s32 %s9, 1
      %s164 = smul.u32 2, %s19
      %p165 = scmp.lt.s32.totalorder %s18, 1
      %s166 = scalar_select %p165, %s18, 1
      %p167 = scmp.lt.s32.totalorder %s164, 1
      %s168 = scalar_select %p167, %s164, 1
      %s169 = smul.addr %s166, 10
      %s170 = sadd.s32 %s168, %s169
      %s171 = smul.addr %s170, 8
      %s172 = scalar_lea.vmem %s0, %s171
      %p173 = pneg %p49
      %p174 = pneg %p46
      %p175 = pneg %p70
      %p176 = pneg %p67
      %p177 = pneg %p91
      %p178 = pneg %p88
      %p179 = pneg %p119
      %p180 = pneg %p116
      %s181 = smul.u32 2, %s19
      %p182 = scmp.lt.s32.totalorder %s18, 1
      %s183 = scalar_select %p182, %s18, 1
      %p184 = scmp.lt.s32.totalorder %s181, 1
      %s185 = scalar_select %p184, %s181, 1
      %s186 = smul.addr %s183, 2
      %s187 = sadd.s32 %s185, %s186
      %s188 = smul.addr %s187, 4
      %s189 = scalar_lea.vmem %s3, %s188
      %s190 = smul.u32 2, %s19
      %p191 = scmp.lt.s32.totalorder %s18, 1
      %s192 = scalar_select %p191, %s18, 1
      %p193 = scmp.lt.s32.totalorder %s190, 1
      %s194 = scalar_select %p193, %s190, 1
      %s195 = smul.addr %s192, 10
      %s196 = sadd.s32 %s194, %s195
      %s197 = smul.addr %s196, 8
      %s198 = scalar_lea.vmem %s0, %s197
      %s199 = smul.u32 2, %s19
      %s200 = smul.u32 2, %s19
      %p201 = scmp.lt.s32.totalorder %s18, 1
      %s202 = scalar_select %p201, %s18, 1
      %p203 = scmp.lt.s32.totalorder %s200, 1
      %s204 = scalar_select %p203, %s200, 1
      %s205 = smul.addr %s202, 2
      %s206 = sadd.s32 %s204, %s205
      %s207 = smul.addr %s206, 4
      %s208 = scalar_lea.vmem %s3, %s207
      %s209 = smul.u32 2, %s19
      %v210 = vld [vmem:[%s1] sm:$0xf]
      %v211 = vld [vmem:[%s198] sm:$0xff]
      %v212 = vld [vmem:[%s198 + $0x8] sm:$0xff]
      %v213 = vld [vmem:[%s198 + $0x10] sm:$0xff]
      %v214 = vld [vmem:[%s198 + $0x18] sm:$0xff]
      %v215 = vld [vmem:[%s198 + $0x20] sm:$0xff]
      %v216 = vld [vmem:[%s198 + $0x28] sm:$0xff]
      %v217 = vld [vmem:[%s198 + $0x30] sm:$0xff]
      %v218 = vld [vmem:[%s198 + $0x38] sm:$0xff]
      %v219 = vld [vmem:[%s198 + $0x40] sm:$0xf]
      %v220 = vld [vmem:[%s198 + $0x48] sm:$0xf]
      %v221 = vld [vmem:[%s2] sm:$0xf]
      %223 = vset.pattern.permute.xlu0 0
      %224 = vperm.xlu0 %223, %v221
      %v225 = vpop.permute.xlu0 %224
      %vm227 = vcmask 293888
      %v229 = vsel %vm227, %v210, 0
      %vm231 = vcmask 1043456
      %v233 = vsel %vm231, %v219, 0
      %v236 = vsel %vm231, %v220, 0
      %238 = vmatprep.subr.mxu0 %v212
      %239 = vmatpush1.msra.mxu0 %v211
      %240 = vmatprep.subr.mxu0 %v214
      %241 = vmatpush1.msra.mxu0 %v213
      %242 = vmatprep.subr.mxu0 %v216
      %243 = vmatpush1.msra.mxu0 %v215
      %244 = vmatprep.subr.mxu0 %v218
      %245 = vmatpush1.msra.mxu0 %v217
      %246 = vmatprep.subr.mxu0 %v236
      %247 = vmatpush1.msra.mxu0 %v233
      %248 = vmatprep.subr.mxu0 0.0
      %249 = vmatpush1.msra.mxu0 0.0
      %250 = vmatprep.subr.mxu0 0.0
      %251 = vmatpush1.msra.mxu0 0.0
      %252 = vmatprep.subr.mxu0 0.0
      %253 = vmatpush1.msra.mxu0 0.0
      %254 = vmatprep.subr.mxu0 0.0
      %255 = vmatpush1.msra.mxu0 0.0
      %256 = vmatprep.subr.mxu0 0.0
      %257 = vmatpush1.msra.mxu0 0.0
      %258 = vmatprep.subr.mxu0 0.0
      %259 = vmatpush1.msra.mxu0 0.0
      %260 = vmatprep.subr.mxu0 0.0
      %261 = vmatpush1.msra.mxu0 0.0
      %262 = vmatprep.subr.mxu0 0.0
      %263 = vmatpush1.msra.mxu0 0.0
      %264 = vmatprep.subr.mxu0 0.0
      %265 = vmatpush1.msra.mxu0 0.0
      %266 = vmatprep.subr.mxu0 0.0
      %267 = vmatpush1.msra.mxu0 0.0
      %268 = vmatprep.subr.mxu0 0.0
      %269 = vmatpush1.msra.mxu0 0.0
      %270 = vmatprep.subr.mxu0 0.0
      %271 = vmatpush1.msra.mxu0 0.0
      %272 = vmatprep.subr.mxu0 0.0
      %273 = vmatpush1.msra.mxu0 0.0
      %274 = vmatprep.subr.mxu0 0.0
      %275 = vmatpush1.msra.mxu0 0.0
      %276 = vmatprep.subr.mxu0 0.0
      %277 = vmatpush1.msra.mxu0 0.0
      %278 = vmatprep.subr.mxu0 0.0
      %279 = vmatpush1.msra.mxu0 0.0
      %280 = vmatprep.subr.mxu0 0.0
      %281 = vmatpush1.msra.mxu0 0.0
      %282 = vmatprep.subr.mxu0 0.0
      %283 = vmatpush1.msra.mxu0 0.0
      %284 = vmatprep.subr.mxu0 0.0
      %285 = vmatpush1.msra.mxu0 0.0
      %286 = vmatprep.subr.mxu0 0.0
      %287 = vmatpush1.msra.mxu0 0.0
      %288 = vmatprep.subr.mxu0 0.0
      %289 = vmatpush1.msra.mxu0 0.0
      %290 = vmatprep.subr.mxu0 0.0
      %291 = vmatpush1.msra.mxu0 0.0
      %292 = vmatprep.subr.mxu0 0.0
      %293 = vmatpush1.msra.mxu0 0.0
      %294 = vmatprep.subr.mxu0 0.0
      %295 = vmatpush1.msra.mxu0 0.0
      %296 = vmatprep.subr.mxu0 0.0
      %297 = vmatpush1.msra.mxu0 0.0
      %298 = vmatprep.subr.mxu0 0.0
      %299 = vmatpush1.msra.mxu0 0.0
      %300 = vmatprep.subr.mxu0 0.0
      %301 = vmatpush1.msra.mxu0 0.0
      %302 = vmatprep.mubr.f32.mxu0 0.0
      %303 = vmatmul.mubr.f32.gmra.mrb[0].mxu0 %v229
      %v304 = vpop.f32.mrb[0].mxu0
      %v305 = vadd.f32 %v225, %v304
      %v306 = vpop.f32.mrb[0].mxu0
      %v307 = vadd.f32 %v225, %v306
      %308 = vdwg.mxu0
      %v311 = vcombine.low %v305, %v307
      %vm313 = vcmask 793604
      %vm314 = vmor %vm313, %vm231
      %315 = vst.msk [vmem:[%s208] sm:$0xff] %vm314, %v311
      %s316 = smul.u32 2, %s19
      %p317 = scmp.lt.s32.totalorder %s18, 1
      %s318 = scalar_select %p317, %s18, 1
      %p319 = scmp.lt.s32.totalorder %s316, 1
      %s320 = scalar_select %p319, %s316, 1
      %s321 = smul.addr %s318, 2
      %s322 = sadd.s32 %s320, %s321
      %s323 = smul.addr %s322, 4
      %s324 = scalar_lea.vmem %s3, %s323
      // Predicated region
      $region33: #{esa_forward.6} parent=31 // pred_check
        %p325 = pneg %p116
      $region34: #{esa_forward.6} parent=31 // pred_check_branch
        %327 = sbr.rel (%p325) target = $region36
      $region35: #{esa_forward.6} parent=31 // pred_region
        %s328 = smul.u32 2, %s19
      $region36: #{esa_forward.6} parent=31 // pred_fallthru
        _
    $region32: #{esa_forward.6} parent=5 // pred_fallthru
      _
    %p329 = scmp.le.s32.totalorder 2, %s9
    // Predicated region
    $region37: #{esa_forward.6} parent=5 // pred_check
      %p330 = pneg %p329
    $region38: #{esa_forward.6} parent=5 // pred_check_branch
      %332 = sbr.rel (%p330) target = $region40
    $region39: #{esa_forward.6} parent=5 // pred_region
      %s333 = ssub.s32 %s9, 2
      // Predicated region
      $region41: #{esa_forward.6} parent=39 // pred_check
        %p334 = pneg %p122
      $region42: #{esa_forward.6} parent=39 // pred_check_branch
        %336 = sbr.rel (%p334) target = $region44
      $region43: #{esa_forward.6} parent=39 // pred_region
        %s337 = smul.u32 2, %s21
        %p338 = scmp.lt.s32.totalorder %s20, 1
        %s339 = scalar_select %p338, %s20, 1
        %p340 = scmp.lt.s32.totalorder %s337, 1
        %s341 = scalar_select %p340, %s337, 1
        %s342 = smul.addr %s339, 2
        %s343 = sadd.s32 %s341, %s342
        %s344 = smul.addr %s343, 4
        %s345 = scalar_lea.vmem %s3, %s344
      $region44: #{esa_forward.6} parent=39 // pred_fallthru
        _
    $region40: #{esa_forward.6} parent=5 // pred_fallthru
      _
  $region6: #{esa_forward.6} parent=0 // loop_footer
    %s13 = sadd.s32 1, %s9
  $region7: #{esa_forward.6} parent=0 // loop_footer_branch
    %8 = sbr.rel target = $region3
  $region8: #{esa_forward.6} parent=0 // loop_exit
    _

// kernel: esa_forward.8
$region0: #{esa_forward.8}
  #allocation0 [shape = 'u32[]', space=smem, size = 0x4, offset = 0x4, fixed_abs, tag = 'smem constant byte address 0x4 - core index']
  #allocation1 [shape = 'u32[144,128]{1,0:T(1,128)}', space=vmem, size = 0x12000, scoped, tag = 'internal scratch']
  %s0 = inlined_call_operand.vmem [shape: f32[2,36,9], index: 0, kind: input, shape index: {}]
  %s1 = inlined_call_operand.vmem [shape: f32[4,36], index: 1, kind: input, shape index: {}]
  %s2 = inlined_call_operand.vmem [shape: f32[4,1], index: 2, kind: input, shape index: {}]
  %s3 = inlined_call_operand.vmem [shape: f32[2,4,9], index: 3, kind: output, shape index: {}]
  %s4 = sld [smem:[#allocation0]]
  $region45: #{esa_forward.8} parent=0
    _
  %s6 = ssub.s32 1, %s4
  %s7 = scalar_select 0, %s6, %s4
  loop: start=0, step=1, limit=4
  $region2: #{esa_forward.8} parent=0 // loop_pre_header
    _
  $region3: #{esa_forward.8} parent=0 // loop_header
    %s9 = sphi 0, %s13
    %p10 = scmp.ge.s32.totalorder %s9, 4
    %s16 = sphi 0, %s28
    %s17 = sphi 0, %s24
    %s18 = sphi 0, %s16
    %s19 = sphi 0, %s17
    %s20 = sphi 0, %s18
    %s21 = sphi 0, %s19
    %s33 = sphi 0, %s35
    %s36 = sphi 0, %s33
    %s37 = sphi 0, %s36
    %s53 = sphi 0, %s37
    %s57 = sphi 0, %s57
    %s59 = sphi 0, %s57
    %s60 = sphi 0, %s59
    %s74 = sphi 0, %s60
    %s78 = sphi 0, %s78
    %s80 = sphi 0, %s78
    %s81 = sphi 0, %s80
    %s95 = sphi 0, %s81
    %s103 = sphi 0, %s105
    %s106 = sphi 0, %s103
    %s107 = sphi 0, %s106
    %s123 = sphi 0, %s107
  $region4: #{esa_forward.8} parent=0 // loop_header_branch
    %12 = sbr.rel (%p10) target = $region8
  $region5: #{esa_forward.8} parent=0 // loop_body
    %s14 = ssub.s32 %s9, 1
    %s15 = ssub.s32 %s9, 2
    %s22 = sadd.s32 1, %s17
    %p23 = scmp.ge.s32.totalorder %s22, 1
    %s24 = scalar_select %p23, 0, %s22
    %s25 = sadd.s32 1, %s16
    %s26 = scalar_select %p23, %s25, %s16
    %p27 = scmp.ge.s32.totalorder %s26, 2
    %s28 = scalar_select %p27, 0, %s26
    %s29 = ssub.s32 %s16, %s28
    %s30 = ssub.s32 %s17, %s24
    %s31 = sor.u32 %s29, %s30
    %p32 = scmp.eq.s32.totalorder %s31, 0
    %s34 = sadd.s32 %s33, 1
    %s35 = scalar_select %p32, %s33, %s34
    %p38 = pneg %p32
    %p39 = scmp.eq.s32.totalorder %s9, 1
    %p40 = por %p38, %p39
    %p41 = scmp.ne.s32.totalorder %s33, %s36
    %p42 = scmp.eq.s32.totalorder %s9, 0
    %p43 = por %p41, %p42
    %p44 = scmp.ne.s32.totalorder %s33, %s36
    %p45 = scmp.eq.s32.totalorder %s14, 1
    %p46 = por %p44, %p45
    %p47 = scmp.ne.s32.totalorder %s36, %s37
    %p48 = scmp.eq.s32.totalorder %s14, 0
    %p49 = por %p47, %p48
    %p50 = scmp.ne.s32.totalorder %s36, %s37
    %p51 = scmp.eq.s32.totalorder %s15, 1
    %p52 = por %p50, %p51
    %p54 = scmp.ne.s32.totalorder %s37, %s53
    %p55 = scmp.eq.s32.totalorder %s15, 0
    %p56 = por %p54, %p55
    %s58 = sadd.s32 %s57, 1
    %p61 = scmp.eq.s32.totalorder %s9, 1
    %p62 = scmp.ne.s32.totalorder %s57, %s59
    %p63 = scmp.eq.s32.totalorder %s9, 0
    %p64 = por %p62, %p63
    %p65 = scmp.ne.s32.totalorder %s57, %s59
    %p66 = scmp.eq.s32.totalorder %s14, 1
    %p67 = por %p65, %p66
    %p68 = scmp.ne.s32.totalorder %s59, %s60
    %p69 = scmp.eq.s32.totalorder %s14, 0
    %p70 = por %p68, %p69
    %p71 = scmp.ne.s32.totalorder %s59, %s60
    %p72 = scmp.eq.s32.totalorder %s15, 1
    %p73 = por %p71, %p72
    %p75 = scmp.ne.s32.totalorder %s60, %s74
    %p76 = scmp.eq.s32.totalorder %s15, 0
    %p77 = por %p75, %p76
    %s79 = sadd.s32 %s78, 1
    %p82 = scmp.eq.s32.totalorder %s9, 1
    %p83 = scmp.ne.s32.totalorder %s78, %s80
    %p84 = scmp.eq.s32.totalorder %s9, 0
    %p85 = por %p83, %p84
    %p86 = scmp.ne.s32.totalorder %s78, %s80
    %p87 = scmp.eq.s32.totalorder %s14, 1
    %p88 = por %p86, %p87
    %p89 = scmp.ne.s32.totalorder %s80, %s81
    %p90 = scmp.eq.s32.totalorder %s14, 0
    %p91 = por %p89, %p90
    %p92 = scmp.ne.s32.totalorder %s80, %s81
    %p93 = scmp.eq.s32.totalorder %s15, 1
    %p94 = por %p92, %p93
    %p96 = scmp.ne.s32.totalorder %s81, %s95
    %p97 = scmp.eq.s32.totalorder %s15, 0
    %p98 = por %p96, %p97
    %s99 = ssub.s32 %s16, %s28
    %s100 = ssub.s32 %s17, %s24
    %s101 = sor.u32 %s99, %s100
    %p102 = scmp.eq.s32.totalorder %s101, 0
    %s104 = sadd.s32 %s103, 1
    %s105 = scalar_select %p102, %s103, %s104
    %p108 = pneg %p102
    %p109 = scmp.eq.s32.totalorder %s9, 1
    %p110 = por %p108, %p109
    %p111 = scmp.ne.s32.totalorder %s103, %s106
    %p112 = scmp.eq.s32.totalorder %s9, 0
    %p113 = por %p111, %p112
    %p114 = scmp.ne.s32.totalorder %s103, %s106
    %p115 = scmp.eq.s32.totalorder %s14, 1
    %p116 = por %p114, %p115
    %p117 = scmp.ne.s32.totalorder %s106, %s107
    %p118 = scmp.eq.s32.totalorder %s14, 0
    %p119 = por %p117, %p118
    %p120 = scmp.ne.s32.totalorder %s106, %s107
    %p121 = scmp.eq.s32.totalorder %s15, 1
    %p122 = por %p120, %p121
    %p124 = scmp.ne.s32.totalorder %s107, %s123
    %p125 = scmp.eq.s32.totalorder %s15, 0
    %p126 = por %p124, %p125
    %p127 = scmp.le.s32.totalorder 1, %s9
    %p128 = scmp.lt.s32.totalorder %s9, 3
    %p129 = pnand %p127, %p128
    %p130 = pneg %p129
    // Predicated region
    $region9: #{esa_forward.8} parent=5 // pred_check
      _
    $region10: #{esa_forward.8} parent=5 // pred_check_branch
      %132 = sbr.rel (%p129) target = $region12
    $region11: #{esa_forward.8} parent=5 // pred_region
      %s133 = ssub.s32 %s9, 1
      // Predicated region
      $region13: #{esa_forward.8} parent=11 // pred_check
        %p134 = pneg %p70
      $region14: #{esa_forward.8} parent=11 // pred_check_branch
        %136 = sbr.rel (%p134) target = $region16
      $region15: #{esa_forward.8} parent=11 // pred_region
        _
      $region16: #{esa_forward.8} parent=11 // pred_fallthru
        _
      // Predicated region
      $region17: #{esa_forward.8} parent=11 // pred_check
        %p137 = pneg %p91
      $region18: #{esa_forward.8} parent=11 // pred_check_branch
        %139 = sbr.rel (%p137) target = $region20
      $region19: #{esa_forward.8} parent=11 // pred_region
        _
      $region20: #{esa_forward.8} parent=11 // pred_fallthru
        _
    $region12: #{esa_forward.8} parent=5 // pred_fallthru
      _
    %p140 = scmp.lt.s32.totalorder %s9, 2
    // Predicated region
    $region21: #{esa_forward.8} parent=5 // pred_check
      %p141 = pneg %p140
    $region22: #{esa_forward.8} parent=5 // pred_check_branch
      %143 = sbr.rel (%p141) target = $region24
    $region23: #{esa_forward.8} parent=5 // pred_region
      // Predicated region
      $region25: #{esa_forward.8} parent=23 // pred_check
        %p144 = pneg %p43
      $region26: #{esa_forward.8} parent=23 // pred_check_branch
        %146 = sbr.rel (%p144) target = $region28
      $region27: #{esa_forward.8} parent=23 // pred_region
        %p147 = scmp.lt.s32.totalorder %s16, 1
        %s148 = scalar_select %p147, %s16, 1
        %p149 = scmp.lt.s32.totalorder %s17, 0
        %s150 = scalar_select %p149, %s17, 0
        %s151 = smul.addr %s148, 5
        %s152 = sadd.s32 %s150, %s151
        %s153 = smul.addr %s152, 8
        %s154 = scalar_lea.vmem %s0, %s153
      $region28: #{esa_forward.8} parent=23 // pred_fallthru
        _
    $region24: #{esa_forward.8} parent=5 // pred_fallthru
      _
    %p155 = scmp.le.s32.totalorder 1, %s9
    %p156 = scmp.lt.s32.totalorder %s9, 3
    %p157 = pnand %p155, %p156
    %p158 = pneg %p157
    // Predicated region
    $region29: #{esa_forward.8} parent=5 // pred_check
      _
    $region30: #{esa_forward.8} parent=5 // pred_check_branch
      %160 = sbr.rel (%p157) target = $region32
    $region31: #{esa_forward.8} parent=5 // pred_region
      %s161 = ssub.s32 %s9, 1
      %p162 = scmp.lt.s32.totalorder %s18, 1
      %s163 = scalar_select %p162, %s18, 1
      %p164 = scmp.lt.s32.totalorder %s19, 0
      %s165 = scalar_select %p164, %s19, 0
      %s166 = smul.addr %s163, 5
      %s167 = sadd.s32 %s165, %s166
      %s168 = smul.addr %s167, 8
      %s169 = scalar_lea.vmem %s0, %s168
      %p170 = pneg %p49
      %p171 = pneg %p46
      %p172 = pneg %p70
      %p173 = pneg %p67
      %p174 = pneg %p91
      %p175 = pneg %p88
      %p176 = pneg %p119
      %p177 = pneg %p116
      %p178 = scmp.lt.s32.totalorder %s18, 1
      %s179 = scalar_select %p178, %s18, 1
      %p180 = scmp.lt.s32.totalorder %s19, 0
      %s181 = scalar_select %p180, %s19, 0
      %s182 = sadd.s32 %s181, %s179
      %s183 = smul.addr %s182, 4
      %s184 = scalar_lea.vmem %s3, %s183
      %p185 = scmp.lt.s32.totalorder %s18, 1
      %s186 = scalar_select %p185, %s18, 1
      %p187 = scmp.lt.s32.totalorder %s19, 0
      %s188 = scalar_select %p187, %s19, 0
      %s189 = smul.addr %s186, 5
      %s190 = sadd.s32 %s188, %s189
      %s191 = smul.addr %s190, 8
      %s192 = scalar_lea.vmem %s0, %s191
      %p193 = scmp.lt.s32.totalorder %s18, 1
      %s194 = scalar_select %p193, %s18, 1
      %p195 = scmp.lt.s32.totalorder %s19, 0
      %s196 = scalar_select %p195, %s19, 0
      %s197 = sadd.s32 %s196, %s194
      %s198 = smul.addr %s197, 4
      %s199 = scalar_lea.vmem %s3, %s198
      %v200 = vld [vmem:[%s1] sm:$0xf]
      %v201 = vld [vmem:[%s192] sm:$0xff]
      %v202 = vld [vmem:[%s192 + $0x8] sm:$0xff]
      %v203 = vld [vmem:[%s192 + $0x10] sm:$0xff]
      %v204 = vld [vmem:[%s192 + $0x18] sm:$0xff]
      %v205 = vld [vmem:[%s192 + $0x20] sm:$0xf]
      %v206 = vld [vmem:[%s2] sm:$0xf]
      %208 = vset.pattern.permute.xlu0 0
      %209 = vperm.xlu0 %208, %v206
      %v210 = vpop.permute.xlu0 %209
      %vm212 = vcmask 293888
      %v214 = vsel %vm212, %v200, 0
      %vm216 = vcmask 1043456
      %v218 = vsel %vm216, %v205, 0
      %220 = vmatprep.subr.mxu0 0.0
      %221 = vmatpush1.msra.mxu0 %v201
      %222 = vmatprep.subr.mxu0 0.0
      %223 = vmatpush1.msra.mxu0 %v202
      %224 = vmatprep.subr.mxu0 0.0
      %225 = vmatpush1.msra.mxu0 %v203
      %226 = vmatprep.subr.mxu0 0.0
      %227 = vmatpush1.msra.mxu0 %v204
      %228 = vmatprep.subr.mxu0 0.0
      %229 = vmatpush1.msra.mxu0 %v218
      %230 = vmatprep.subr.mxu0 0.0
      %231 = vmatpush1.msra.mxu0 0.0
      %232 = vmatprep.subr.mxu0 0.0
      %233 = vmatpush1.msra.mxu0 0.0
      %234 = vmatprep.subr.mxu0 0.0
      %235 = vmatpush1.msra.mxu0 0.0
      %236 = vmatprep.subr.mxu0 0.0
      %237 = vmatpush1.msra.mxu0 0.0
      %238 = vmatprep.subr.mxu0 0.0
      %239 = vmatpush1.msra.mxu0 0.0
      %240 = vmatprep.subr.mxu0 0.0
      %241 = vmatpush1.msra.mxu0 0.0
      %242 = vmatprep.subr.mxu0 0.0
      %243 = vmatpush1.msra.mxu0 0.0
      %244 = vmatprep.subr.mxu0 0.0
      %245 = vmatpush1.msra.mxu0 0.0
      %246 = vmatprep.subr.mxu0 0.0
      %247 = vmatpush1.msra.mxu0 0.0
      %248 = vmatprep.subr.mxu0 0.0
      %249 = vmatpush1.msra.mxu0 0.0
      %250 = vmatprep.subr.mxu0 0.0
      %251 = vmatpush1.msra.mxu0 0.0
      %252 = vmatprep.subr.mxu0 0.0
      %253 = vmatpush1.msra.mxu0 0.0
      %254 = vmatprep.subr.mxu0 0.0
      %255 = vmatpush1.msra.mxu0 0.0
      %256 = vmatprep.subr.mxu0 0.0
      %257 = vmatpush1.msra.mxu0 0.0
      %258 = vmatprep.subr.mxu0 0.0
      %259 = vmatpush1.msra.mxu0 0.0
      %260 = vmatprep.subr.mxu0 0.0
      %261 = vmatpush1.msra.mxu0 0.0
      %262 = vmatprep.subr.mxu0 0.0
      %263 = vmatpush1.msra.mxu0 0.0
      %264 = vmatprep.subr.mxu0 0.0
      %265 = vmatpush1.msra.mxu0 0.0
      %266 = vmatprep.subr.mxu0 0.0
      %267 = vmatpush1.msra.mxu0 0.0
      %268 = vmatprep.subr.mxu0 0.0
      %269 = vmatpush1.msra.mxu0 0.0
      %270 = vmatprep.subr.mxu0 0.0
      %271 = vmatpush1.msra.mxu0 0.0
      %272 = vmatprep.subr.mxu0 0.0
      %273 = vmatpush1.msra.mxu0 0.0
      %274 = vmatprep.subr.mxu0 0.0
      %275 = vmatpush1.msra.mxu0 0.0
      %276 = vmatprep.subr.mxu0 0.0
      %277 = vmatpush1.msra.mxu0 0.0
      %278 = vmatprep.subr.mxu0 0.0
      %279 = vmatpush1.msra.mxu0 0.0
      %280 = vmatprep.subr.mxu0 0.0
      %281 = vmatpush1.msra.mxu0 0.0
      %282 = vmatprep.subr.mxu0 0.0
      %283 = vmatpush1.msra.mxu0 0.0
      %284 = vmatprep.mubr.f32.mxu0 0.0
      %285 = vmatmul.mubr.f32.gmra.mrb[0].mxu0 %v214
      %v286 = vpop.f32.mrb[0].mxu0
      %v287 = vadd.f32 %v210, %v286
      %v288 = vpop.f32.mrb[0].mxu0
      %289 = vdwg.mxu0
      %vm290 = vcmask 68608
      %291 = vst.msk [vmem:[%s199] sm:$0xf] %vm290, %v287
      %p292 = scmp.lt.s32.totalorder %s18, 1
      %s293 = scalar_select %p292, %s18, 1
      %p294 = scmp.lt.s32.totalorder %s19, 0
      %s295 = scalar_select %p294, %s19, 0
      %s296 = sadd.s32 %s295, %s293
      %s297 = smul.addr %s296, 4
      %s298 = scalar_lea.vmem %s3, %s297
      // Predicated region
      $region33: #{esa_forward.8} parent=31 // pred_check
        %p299 = pneg %p116
      $region34: #{esa_forward.8} parent=31 // pred_check_branch
        %301 = sbr.rel (%p299) target = $region36
      $region35: #{esa_forward.8} parent=31 // pred_region
        _
      $region36: #{esa_forward.8} parent=31 // pred_fallthru
        _
    $region32: #{esa_forward.8} parent=5 // pred_fallthru
      _
    %p302 = scmp.le.s32.totalorder 2, %s9
    // Predicated region
    $region37: #{esa_forward.8} parent=5 // pred_check
      %p303 = pneg %p302
    $region38: #{esa_forward.8} parent=5 // pred_check_branch
      %305 = sbr.rel (%p303) target = $region40
    $region39: #{esa_forward.8} parent=5 // pred_region
      %s306 = ssub.s32 %s9, 2
      // Predicated region
      $region41: #{esa_forward.8} parent=39 // pred_check
        %p307 = pneg %p122
      $region42: #{esa_forward.8} parent=39 // pred_check_branch
        %309 = sbr.rel (%p307) target = $region44
      $region43: #{esa_forward.8} parent=39 // pred_region
        %p310 = scmp.lt.s32.totalorder %s20, 1
        %s311 = scalar_select %p310, %s20, 1
        %p312 = scmp.lt.s32.totalorder %s21, 0
        %s313 = scalar_select %p312, %s21, 0
        %s314 = sadd.s32 %s313, %s311
        %s315 = smul.addr %s314, 4
        %s316 = scalar_lea.vmem %s3, %s315
      $region44: #{esa_forward.8} parent=39 // pred_fallthru
        _
    $region40: #{esa_forward.8} parent=5 // pred_fallthru
      _
  $region6: #{esa_forward.8} parent=0 // loop_footer
    %s13 = sadd.s32 1, %s9
  $region7: #{esa_forward.8} parent=0 // loop_footer_branch
    %8 = sbr.rel target = $region3
  $region8: #{esa_forward.8} parent=0 // loop_exit
    _

// kernel: esa_forward.7
$region0: #{esa_forward.7}
  #allocation0 [shape = 'u32[]', space=smem, size = 0x4, offset = 0x4, fixed_abs, tag = 'smem constant byte address 0x4 - core index']
  #allocation1 [shape = 'u32[144,128]{1,0:T(1,128)}', space=vmem, size = 0x12000, scoped, tag = 'internal scratch']
  %s0 = inlined_call_operand.vmem [shape: f32[2,49,4,9], index: 0, kind: input, shape index: {}]
  %s1 = inlined_call_operand.vmem [shape: f32[2,4,9], index: 1, kind: output, shape index: {}]
  %s2 = sld [smem:[#allocation0]]
  $region37: #{esa_forward.7} parent=0
    _
  %s4 = ssub.s32 1, %s2
  %s5 = scalar_select 0, %s4, %s2
  loop: start=0, step=1, limit=4
  $region2: #{esa_forward.7} parent=0 // loop_pre_header
    _
  $region3: #{esa_forward.7} parent=0 // loop_header
    %s7 = sphi 0, %s11
    %p8 = scmp.ge.s32.totalorder %s7, 4
    %s17 = sphi 0, %s19
    %s20 = sphi 0, %s17
    %s21 = sphi 0, %s20
    %s37 = sphi 0, %s21
    %s43 = sphi 0, %s45
    %s46 = sphi 0, %s43
    %s47 = sphi 0, %s46
    %s63 = sphi 0, %s47
  $region4: #{esa_forward.7} parent=0 // loop_header_branch
    %10 = sbr.rel (%p8) target = $region8
  $region5: #{esa_forward.7} parent=0 // loop_body
    %s12 = ssub.s32 %s7, 1
    %s13 = ssub.s32 %s7, 2
    %s14 = sadd.s32 %s7, 1
    %s15 = ssub.s32 %s7, %s14
    %p16 = scmp.eq.s32.totalorder %s15, 0
    %s18 = sadd.s32 %s17, 1
    %s19 = scalar_select %p16, %s17, %s18
    %p22 = pneg %p16
    %p23 = scmp.eq.s32.totalorder %s7, 1
    %p24 = por %p22, %p23
    %p25 = scmp.ne.s32.totalorder %s17, %s20
    %p26 = scmp.eq.s32.totalorder %s7, 0
    %p27 = por %p25, %p26
    %p28 = scmp.ne.s32.totalorder %s17, %s20
    %p29 = scmp.eq.s32.totalorder %s12, 1
    %p30 = por %p28, %p29
    %p31 = scmp.ne.s32.totalorder %s20, %s21
    %p32 = scmp.eq.s32.totalorder %s12, 0
    %p33 = por %p31, %p32
    %p34 = scmp.ne.s32.totalorder %s20, %s21
    %p35 = scmp.eq.s32.totalorder %s13, 1
    %p36 = por %p34, %p35
    %p38 = scmp.ne.s32.totalorder %s21, %s37
    %p39 = scmp.eq.s32.totalorder %s13, 0
    %p40 = por %p38, %p39
    %s41 = ssub.s32 %s7, %s14
    %p42 = scmp.eq.s32.totalorder %s41, 0
    %s44 = sadd.s32 %s43, 1
    %s45 = scalar_select %p42, %s43, %s44
    %p48 = pneg %p42
    %p49 = scmp.eq.s32.totalorder %s7, 1
    %p50 = por %p48, %p49
    %p51 = scmp.ne.s32.totalorder %s43, %s46
    %p52 = scmp.eq.s32.totalorder %s7, 0
    %p53 = por %p51, %p52
    %p54 = scmp.ne.s32.totalorder %s43, %s46
    %p55 = scmp.eq.s32.totalorder %s12, 1
    %p56 = por %p54, %p55
    %p57 = scmp.ne.s32.totalorder %s46, %s47
    %p58 = scmp.eq.s32.totalorder %s12, 0
    %p59 = por %p57, %p58
    %p60 = scmp.ne.s32.totalorder %s46, %s47
    %p61 = scmp.eq.s32.totalorder %s13, 1
    %p62 = por %p60, %p61
    %p64 = scmp.ne.s32.totalorder %s47, %s63
    %p65 = scmp.eq.s32.totalorder %s13, 0
    %p66 = por %p64, %p65
    %p67 = scmp.le.s32.totalorder 1, %s7
    %p68 = scmp.lt.s32.totalorder %s7, 3
    %p69 = pnand %p67, %p68
    %p70 = pneg %p69
    // Predicated region
    $region9: #{esa_forward.7} parent=5 // pred_check
      _
    $region10: #{esa_forward.7} parent=5 // pred_check_branch
      %72 = sbr.rel (%p69) target = $region12
    $region11: #{esa_forward.7} parent=5 // pred_region
      %s73 = ssub.s32 %s7, 1
    $region12: #{esa_forward.7} parent=5 // pred_fallthru
      _
    %p74 = scmp.lt.s32.totalorder %s7, 2
    // Predicated region
    $region13: #{esa_forward.7} parent=5 // pred_check
      %p75 = pneg %p74
    $region14: #{esa_forward.7} parent=5 // pred_check_branch
      %77 = sbr.rel (%p75) target = $region16
    $region15: #{esa_forward.7} parent=5 // pred_region
      // Predicated region
      $region17: #{esa_forward.7} parent=15 // pred_check
        %p78 = pneg %p27
      $region18: #{esa_forward.7} parent=15 // pred_check_branch
        %80 = sbr.rel (%p78) target = $region20
      $region19: #{esa_forward.7} parent=15 // pred_region
        %p81 = scmp.lt.s32.totalorder %s7, 1
        %s82 = scalar_select %p81, %s7, 1
        %s83 = smul.addr %s82, 49
        %s84 = smul.addr %s83, 4
        %s85 = scalar_lea.vmem %s0, %s84
      $region20: #{esa_forward.7} parent=15 // pred_fallthru
        _
    $region16: #{esa_forward.7} parent=5 // pred_fallthru
      _
    %p86 = scmp.le.s32.totalorder 1, %s7
    %p87 = scmp.lt.s32.totalorder %s7, 3
    %p88 = pnand %p86, %p87
    %p89 = pneg %p88
    // Predicated region
    $region21: #{esa_forward.7} parent=5 // pred_check
      _
    $region22: #{esa_forward.7} parent=5 // pred_check_branch
      %91 = sbr.rel (%p88) target = $region24
    $region23: #{esa_forward.7} parent=5 // pred_region
      %s92 = ssub.s32 %s7, 1
      %p93 = scmp.lt.s32.totalorder %s12, 1
      %s94 = scalar_select %p93, %s12, 1
      %s95 = smul.addr %s94, 49
      %s96 = smul.addr %s95, 4
      %s97 = scalar_lea.vmem %s0, %s96
      %p98 = pneg %p33
      %p99 = pneg %p30
      %p100 = pneg %p59
      %p101 = pneg %p56
      %p102 = scmp.lt.s32.totalorder %s12, 1
      %s103 = scalar_select %p102, %s12, 1
      %s104 = smul.addr %s103, 4
      %s105 = scalar_lea.vmem %s1, %s104
      %p106 = scmp.lt.s32.totalorder %s12, 1
      %s107 = scalar_select %p106, %s12, 1
      %s108 = smul.addr %s107, 49
      %s109 = smul.addr %s108, 4
      %s110 = scalar_lea.vmem %s0, %s109
      %p111 = scmp.lt.s32.totalorder %s12, 1
      %s112 = scalar_select %p111, %s12, 1
      %s113 = smul.addr %s112, 4
      %s114 = scalar_lea.vmem %s1, %s113
      %v115 = vld [vmem:[%s110] sm:$0xf]
      %s116 = scalar_lea.vmem %s110, 4
      %v117 = vld [vmem:[%s116] sm:$0xf]
      %s118 = scalar_lea.vmem %s110, 8
      %v119 = vld [vmem:[%s118] sm:$0xf]
      %s120 = scalar_lea.vmem %s110, 12
      %v121 = vld [vmem:[%s120] sm:$0xf]
      %s122 = scalar_lea.vmem %s110, 16
      %v123 = vld [vmem:[%s122] sm:$0xf]
      %s124 = scalar_lea.vmem %s110, 20
      %v125 = vld [vmem:[%s124] sm:$0xf]
      %s126 = scalar_lea.vmem %s110, 24
      %v127 = vld [vmem:[%s126] sm:$0xf]
      %s128 = scalar_lea.vmem %s110, 28
      %v129 = vld [vmem:[%s128] sm:$0xf]
      %s130 = scalar_lea.vmem %s110, 32
      %v131 = vld [vmem:[%s130] sm:$0xf]
      %s132 = scalar_lea.vmem %s110, 36
      %v133 = vld [vmem:[%s132] sm:$0xf]
      %s134 = scalar_lea.vmem %s110, 40
      %v135 = vld [vmem:[%s134] sm:$0xf]
      %s136 = scalar_lea.vmem %s110, 44
      %v137 = vld [vmem:[%s136] sm:$0xf]
      %s138 = scalar_lea.vmem %s110, 48
      %v139 = vld [vmem:[%s138] sm:$0xf]
      %s140 = scalar_lea.vmem %s110, 52
      %v141 = vld [vmem:[%s140] sm:$0xf]
      %s142 = scalar_lea.vmem %s110, 56
      %v143 = vld [vmem:[%s142] sm:$0xf]
      %s144 = scalar_lea.vmem %s110, 60
      %v145 = vld [vmem:[%s144] sm:$0xf]
      %s146 = scalar_lea.vmem %s110, 64
      %v147 = vld [vmem:[%s146] sm:$0xf]
      %s148 = scalar_lea.vmem %s110, 68
      %v149 = vld [vmem:[%s148] sm:$0xf]
      %s150 = scalar_lea.vmem %s110, 72
      %v151 = vld [vmem:[%s150] sm:$0xf]
      %s152 = scalar_lea.vmem %s110, 76
      %v153 = vld [vmem:[%s152] sm:$0xf]
      %s154 = scalar_lea.vmem %s110, 80
      %v155 = vld [vmem:[%s154] sm:$0xf]
      %s156 = scalar_lea.vmem %s110, 84
      %v157 = vld [vmem:[%s156] sm:$0xf]
      %s158 = scalar_lea.vmem %s110, 88
      %v159 = vld [vmem:[%s158] sm:$0xf]
      %s160 = scalar_lea.vmem %s110, 92
      %v161 = vld [vmem:[%s160] sm:$0xf]
      %s162 = scalar_lea.vmem %s110, 96
      %v163 = vld [vmem:[%s162] sm:$0xf]
      %s164 = scalar_lea.vmem %s110, 100
      %v165 = vld [vmem:[%s164] sm:$0xf]
      %s166 = scalar_lea.vmem %s110, 104
      %v167 = vld [vmem:[%s166] sm:$0xf]
      %s168 = scalar_lea.vmem %s110, 108
      %v169 = vld [vmem:[%s168] sm:$0xf]
      %s170 = scalar_lea.vmem %s110, 112
      %v171 = vld [vmem:[%s170] sm:$0xf]
      %s172 = scalar_lea.vmem %s110, 116
      %v173 = vld [vmem:[%s172] sm:$0xf]
      %s174 = scalar_lea.vmem %s110, 120
      %v175 = vld [vmem:[%s174] sm:$0xf]
      %s176 = scalar_lea.vmem %s110, 124
      %v177 = vld [vmem:[%s176] sm:$0xf]
      %s178 = scalar_lea.vmem %s110, 128
      %v179 = vld [vmem:[%s178] sm:$0xf]
      %s180 = scalar_lea.vmem %s110, 132
      %v181 = vld [vmem:[%s180] sm:$0xf]
      %s182 = scalar_lea.vmem %s110, 136
      %v183 = vld [vmem:[%s182] sm:$0xf]
      %s184 = scalar_lea.vmem %s110, 140
      %v185 = vld [vmem:[%s184] sm:$0xf]
      %s186 = scalar_lea.vmem %s110, 144
      %v187 = vld [vmem:[%s186] sm:$0xf]
      %s188 = scalar_lea.vmem %s110, 148
      %v189 = vld [vmem:[%s188] sm:$0xf]
      %s190 = scalar_lea.vmem %s110, 152
      %v191 = vld [vmem:[%s190] sm:$0xf]
      %s192 = scalar_lea.vmem %s110, 156
      %v193 = vld [vmem:[%s192] sm:$0xf]
      %s194 = scalar_lea.vmem %s110, 160
      %v195 = vld [vmem:[%s194] sm:$0xf]
      %s196 = scalar_lea.vmem %s110, 164
      %v197 = vld [vmem:[%s196] sm:$0xf]
      %s198 = scalar_lea.vmem %s110, 168
      %v199 = vld [vmem:[%s198] sm:$0xf]
      %s200 = scalar_lea.vmem %s110, 172
      %v201 = vld [vmem:[%s200] sm:$0xf]
      %s202 = scalar_lea.vmem %s110, 176
      %v203 = vld [vmem:[%s202] sm:$0xf]
      %s204 = scalar_lea.vmem %s110, 180
      %v205 = vld [vmem:[%s204] sm:$0xf]
      %s206 = scalar_lea.vmem %s110, 184
      %v207 = vld [vmem:[%s206] sm:$0xf]
      %s208 = scalar_lea.vmem %s110, 188
      %v209 = vld [vmem:[%s208] sm:$0xf]
      %s210 = scalar_lea.vmem %s110, 192
      %v211 = vld [vmem:[%s210] sm:$0xf]
      %v212 = vmax.f32 %v115, %v117
      %v213 = vmax.f32 %v119, %v121
      %v214 = vmax.f32 %v123, %v125
      %v215 = vmax.f32 %v127, %v129
      %v216 = vmax.f32 %v131, %v133
      %v217 = vmax.f32 %v135, %v137
      %v218 = vmax.f32 %v139, %v141
      %v219 = vmax.f32 %v143, %v145
      %v220 = vmax.f32 %v147, %v149
      %v221 = vmax.f32 %v151, %v153
      %v222 = vmax.f32 %v155, %v157
      %v223 = vmax.f32 %v159, %v161
      %v224 = vmax.f32 %v163, %v165
      %v225 = vmax.f32 %v167, %v169
      %v226 = vmax.f32 %v171, %v173
      %v227 = vmax.f32 %v175, %v177
      %v228 = vmax.f32 %v179, %v181
      %v229 = vmax.f32 %v183, %v185
      %v230 = vmax.f32 %v187, %v189
      %v231 = vmax.f32 %v191, %v193
      %v232 = vmax.f32 %v195, %v197
      %v233 = vmax.f32 %v199, %v201
      %v234 = vmax.f32 %v203, %v205
      %v235 = vmax.f32 %v207, %v209
      %v236 = vmax.f32 %v212, %v213
      %v237 = vmax.f32 %v214, %v215
      %v238 = vmax.f32 %v216, %v217
      %v239 = vmax.f32 %v218, %v219
      %v240 = vmax.f32 %v220, %v221
      %v241 = vmax.f32 %v222, %v223
      %v242 = vmax.f32 %v224, %v225
      %v243 = vmax.f32 %v226, %v227
      %v244 = vmax.f32 %v228, %v229
      %v245 = vmax.f32 %v230, %v231
      %v246 = vmax.f32 %v232, %v233
      %v247 = vmax.f32 %v234, %v235
      %v248 = vmax.f32 %v236, %v237
      %v249 = vmax.f32 %v238, %v239
      %v250 = vmax.f32 %v240, %v241
      %v251 = vmax.f32 %v242, %v243
      %v252 = vmax.f32 %v244, %v245
      %v253 = vmax.f32 %v246, %v247
      %v254 = vmax.f32 %v248, %v249
      %v255 = vmax.f32 %v250, %v251
      %v256 = vmax.f32 %v252, %v253
      %v257 = vmax.f32 %v254, %v255
      %v258 = vmax.f32 %v256, %v211
      %v259 = vmax.f32 %v257, %v258
      %vm260 = vcmask 68608
      %261 = vst.msk [vmem:[%s114] sm:$0xf] %vm260, %v259
      %p262 = scmp.lt.s32.totalorder %s12, 1
      %s263 = scalar_select %p262, %s12, 1
      %s264 = smul.addr %s263, 4
      %s265 = scalar_lea.vmem %s1, %s264
      // Predicated region
      $region25: #{esa_forward.7} parent=23 // pred_check
        %p266 = pneg %p56
      $region26: #{esa_forward.7} parent=23 // pred_check_branch
        %268 = sbr.rel (%p266) target = $region28
      $region27: #{esa_forward.7} parent=23 // pred_region
        _
      $region28: #{esa_forward.7} parent=23 // pred_fallthru
        _
    $region24: #{esa_forward.7} parent=5 // pred_fallthru
      _
    %p269 = scmp.le.s32.totalorder 2, %s7
    // Predicated region
    $region29: #{esa_forward.7} parent=5 // pred_check
      %p270 = pneg %p269
    $region30: #{esa_forward.7} parent=5 // pred_check_branch
      %272 = sbr.rel (%p270) target = $region32
    $region31: #{esa_forward.7} parent=5 // pred_region
      %s273 = ssub.s32 %s7, 2
      // Predicated region
      $region33: #{esa_forward.7} parent=31 // pred_check
        %p274 = pneg %p62
      $region34: #{esa_forward.7} parent=31 // pred_check_branch
        %276 = sbr.rel (%p274) target = $region36
      $region35: #{esa_forward.7} parent=31 // pred_region
        %p277 = scmp.lt.s32.totalorder %s13, 1
        %s278 = scalar_select %p277, %s13, 1
        %s279 = smul.addr %s278, 4
        %s280 = scalar_lea.vmem %s1, %s279
      $region36: #{esa_forward.7} parent=31 // pred_fallthru
        _
    $region32: #{esa_forward.7} parent=5 // pred_fallthru
      _
  $region6: #{esa_forward.7} parent=0 // loop_footer
    %s11 = sadd.s32 1, %s7
  $region7: #{esa_forward.7} parent=0 // loop_footer_branch
    %6 = sbr.rel target = $region3
  $region8: #{esa_forward.7} parent=0 // loop_exit
    _

// kernel: esa_forward.9
$region0: #{esa_forward.9}
  #allocation0 [shape = 'u32[]', space=smem, size = 0x4, offset = 0x4, fixed_abs, tag = 'smem constant byte address 0x4 - core index']
  #allocation1 [shape = 'u32[144,128]{1,0:T(1,128)}', space=vmem, size = 0x12000, scoped, tag = 'internal scratch']
  %s0 = inlined_call_operand.vmem [shape: f32[2,8,1024], index: 0, kind: input, shape index: {}]
  %s1 = inlined_call_operand.vmem [shape: f32[2,4,9], index: 1, kind: input, shape index: {}]
  %s2 = inlined_call_operand.vmem [shape: f32[9,1024], index: 2, kind: input, shape index: {}]
  %s3 = inlined_call_operand.vmem [shape: f32[4,8], index: 3, kind: input, shape index: {}]
  %s4 = inlined_call_operand.vmem [shape: f32[4,1], index: 4, kind: input, shape index: {}]
  %s5 = inlined_call_operand.vmem [shape: f32[4,4], index: 5, kind: input, shape index: {}]
  %s6 = inlined_call_operand.vmem [shape: f32[4,1], index: 6, kind: input, shape index: {}]
  %s7 = inlined_call_operand.vmem [shape: f32[8,4], index: 7, kind: input, shape index: {}]
  %s8 = inlined_call_operand.vmem [shape: f32[8,1], index: 8, kind: input, shape index: {}]
  %s9 = inlined_call_operand.vmem [shape: f32[2,8,1024], index: 9, kind: output, shape index: {}]
  %s10 = sld [smem:[#allocation0]]
  $region69: #{esa_forward.9} parent=0
    _
  %s12 = ssub.s32 1, %s10
  %s13 = scalar_select 0, %s12, %s10
  loop: start=0, step=1, limit=4
  $region2: #{esa_forward.9} parent=0 // loop_pre_header
    _
  $region3: #{esa_forward.9} parent=0 // loop_header
    %s15 = sphi 0, %s19
    %p16 = scmp.ge.s32.totalorder %s15, 4
    %s22 = sphi 0, %s34
    %s23 = sphi 0, %s30
    %s24 = sphi 0, %s22
    %s25 = sphi 0, %s23
    %s26 = sphi 0, %s24
    %s27 = sphi 0, %s25
    %s39 = sphi 0, %s41
    %s42 = sphi 0, %s39
    %s43 = sphi 0, %s42
    %s59 = sphi 0, %s43
    %s65 = sphi 0, %s67
    %s68 = sphi 0, %s65
    %s69 = sphi 0, %s68
    %s85 = sphi 0, %s69
    %s91 = sphi 0, %s93
    %s94 = sphi 0, %s91
    %s95 = sphi 0, %s94
    %s111 = sphi 0, %s95
    %s115 = sphi 0, %s115
    %s117 = sphi 0, %s115
    %s118 = sphi 0, %s117
    %s132 = sphi 0, %s118
    %s136 = sphi 0, %s136
    %s138 = sphi 0, %s136
    %s139 = sphi 0, %s138
    %s153 = sphi 0, %s139
    %s157 = sphi 0, %s157
    %s159 = sphi 0, %s157
    %s160 = sphi 0, %s159
    %s174 = sphi 0, %s160
    %s178 = sphi 0, %s178
    %s180 = sphi 0, %s178
    %s181 = sphi 0, %s180
    %s195 = sphi 0, %s181
    %s199 = sphi 0, %s199
    %s201 = sphi 0, %s199
    %s202 = sphi 0, %s201
    %s216 = sphi 0, %s202
    %s220 = sphi 0, %s220
    %s222 = sphi 0, %s220
    %s223 = sphi 0, %s222
    %s237 = sphi 0, %s223
    %s245 = sphi 0, %s247
    %s248 = sphi 0, %s245
    %s249 = sphi 0, %s248
    %s265 = sphi 0, %s249
  $region4: #{esa_forward.9} parent=0 // loop_header_branch
    %18 = sbr.rel (%p16) target = $region8
  $region5: #{esa_forward.9} parent=0 // loop_body
    %s20 = ssub.s32 %s15, 1
    %s21 = ssub.s32 %s15, 2
    %s28 = sadd.s32 1, %s23
    %p29 = scmp.ge.s32.totalorder %s28, 1
    %s30 = scalar_select %p29, 0, %s28
    %s31 = sadd.s32 1, %s22
    %s32 = scalar_select %p29, %s31, %s22
    %p33 = scmp.ge.s32.totalorder %s32, 2
    %s34 = scalar_select %p33, 0, %s32
    %s35 = ssub.s32 %s22, %s34
    %s36 = ssub.s32 %s23, %s30
    %s37 = sor.u32 %s35, %s36
    %p38 = scmp.eq.s32.totalorder %s37, 0
    %s40 = sadd.s32 %s39, 1
    %s41 = scalar_select %p38, %s39, %s40
    %p44 = pneg %p38
    %p45 = scmp.eq.s32.totalorder %s15, 1
    %p46 = por %p44, %p45
    %p47 = scmp.ne.s32.totalorder %s39, %s42
    %p48 = scmp.eq.s32.totalorder %s15, 0
    %p49 = por %p47, %p48
    %p50 = scmp.ne.s32.totalorder %s39, %s42
    %p51 = scmp.eq.s32.totalorder %s20, 1
    %p52 = por %p50, %p51
    %p53 = scmp.ne.s32.totalorder %s42, %s43
    %p54 = scmp.eq.s32.totalorder %s20, 0
    %p55 = por %p53, %p54
    %p56 = scmp.ne.s32.totalorder %s42, %s43
    %p57 = scmp.eq.s32.totalorder %s21, 1
    %p58 = por %p56, %p57
    %p60 = scmp.ne.s32.totalorder %s43, %s59
    %p61 = scmp.eq.s32.totalorder %s21, 0
    %p62 = por %p60, %p61
    %s63 = ssub.s32 %s22, %s34
    %p64 = scmp.eq.s32.totalorder %s63, 0
    %s66 = sadd.s32 %s65, 1
    %s67 = scalar_select %p64, %s65, %s66
    %p70 = pneg %p64
    %p71 = scmp.eq.s32.totalorder %s15, 1
    %p72 = por %p70, %p71
    %p73 = scmp.ne.s32.totalorder %s65, %s68
    %p74 = scmp.eq.s32.totalorder %s15, 0
    %p75 = por %p73, %p74
    %p76 = scmp.ne.s32.totalorder %s65, %s68
    %p77 = scmp.eq.s32.totalorder %s20, 1
    %p78 = por %p76, %p77
    %p79 = scmp.ne.s32.totalorder %s68, %s69
    %p80 = scmp.eq.s32.totalorder %s20, 0
    %p81 = por %p79, %p80
    %p82 = scmp.ne.s32.totalorder %s68, %s69
    %p83 = scmp.eq.s32.totalorder %s21, 1
    %p84 = por %p82, %p83
    %p86 = scmp.ne.s32.totalorder %s69, %s85
    %p87 = scmp.eq.s32.totalorder %s21, 0
    %p88 = por %p86, %p87
    %s89 = ssub.s32 %s23, %s30
    %p90 = scmp.eq.s32.totalorder %s89, 0
    %s92 = sadd.s32 %s91, 1
    %s93 = scalar_select %p90, %s91, %s92
    %p96 = pneg %p90
    %p97 = scmp.eq.s32.totalorder %s15, 1
    %p98 = por %p96, %p97
    %p99 = scmp.ne.s32.totalorder %s91, %s94
    %p100 = scmp.eq.s32.totalorder %s15, 0
    %p101 = por %p99, %p100
    %p102 = scmp.ne.s32.totalorder %s91, %s94
    %p103 = scmp.eq.s32.totalorder %s20, 1
    %p104 = por %p102, %p103
    %p105 = scmp.ne.s32.totalorder %s94, %s95
    %p106 = scmp.eq.s32.totalorder %s20, 0
    %p107 = por %p105, %p106
    %p108 = scmp.ne.s32.totalorder %s94, %s95
    %p109 = scmp.eq.s32.totalorder %s21, 1
    %p110 = por %p108, %p109
    %p112 = scmp.ne.s32.totalorder %s95, %s111
    %p113 = scmp.eq.s32.totalorder %s21, 0
    %p114 = por %p112, %p113
    %s116 = sadd.s32 %s115, 1
    %p119 = scmp.eq.s32.totalorder %s15, 1
    %p120 = scmp.ne.s32.totalorder %s115, %s117
    %p121 = scmp.eq.s32.totalorder %s15, 0
    %p122 = por %p120, %p121
    %p123 = scmp.ne.s32.totalorder %s115, %s117
    %p124 = scmp.eq.s32.totalorder %s20, 1
    %p125 = por %p123, %p124
    %p126 = scmp.ne.s32.totalorder %s117, %s118
    %p127 = scmp.eq.s32.totalorder %s20, 0
    %p128 = por %p126, %p127
    %p129 = scmp.ne.s32.totalorder %s117, %s118
    %p130 = scmp.eq.s32.totalorder %s21, 1
    %p131 = por %p129, %p130
    %p133 = scmp.ne.s32.totalorder %s118, %s132
    %p134 = scmp.eq.s32.totalorder %s21, 0
    %p135 = por %p133, %p134
    %s137 = sadd.s32 %s136, 1
    %p140 = scmp.eq.s32.totalorder %s15, 1
    %p141 = scmp.ne.s32.totalorder %s136, %s138
    %p142 = scmp.eq.s32.totalorder %s15, 0
    %p143 = por %p141, %p142
    %p144 = scmp.ne.s32.totalorder %s136, %s138
    %p145 = scmp.eq.s32.totalorder %s20, 1
    %p146 = por %p144, %p145
    %p147 = scmp.ne.s32.totalorder %s138, %s139
    %p148 = scmp.eq.s32.totalorder %s20, 0
    %p149 = por %p147, %p148
    %p150 = scmp.ne.s32.totalorder %s138, %s139
    %p151 = scmp.eq.s32.totalorder %s21, 1
    %p152 = por %p150, %p151
    %p154 = scmp.ne.s32.totalorder %s139, %s153
    %p155 = scmp.eq.s32.totalorder %s21, 0
    %p156 = por %p154, %p155
    %s158 = sadd.s32 %s157, 1
    %p161 = scmp.eq.s32.totalorder %s15, 1
    %p162 = scmp.ne.s32.totalorder %s157, %s159
    %p163 = scmp.eq.s32.totalorder %s15, 0
    %p164 = por %p162, %p163
    %p165 = scmp.ne.s32.totalorder %s157, %s159
    %p166 = scmp.eq.s32.totalorder %s20, 1
    %p167 = por %p165, %p166
    %p168 = scmp.ne.s32.totalorder %s159, %s160
    %p169 = scmp.eq.s32.totalorder %s20, 0
    %p170 = por %p168, %p169
    %p171 = scmp.ne.s32.totalorder %s159, %s160
    %p172 = scmp.eq.s32.totalorder %s21, 1
    %p173 = por %p171, %p172
    %p175 = scmp.ne.s32.totalorder %s160, %s174
    %p176 = scmp.eq.s32.totalorder %s21, 0
    %p177 = por %p175, %p176
    %s179 = sadd.s32 %s178, 1
    %p182 = scmp.eq.s32.totalorder %s15, 1
    %p183 = scmp.ne.s32.totalorder %s178, %s180
    %p184 = scmp.eq.s32.totalorder %s15, 0
    %p185 = por %p183, %p184
    %p186 = scmp.ne.s32.totalorder %s178, %s180
    %p187 = scmp.eq.s32.totalorder %s20, 1
    %p188 = por %p186, %p187
    %p189 = scmp.ne.s32.totalorder %s180, %s181
    %p190 = scmp.eq.s32.totalorder %s20, 0
    %p191 = por %p189, %p190
    %p192 = scmp.ne.s32.totalorder %s180, %s181
    %p193 = scmp.eq.s32.totalorder %s21, 1
    %p194 = por %p192, %p193
    %p196 = scmp.ne.s32.totalorder %s181, %s195
    %p197 = scmp.eq.s32.totalorder %s21, 0
    %p198 = por %p196, %p197
    %s200 = sadd.s32 %s199, 1
    %p203 = scmp.eq.s32.totalorder %s15, 1
    %p204 = scmp.ne.s32.totalorder %s199, %s201
    %p205 = scmp.eq.s32.totalorder %s15, 0
    %p206 = por %p204, %p205
    %p207 = scmp.ne.s32.totalorder %s199, %s201
    %p208 = scmp.eq.s32.totalorder %s20, 1
    %p209 = por %p207, %p208
    %p210 = scmp.ne.s32.totalorder %s201, %s202
    %p211 = scmp.eq.s32.totalorder %s20, 0
    %p212 = por %p210, %p211
    %p213 = scmp.ne.s32.totalorder %s201, %s202
    %p214 = scmp.eq.s32.totalorder %s21, 1
    %p215 = por %p213, %p214
    %p217 = scmp.ne.s32.totalorder %s202, %s216
    %p218 = scmp.eq.s32.totalorder %s21, 0
    %p219 = por %p217, %p218
    %s221 = sadd.s32 %s220, 1
    %p224 = scmp.eq.s32.totalorder %s15, 1
    %p225 = scmp.ne.s32.totalorder %s220, %s222
    %p226 = scmp.eq.s32.totalorder %s15, 0
    %p227 = por %p225, %p226
    %p228 = scmp.ne.s32.totalorder %s220, %s222
    %p229 = scmp.eq.s32.totalorder %s20, 1
    %p230 = por %p228, %p229
    %p231 = scmp.ne.s32.totalorder %s222, %s223
    %p232 = scmp.eq.s32.totalorder %s20, 0
    %p233 = por %p231, %p232
    %p234 = scmp.ne.s32.totalorder %s222, %s223
    %p235 = scmp.eq.s32.totalorder %s21, 1
    %p236 = por %p234, %p235
    %p238 = scmp.ne.s32.totalorder %s223, %s237
    %p239 = scmp.eq.s32.totalorder %s21, 0
    %p240 = por %p238, %p239
    %s241 = ssub.s32 %s22, %s34
    %s242 = ssub.s32 %s23, %s30
    %s243 = sor.u32 %s241, %s242
    %p244 = scmp.eq.s32.totalorder %s243, 0
    %s246 = sadd.s32 %s245, 1
    %s247 = scalar_select %p244, %s245, %s246
    %p250 = pneg %p244
    %p251 = scmp.eq.s32.totalorder %s15, 1
    %p252 = por %p250, %p251
    %p253 = scmp.ne.s32.totalorder %s245, %s248
    %p254 = scmp.eq.s32.totalorder %s15, 0
    %p255 = por %p253, %p254
    %p256 = scmp.ne.s32.totalorder %s245, %s248
    %p257 = scmp.eq.s32.totalorder %s20, 1
    %p258 = por %p256, %p257
    %p259 = scmp.ne.s32.totalorder %s248, %s249
    %p260 = scmp.eq.s32.totalorder %s20, 0
    %p261 = por %p259, %p260
    %p262 = scmp.ne.s32.totalorder %s248, %s249
    %p263 = scmp.eq.s32.totalorder %s21, 1
    %p264 = por %p262, %p263
    %p266 = scmp.ne.s32.totalorder %s249, %s265
    %p267 = scmp.eq.s32.totalorder %s21, 0
    %p268 = por %p266, %p267
    %p269 = scmp.le.s32.totalorder 1, %s15
    %p270 = scmp.lt.s32.totalorder %s15, 3
    %p271 = pnand %p269, %p270
    %p272 = pneg %p271
    // Predicated region
    $region9: #{esa_forward.9} parent=5 // pred_check
      _
    $region10: #{esa_forward.9} parent=5 // pred_check_branch
      %274 = sbr.rel (%p271) target = $region12
    $region11: #{esa_forward.9} parent=5 // pred_region
      %s275 = ssub.s32 %s15, 1
      // Predicated region
      $region13: #{esa_forward.9} parent=11 // pred_check
        %p276 = pneg %p107
      $region14: #{esa_forward.9} parent=11 // pred_check_branch
        %278 = sbr.rel (%p276) target = $region16
      $region15: #{esa_forward.9} parent=11 // pred_region
        %s279 = smul.u32 8, %s25
        %p280 = scmp.lt.s32.totalorder %s279, 7
        %s281 = scalar_select %p280, %s279, 7
        %s282 = smul.addr %s281, 8
        %s283 = scalar_lea.vmem %s2, %s282
        %s284 = smul.u32 8, %s25
      $region16: #{esa_forward.9} parent=11 // pred_fallthru
        _
      // Predicated region
      $region17: #{esa_forward.9} parent=11 // pred_check
        %p285 = pneg %p128
      $region18: #{esa_forward.9} parent=11 // pred_check_branch
        %287 = sbr.rel (%p285) target = $region20
      $region19: #{esa_forward.9} parent=11 // pred_region
        _
      $region20: #{esa_forward.9} parent=11 // pred_fallthru
        _
      // Predicated region
      $region21: #{esa_forward.9} parent=11 // pred_check
        %p288 = pneg %p149
      $region22: #{esa_forward.9} parent=11 // pred_check_branch
        %290 = sbr.rel (%p288) target = $region24
      $region23: #{esa_forward.9} parent=11 // pred_region
        _
      $region24: #{esa_forward.9} parent=11 // pred_fallthru
        _
      // Predicated region
      $region25: #{esa_forward.9} parent=11 // pred_check
        %p291 = pneg %p170
      $region26: #{esa_forward.9} parent=11 // pred_check_branch
        %293 = sbr.rel (%p291) target = $region28
      $region27: #{esa_forward.9} parent=11 // pred_region
        _
      $region28: #{esa_forward.9} parent=11 // pred_fallthru
        _
      // Predicated region
      $region29: #{esa_forward.9} parent=11 // pred_check
        %p294 = pneg %p191
      $region30: #{esa_forward.9} parent=11 // pred_check_branch
        %296 = sbr.rel (%p294) target = $region32
      $region31: #{esa_forward.9} parent=11 // pred_region
        _
      $region32: #{esa_forward.9} parent=11 // pred_fallthru
        _
      // Predicated region
      $region33: #{esa_forward.9} parent=11 // pred_check
        %p297 = pneg %p212
      $region34: #{esa_forward.9} parent=11 // pred_check_branch
        %299 = sbr.rel (%p297) target = $region36
      $region35: #{esa_forward.9} parent=11 // pred_region
        _
      $region36: #{esa_forward.9} parent=11 // pred_fallthru
        _
      // Predicated region
      $region37: #{esa_forward.9} parent=11 // pred_check
        %p300 = pneg %p233
      $region38: #{esa_forward.9} parent=11 // pred_check_branch
        %302 = sbr.rel (%p300) target = $region40
      $region39: #{esa_forward.9} parent=11 // pred_region
        _
      $region40: #{esa_forward.9} parent=11 // pred_fallthru
        _
    $region12: #{esa_forward.9} parent=5 // pred_fallthru
      _
    %p303 = scmp.lt.s32.totalorder %s15, 2
    // Predicated region
    $region41: #{esa_forward.9} parent=5 // pred_check
      %p304 = pneg %p303
    $region42: #{esa_forward.9} parent=5 // pred_check_branch
      %306 = sbr.rel (%p304) target = $region44
    $region43: #{esa_forward.9} parent=5 // pred_region
      // Predicated region
      $region45: #{esa_forward.9} parent=43 // pred_check
        %p307 = pneg %p49
      $region46: #{esa_forward.9} parent=43 // pred_check_branch
        %309 = sbr.rel (%p307) target = $region48
      $region47: #{esa_forward.9} parent=43 // pred_region
        %s310 = smul.u32 8, %s23
        %p311 = scmp.lt.s32.totalorder %s22, 1
        %s312 = scalar_select %p311, %s22, 1
        %p313 = scmp.lt.s32.totalorder %s310, 7
        %s314 = scalar_select %p313, %s310, 7
        %s315 = smul.addr %s312, 8
        %s316 = sadd.s32 %s314, %s315
        %s317 = smul.addr %s316, 8
        %s318 = scalar_lea.vmem %s0, %s317
        %s319 = smul.u32 8, %s23
      $region48: #{esa_forward.9} parent=43 // pred_fallthru
        _
      // Predicated region
      $region49: #{esa_forward.9} parent=43 // pred_check
        %p320 = pneg %p75
      $region50: #{esa_forward.9} parent=43 // pred_check_branch
        %322 = sbr.rel (%p320) target = $region52
      $region51: #{esa_forward.9} parent=43 // pred_region
        %p323 = scmp.lt.s32.totalorder %s22, 1
        %s324 = scalar_select %p323, %s22, 1
        %s325 = smul.addr %s324, 4
        %s326 = scalar_lea.vmem %s1, %s325
      $region52: #{esa_forward.9} parent=43 // pred_fallthru
        _
    $region44: #{esa_forward.9} parent=5 // pred_fallthru
      _
    %p327 = scmp.le.s32.totalorder 1, %s15
    %p328 = scmp.lt.s32.totalorder %s15, 3
    %p329 = pnand %p327, %p328
    %p330 = pneg %p329
    // Predicated region
    $region53: #{esa_forward.9} parent=5 // pred_check
      _
    $region54: #{esa_forward.9} parent=5 // pred_check_branch
      %332 = sbr.rel (%p329) target = $region56
    $region55: #{esa_forward.9} parent=5 // pred_region
      %s333 = ssub.s32 %s15, 1
      %s334 = smul.u32 8, %s25
      %p335 = scmp.lt.s32.totalorder %s24, 1
      %s336 = scalar_select %p335, %s24, 1
      %p337 = scmp.lt.s32.totalorder %s334, 7
      %s338 = scalar_select %p337, %s334, 7
      %s339 = smul.addr %s336, 8
      %s340 = sadd.s32 %s338, %s339
      %s341 = smul.addr %s340, 8
      %s342 = scalar_lea.vmem %s0, %s341
      %p343 = pneg %p55
      %p344 = pneg %p52
      %p345 = scmp.lt.s32.totalorder %s24, 1
      %s346 = scalar_select %p345, %s24, 1
      %s347 = smul.addr %s346, 4
      %s348 = scalar_lea.vmem %s1, %s347
      %p349 = pneg %p81
      %p350 = pneg %p78
      %s351 = smul.u32 8, %s25
      %p352 = scmp.lt.s32.totalorder %s351, 7
      %s353 = scalar_select %p352, %s351, 7
      %s354 = smul.addr %s353, 8
      %s355 = scalar_lea.vmem %s2, %s354
      %p356 = pneg %p107
      %p357 = pneg %p104
      %p358 = pneg %p128
      %p359 = pneg %p125
      %p360 = pneg %p149
      %p361 = pneg %p146
      %p362 = pneg %p170
      %p363 = pneg %p167
      %p364 = pneg %p191
      %p365 = pneg %p188
      %p366 = pneg %p212
      %p367 = pneg %p209
      %p368 = pneg %p233
      %p369 = pneg %p230
      %p370 = pneg %p261
      %p371 = pneg %p258
      %s372 = smul.u32 8, %s25
      %p373 = scmp.lt.s32.totalorder %s24, 1
      %s374 = scalar_select %p373, %s24, 1
      %p375 = scmp.lt.s32.totalorder %s372, 7
      %s376 = scalar_select %p375, %s372, 7
      %s377 = smul.addr %s374, 8
      %s378 = sadd.s32 %s376, %s377
      %s379 = smul.addr %s378, 8
      %s380 = scalar_lea.vmem %s9, %s379
      %s381 = smul.u32 8, %s25
      %p382 = scmp.lt.s32.totalorder %s24, 1
      %s383 = scalar_select %p382, %s24, 1
      %p384 = scmp.lt.s32.totalorder %s381, 7
      %s385 = scalar_select %p384, %s381, 7
      %s386 = smul.addr %s383, 8
      %s387 = sadd.s32 %s385, %s386
      %s388 = smul.addr %s387, 8
      %s389 = scalar_lea.vmem %s0, %s388
      %s390 = smul.u32 8, %s25
      %p391 = scmp.lt.s32.totalorder %s24, 1
      %s392 = scalar_select %p391, %s24, 1
      %s393 = smul.addr %s392, 4
      %s394 = scalar_lea.vmem %s1, %s393
      %s395 = smul.u32 8, %s25
      %p396 = scmp.lt.s32.totalorder %s395, 7
      %s397 = scalar_select %p396, %s395, 7
      %s398 = smul.addr %s397, 8
      %s399 = scalar_lea.vmem %s2, %s398
      %s400 = smul.u32 8, %s25
      %s401 = smul.u32 8, %s25
      %p402 = scmp.lt.s32.totalorder %s24, 1
      %s403 = scalar_select %p402, %s24, 1
      %p404 = scmp.lt.s32.totalorder %s401, 7
      %s405 = scalar_select %p404, %s401, 7
      %s406 = smul.addr %s403, 8
      %s407 = sadd.s32 %s405, %s406
      %s408 = smul.addr %s407, 8
      %s409 = scalar_lea.vmem %s9, %s408
      %s410 = smul.u32 8, %s25
      %v411 = vld [vmem:[%s389] sm:$0xff]
      %v412 = vld [vmem:[%s389 + $0x8] sm:$0xff]
      %v413 = vld [vmem:[%s389 + $0x10] sm:$0xff]
      %v414 = vld [vmem:[%s389 + $0x18] sm:$0xff]
      %v415 = vld [vmem:[%s389 + $0x20] sm:$0xff]
      %v416 = vld [vmem:[%s389 + $0x28] sm:$0xff]
      %v417 = vld [vmem:[%s389 + $0x30] sm:$0xff]
      %v418 = vld [vmem:[%s389 + $0x38] sm:$0xff]
      %v419 = vld [vmem:[%s3] sm:$0xf]
      %v420 = vld [vmem:[%s4] sm:$0xf]
      %422 = vset.pattern.permute.xlu0 0
      %423 = vperm.xlu0 %422, %v420
      %v424 = vpop.permute.xlu0 %423
      %vm426 = vcmask 64512
      %v428 = vsel %vm426, %v419, 0
      %430 = vmatprep.subr.mxu0 %v412
      %431 = vmatpush1.msra.mxu0 %v411
      %432 = vmatprep.subr.mxu0 0.0
      %433 = vmatpush1.msra.mxu0 0.0
      %434 = vmatprep.subr.mxu0 0.0
      %435 = vmatpush1.msra.mxu0 0.0
      %436 = vmatprep.subr.mxu0 0.0
      %437 = vmatpush1.msra.mxu0 0.0
      %438 = vmatprep.subr.mxu0 0.0
      %439 = vmatpush1.msra.mxu0 0.0
      %440 = vmatprep.subr.mxu0 0.0
      %441 = vmatpush1.msra.mxu0 0.0
      %442 = vmatprep.subr.mxu0 0.0
      %443 = vmatpush1.msra.mxu0 0.0
      %444 = vmatprep.subr.mxu0 0.0
      %445 = vmatpush1.msra.mxu0 0.0
      %446 = vmatprep.subr.mxu0 0.0
      %447 = vmatpush1.msra.mxu0 0.0
      %448 = vmatprep.subr.mxu0 0.0
      %449 = vmatpush1.msra.mxu0 0.0
      %450 = vmatprep.subr.mxu0 0.0
      %451 = vmatpush1.msra.mxu0 0.0
      %452 = vmatprep.subr.mxu0 0.0
      %453 = vmatpush1.msra.mxu0 0.0
      %454 = vmatprep.subr.mxu0 0.0
      %455 = vmatpush1.msra.mxu0 0.0
      %456 = vmatprep.subr.mxu0 0.0
      %457 = vmatpush1.msra.mxu0 0.0
      %458 = vmatprep.subr.mxu0 0.0
      %459 = vmatpush1.msra.mxu0 0.0
      %460 = vmatprep.subr.mxu0 0.0
      %461 = vmatpush1.msra.mxu0 0.0
      %462 = vmatprep.subr.mxu0 0.0
      %463 = vmatpush1.msra.mxu0 0.0
      %464 = vmatprep.subr.mxu0 0.0
      %465 = vmatpush1.msra.mxu0 0.0
      %466 = vmatprep.subr.mxu0 0.0
      %467 = vmatpush1.msra.mxu0 0.0
      %468 = vmatprep.subr.mxu0 0.0
      %469 = vmatpush1.msra.mxu0 0.0
      %470 = vmatprep.subr.mxu0 0.0
      %471 = vmatpush1.msra.mxu0 0.0
      %472 = vmatprep.subr.mxu0 0.0
      %473 = vmatpush1.msra.mxu0 0.0
      %474 = vmatprep.subr.mxu0 0.0
      %475 = vmatpush1.msra.mxu0 0.0
      %476 = vmatprep.subr.mxu0 0.0
      %477 = vmatpush1.msra.mxu0 0.0
      %478 = vmatprep.subr.mxu0 0.0
      %479 = vmatpush1.msra.mxu0 0.0
      %480 = vmatprep.subr.mxu0 0.0
      %481 = vmatpush1.msra.mxu0 0.0
      %482 = vmatprep.subr.mxu0 0.0
      %483 = vmatpush1.msra.mxu0 0.0
      %484 = vmatprep.subr.mxu0 0.0
      %485 = vmatpush1.msra.mxu0 0.0
      %486 = vmatprep.subr.mxu0 0.0
      %487 = vmatpush1.msra.mxu0 0.0
      %488 = vmatprep.subr.mxu0 0.0
      %489 = vmatpush1.msra.mxu0 0.0
      %490 = vmatprep.subr.mxu0 0.0
      %491 = vmatpush1.msra.mxu0 0.0
      %492 = vmatprep.subr.mxu0 0.0
      %493 = vmatpush1.msra.mxu0 0.0
      %494 = vmatprep.mubr.f32.mxu0 0.0
      %495 = vmatmul.mubr.f32.gmra.mrb[0].mxu0 %v428
      %v496 = vpop.f32.mrb[0].mxu0
      %v497 = vadd.f32 %v424, %v496
      %v498 = vpop.f32.mrb[0].mxu0
      %v499 = vadd.f32 %v424, %v498
      %500 = vdwg.mxu0
      %501 = vmatprep.subr.mxu0 %v414
      %502 = vmatpush1.msra.mxu0 %v413
      %503 = vmatprep.subr.mxu0 0.0
      %504 = vmatpush1.msra.mxu0 0.0
      %505 = vmatprep.subr.mxu0 0.0
      %506 = vmatpush1.msra.mxu0 0.0
      %507 = vmatprep.subr.mxu0 0.0
      %508 = vmatpush1.msra.mxu0 0.0
      %509 = vmatprep.subr.mxu0 0.0
      %510 = vmatpush1.msra.mxu0 0.0
      %511 = vmatprep.subr.mxu0 0.0
      %512 = vmatpush1.msra.mxu0 0.0
      %513 = vmatprep.subr.mxu0 0.0
      %514 = vmatpush1.msra.mxu0 0.0
      %515 = vmatprep.subr.mxu0 0.0
      %516 = vmatpush1.msra.mxu0 0.0
      %517 = vmatprep.subr.mxu0 0.0
      %518 = vmatpush1.msra.mxu0 0.0
      %519 = vmatprep.subr.mxu0 0.0
      %520 = vmatpush1.msra.mxu0 0.0
      %521 = vmatprep.subr.mxu0 0.0
      %522 = vmatpush1.msra.mxu0 0.0
      %523 = vmatprep.subr.mxu0 0.0
      %524 = vmatpush1.msra.mxu0 0.0
      %525 = vmatprep.subr.mxu0 0.0
      %526 = vmatpush1.msra.mxu0 0.0
      %527 = vmatprep.subr.mxu0 0.0
      %528 = vmatpush1.msra.mxu0 0.0
      %529 = vmatprep.subr.mxu0 0.0
      %530 = vmatpush1.msra.mxu0 0.0
      %531 = vmatprep.subr.mxu0 0.0
      %532 = vmatpush1.msra.mxu0 0.0
      %533 = vmatprep.subr.mxu0 0.0
      %534 = vmatpush1.msra.mxu0 0.0
      %535 = vmatprep.subr.mxu0 0.0
      %536 = vmatpush1.msra.mxu0 0.0
      %537 = vmatprep.subr.mxu0 0.0
      %538 = vmatpush1.msra.mxu0 0.0
      %539 = vmatprep.subr.mxu0 0.0
      %540 = vmatpush1.msra.mxu0 0.0
      %541 = vmatprep.subr.mxu0 0.0
      %542 = vmatpush1.msra.mxu0 0.0
      %543 = vmatprep.subr.mxu0 0.0
      %544 = vmatpush1.msra.mxu0 0.0
      %545 = vmatprep.subr.mxu0 0.0
      %546 = vmatpush1.msra.mxu0 0.0
      %547 = vmatprep.subr.mxu0 0.0
      %548 = vmatpush1.msra.mxu0 0.0
      %549 = vmatprep.subr.mxu0 0.0
      %550 = vmatpush1.msra.mxu0 0.0
      %551 = vmatprep.subr.mxu0 0.0
      %552 = vmatpush1.msra.mxu0 0.0
      %553 = vmatprep.subr.mxu0 0.0
      %554 = vmatpush1.msra.mxu0 0.0
      %555 = vmatprep.subr.mxu0 0.0
      %556 = vmatpush1.msra.mxu0 0.0
      %557 = vmatprep.subr.mxu0 0.0
      %558 = vmatpush1.msra.mxu0 0.0
      %559 = vmatprep.subr.mxu0 0.0
      %560 = vmatpush1.msra.mxu0 0.0
      %561 = vmatprep.subr.mxu0 0.0
      %562 = vmatpush1.msra.mxu0 0.0
      %563 = vmatprep.subr.mxu0 0.0
      %564 = vmatpush1.msra.mxu0 0.0
      %565 = vmatprep.mubr.f32.mxu0 0.0
      %566 = vmatmul.mubr.f32.gmra.mrb[0].mxu0 %v428
      %v567 = vpop.f32.mrb[0].mxu0
      %v568 = vadd.f32 %v424, %v567
      %v569 = vpop.f32.mrb[0].mxu0
      %v570 = vadd.f32 %v424, %v569
      %571 = vdwg.mxu0
      %572 = vmatprep.subr.mxu0 %v416
      %573 = vmatpush1.msra.mxu0 %v415
      %574 = vmatprep.subr.mxu0 0.0
      %575 = vmatpush1.msra.mxu0 0.0
      %576 = vmatprep.subr.mxu0 0.0
      %577 = vmatpush1.msra.mxu0 0.0
      %578 = vmatprep.subr.mxu0 0.0
      %579 = vmatpush1.msra.mxu0 0.0
      %580 = vmatprep.subr.mxu0 0.0
      %581 = vmatpush1.msra.mxu0 0.0
      %582 = vmatprep.subr.mxu0 0.0
      %583 = vmatpush1.msra.mxu0 0.0
      %584 = vmatprep.subr.mxu0 0.0
      %585 = vmatpush1.msra.mxu0 0.0
      %586 = vmatprep.subr.mxu0 0.0
      %587 = vmatpush1.msra.mxu0 0.0
      %588 = vmatprep.subr.mxu0 0.0
      %589 = vmatpush1.msra.mxu0 0.0
      %590 = vmatprep.subr.mxu0 0.0
      %591 = vmatpush1.msra.mxu0 0.0
      %592 = vmatprep.subr.mxu0 0.0
      %593 = vmatpush1.msra.mxu0 0.0
      %594 = vmatprep.subr.mxu0 0.0
      %595 = vmatpush1.msra.mxu0 0.0
      %596 = vmatprep.subr.mxu0 0.0
      %597 = vmatpush1.msra.mxu0 0.0
      %598 = vmatprep.subr.mxu0 0.0
      %599 = vmatpush1.msra.mxu0 0.0
      %600 = vmatprep.subr.mxu0 0.0
      %601 = vmatpush1.msra.mxu0 0.0
      %602 = vmatprep.subr.mxu0 0.0
      %603 = vmatpush1.msra.mxu0 0.0
      %604 = vmatprep.subr.mxu0 0.0
      %605 = vmatpush1.msra.mxu0 0.0
      %606 = vmatprep.subr.mxu0 0.0
      %607 = vmatpush1.msra.mxu0 0.0
      %608 = vmatprep.subr.mxu0 0.0
      %609 = vmatpush1.msra.mxu0 0.0
      %610 = vmatprep.subr.mxu0 0.0
      %611 = vmatpush1.msra.mxu0 0.0
      %612 = vmatprep.subr.mxu0 0.0
      %613 = vmatpush1.msra.mxu0 0.0
      %614 = vmatprep.subr.mxu0 0.0
      %615 = vmatpush1.msra.mxu0 0.0
      %616 = vmatprep.subr.mxu0 0.0
      %617 = vmatpush1.msra.mxu0 0.0
      %618 = vmatprep.subr.mxu0 0.0
      %619 = vmatpush1.msra.mxu0 0.0
      %620 = vmatprep.subr.mxu0 0.0
      %621 = vmatpush1.msra.mxu0 0.0
      %622 = vmatprep.subr.mxu0 0.0
      %623 = vmatpush1.msra.mxu0 0.0
      %624 = vmatprep.subr.mxu0 0.0
      %625 = vmatpush1.msra.mxu0 0.0
      %626 = vmatprep.subr.mxu0 0.0
      %627 = vmatpush1.msra.mxu0 0.0
      %628 = vmatprep.subr.mxu0 0.0
      %629 = vmatpush1.msra.mxu0 0.0
      %630 = vmatprep.subr.mxu0 0.0
      %631 = vmatpush1.msra.mxu0 0.0
      %632 = vmatprep.subr.mxu0 0.0
      %633 = vmatpush1.msra.mxu0 0.0
      %634 = vmatprep.subr.mxu0 0.0
      %635 = vmatpush1.msra.mxu0 0.0
      %636 = vmatprep.mubr.f32.mxu0 0.0
      %637 = vmatmul.mubr.f32.gmra.mrb[0].mxu0 %v428
      %v638 = vpop.f32.mrb[0].mxu0
      %v639 = vadd.f32 %v424, %v638
      %v640 = vpop.f32.mrb[0].mxu0
      %v641 = vadd.f32 %v424, %v640
      %642 = vdwg.mxu0
      %643 = vmatprep.subr.mxu0 %v418
      %644 = vmatpush1.msra.mxu0 %v417
      %645 = vmatprep.subr.mxu0 0.0
      %646 = vmatpush1.msra.mxu0 0.0
      %647 = vmatprep.subr.mxu0 0.0
      %648 = vmatpush1.msra.mxu0 0.0
      %649 = vmatprep.subr.mxu0 0.0
      %650 = vmatpush1.msra.mxu0 0.0
      %651 = vmatprep.subr.mxu0 0.0
      %652 = vmatpush1.msra.mxu0 0.0
      %653 = vmatprep.subr.mxu0 0.0
      %654 = vmatpush1.msra.mxu0 0.0
      %655 = vmatprep.subr.mxu0 0.0
      %656 = vmatpush1.msra.mxu0 0.0
      %657 = vmatprep.subr.mxu0 0.0
      %658 = vmatpush1.msra.mxu0 0.0
      %659 = vmatprep.subr.mxu0 0.0
      %660 = vmatpush1.msra.mxu0 0.0
      %661 = vmatprep.subr.mxu0 0.0
      %662 = vmatpush1.msra.mxu0 0.0
      %663 = vmatprep.subr.mxu0 0.0
      %664 = vmatpush1.msra.mxu0 0.0
      %665 = vmatprep.subr.mxu0 0.0
      %666 = vmatpush1.msra.mxu0 0.0
      %667 = vmatprep.subr.mxu0 0.0
      %668 = vmatpush1.msra.mxu0 0.0
      %669 = vmatprep.subr.mxu0 0.0
      %670 = vmatpush1.msra.mxu0 0.0
      %671 = vmatprep.subr.mxu0 0.0
      %672 = vmatpush1.msra.mxu0 0.0
      %673 = vmatprep.subr.mxu0 0.0
      %674 = vmatpush1.msra.mxu0 0.0
      %675 = vmatprep.subr.mxu0 0.0
      %676 = vmatpush1.msra.mxu0 0.0
      %677 = vmatprep.subr.mxu0 0.0
      %678 = vmatpush1.msra.mxu0 0.0
      %679 = vmatprep.subr.mxu0 0.0
      %680 = vmatpush1.msra.mxu0 0.0
      %681 = vmatprep.subr.mxu0 0.0
      %682 = vmatpush1.msra.mxu0 0.0
      %683 = vmatprep.subr.mxu0 0.0
      %684 = vmatpush1.msra.mxu0 0.0
      %685 = vmatprep.subr.mxu0 0.0
      %686 = vmatpush1.msra.mxu0 0.0
      %687 = vmatprep.subr.mxu0 0.0
      %688 = vmatpush1.msra.mxu0 0.0
      %689 = vmatprep.subr.mxu0 0.0
      %690 = vmatpush1.msra.mxu0 0.0
      %691 = vmatprep.subr.mxu0 0.0
      %692 = vmatpush1.msra.mxu0 0.0
      %693 = vmatprep.subr.mxu0 0.0
      %694 = vmatpush1.msra.mxu0 0.0
      %695 = vmatprep.subr.mxu0 0.0
      %696 = vmatpush1.msra.mxu0 0.0
      %697 = vmatprep.subr.mxu0 0.0
      %698 = vmatpush1.msra.mxu0 0.0
      %699 = vmatprep.subr.mxu0 0.0
      %700 = vmatpush1.msra.mxu0 0.0
      %701 = vmatprep.subr.mxu0 0.0
      %702 = vmatpush1.msra.mxu0 0.0
      %703 = vmatprep.subr.mxu0 0.0
      %704 = vmatpush1.msra.mxu0 0.0
      %705 = vmatprep.subr.mxu0 0.0
      %706 = vmatpush1.msra.mxu0 0.0
      %707 = vmatprep.mubr.f32.mxu0 0.0
      %708 = vmatmul.mubr.f32.gmra.mrb[0].mxu0 %v428
      %v709 = vpop.f32.mrb[0].mxu0
      %v710 = vadd.f32 %v424, %v709
      %v711 = vpop.f32.mrb[0].mxu0
      %v712 = vadd.f32 %v424, %v711
      %713 = vdwg.mxu0
      %v714 = vld [vmem:[%s5] sm:$0xf]
      %v715 = vld [vmem:[%s6] sm:$0xf]
      %717 = vset.pattern.permute.xlu0 0
      %718 = vperm.xlu0 %717, %v715
      %v719 = vpop.permute.xlu0 %718
      %vm721 = vcmask 31744
      %v723 = vsel %vm721, %v714, 0
      %vm725 = vcmask 1043456
      %v727 = vsel %vm725, %v497, 0
      %v730 = vsel %vm725, %v499, 0
      %v733 = vsel %vm725, %v568, 0
      %v736 = vsel %vm725, %v570, 0
      %v739 = vsel %vm725, %v639, 0
      %v742 = vsel %vm725, %v641, 0
      %v745 = vsel %vm725, %v710, 0
      %v748 = vsel %vm725, %v712, 0
      %750 = vmatprep.subr.mxu0 %v730
      %751 = vmatpush1.msra.mxu0 %v727
      %752 = vmatprep.subr.mxu0 0.0
      %753 = vmatpush1.msra.mxu0 0.0
      %754 = vmatprep.subr.mxu0 0.0
      %755 = vmatpush1.msra.mxu0 0.0
      %756 = vmatprep.subr.mxu0 0.0
      %757 = vmatpush1.msra.mxu0 0.0
      %758 = vmatprep.subr.mxu0 0.0
      %759 = vmatpush1.msra.mxu0 0.0
      %760 = vmatprep.subr.mxu0 0.0
      %761 = vmatpush1.msra.mxu0 0.0
      %762 = vmatprep.subr.mxu0 0.0
      %763 = vmatpush1.msra.mxu0 0.0
      %764 = vmatprep.subr.mxu0 0.0
      %765 = vmatpush1.msra.mxu0 0.0
      %766 = vmatprep.subr.mxu0 0.0
      %767 = vmatpush1.msra.mxu0 0.0
      %768 = vmatprep.subr.mxu0 0.0
      %769 = vmatpush1.msra.mxu0 0.0
      %770 = vmatprep.subr.mxu0 0.0
      %771 = vmatpush1.msra.mxu0 0.0
      %772 = vmatprep.subr.mxu0 0.0
      %773 = vmatpush1.msra.mxu0 0.0
      %774 = vmatprep.subr.mxu0 0.0
      %775 = vmatpush1.msra.mxu0 0.0
      %776 = vmatprep.subr.mxu0 0.0
      %777 = vmatpush1.msra.mxu0 0.0
      %778 = vmatprep.subr.mxu0 0.0
      %779 = vmatpush1.msra.mxu0 0.0
      %780 = vmatprep.subr.mxu0 0.0
      %781 = vmatpush1.msra.mxu0 0.0
      %782 = vmatprep.subr.mxu0 0.0
      %783 = vmatpush1.msra.mxu0 0.0
      %784 = vmatprep.subr.mxu0 0.0
      %785 = vmatpush1.msra.mxu0 0.0
      %786 = vmatprep.subr.mxu0 0.0
      %787 = vmatpush1.msra.mxu0 0.0
      %788 = vmatprep.subr.mxu0 0.0
      %789 = vmatpush1.msra.mxu0 0.0
      %790 = vmatprep.subr.mxu0 0.0
      %791 = vmatpush1.msra.mxu0 0.0
      %792 = vmatprep.subr.mxu0 0.0
      %793 = vmatpush1.msra.mxu0 0.0
      %794 = vmatprep.subr.mxu0 0.0
      %795 = vmatpush1.msra.mxu0 0.0
      %796 = vmatprep.subr.mxu0 0.0
      %797 = vmatpush1.msra.mxu0 0.0
      %798 = vmatprep.subr.mxu0 0.0
      %799 = vmatpush1.msra.mxu0 0.0
      %800 = vmatprep.subr.mxu0 0.0
      %801 = vmatpush1.msra.mxu0 0.0
      %802 = vmatprep.subr.mxu0 0.0
      %803 = vmatpush1.msra.mxu0 0.0
      %804 = vmatprep.subr.mxu0 0.0
      %805 = vmatpush1.msra.mxu0 0.0
      %806 = vmatprep.subr.mxu0 0.0
      %807 = vmatpush1.msra.mxu0 0.0
      %808 = vmatprep.subr.mxu0 0.0
      %809 = vmatpush1.msra.mxu0 0.0
      %810 = vmatprep.subr.mxu0 0.0
      %811 = vmatpush1.msra.mxu0 0.0
      %812 = vmatprep.subr.mxu0 0.0
      %813 = vmatpush1.msra.mxu0 0.0
      %814 = vmatprep.mubr.f32.mxu0 0.0
      %815 = vmatmul.mubr.f32.gmra.mrb[0].mxu0 %v723
      %v816 = vpop.f32.mrb[0].mxu0
      %v817 = vadd.f32 %v719, %v816
      %v818 = vpop.f32.mrb[0].mxu0
      %v819 = vadd.f32 %v719, %v818
      %820 = vdwg.mxu0
      %821 = vmatprep.subr.mxu0 %v736
      %822 = vmatpush1.msra.mxu0 %v733
      %823 = vmatprep.subr.mxu0 0.0
      %824 = vmatpush1.msra.mxu0 0.0
      %825 = vmatprep.subr.mxu0 0.0
      %826 = vmatpush1.msra.mxu0 0.0
      %827 = vmatprep.subr.mxu0 0.0
      %828 = vmatpush1.msra.mxu0 0.0
      %829 = vmatprep.subr.mxu0 0.0
      %830 = vmatpush1.msra.mxu0 0.0
      %831 = vmatprep.subr.mxu0 0.0
      %832 = vmatpush1.msra.mxu0 0.0
      %833 = vmatprep.subr.mxu0 0.0
      %834 = vmatpush1.msra.mxu0 0.0
      %835 = vmatprep.subr.mxu0 0.0
      %836 = vmatpush1.msra.mxu0 0.0
      %837 = vmatprep.subr.mxu0 0.0
      %838 = vmatpush1.msra.mxu0 0.0
      %839 = vmatprep.subr.mxu0 0.0
      %840 = vmatpush1.msra.mxu0 0.0
      %841 = vmatprep.subr.mxu0 0.0
      %842 = vmatpush1.msra.mxu0 0.0
      %843 = vmatprep.subr.mxu0 0.0
      %844 = vmatpush1.msra.mxu0 0.0
      %845 = vmatprep.subr.mxu0 0.0
      %846 = vmatpush1.msra.mxu0 0.0
      %847 = vmatprep.subr.mxu0 0.0
      %848 = vmatpush1.msra.mxu0 0.0
      %849 = vmatprep.subr.mxu0 0.0
      %850 = vmatpush1.msra.mxu0 0.0
      %851 = vmatprep.subr.mxu0 0.0
      %852 = vmatpush1.msra.mxu0 0.0
      %853 = vmatprep.subr.mxu0 0.0
      %854 = vmatpush1.msra.mxu0 0.0
      %855 = vmatprep.subr.mxu0 0.0
      %856 = vmatpush1.msra.mxu0 0.0
      %857 = vmatprep.subr.mxu0 0.0
      %858 = vmatpush1.msra.mxu0 0.0
      %859 = vmatprep.subr.mxu0 0.0
      %860 = vmatpush1.msra.mxu0 0.0
      %861 = vmatprep.subr.mxu0 0.0
      %862 = vmatpush1.msra.mxu0 0.0
      %863 = vmatprep.subr.mxu0 0.0
      %864 = vmatpush1.msra.mxu0 0.0
      %865 = vmatprep.subr.mxu0 0.0
      %866 = vmatpush1.msra.mxu0 0.0
      %867 = vmatprep.subr.mxu0 0.0
      %868 = vmatpush1.msra.mxu0 0.0
      %869 = vmatprep.subr.mxu0 0.0
      %870 = vmatpush1.msra.mxu0 0.0
      %871 = vmatprep.subr.mxu0 0.0
      %872 = vmatpush1.msra.mxu0 0.0
      %873 = vmatprep.subr.mxu0 0.0
      %874 = vmatpush1.msra.mxu0 0.0
      %875 = vmatprep.subr.mxu0 0.0
      %876 = vmatpush1.msra.mxu0 0.0
      %877 = vmatprep.subr.mxu0 0.0
      %878 = vmatpush1.msra.mxu0 0.0
      %879 = vmatprep.subr.mxu0 0.0
      %880 = vmatpush1.msra.mxu0 0.0
      %881 = vmatprep.subr.mxu0 0.0
      %882 = vmatpush1.msra.mxu0 0.0
      %883 = vmatprep.subr.mxu0 0.0
      %884 = vmatpush1.msra.mxu0 0.0
      %885 = vmatprep.mubr.f32.mxu0 0.0
      %886 = vmatmul.mubr.f32.gmra.mrb[0].mxu0 %v723
      %v887 = vpop.f32.mrb[0].mxu0
      %v888 = vadd.f32 %v719, %v887
      %v889 = vpop.f32.mrb[0].mxu0
      %v890 = vadd.f32 %v719, %v889
      %891 = vdwg.mxu0
      %892 = vmatprep.subr.mxu0 %v742
      %893 = vmatpush1.msra.mxu0 %v739
      %894 = vmatprep.subr.mxu0 0.0
      %895 = vmatpush1.msra.mxu0 0.0
      %896 = vmatprep.subr.mxu0 0.0
      %897 = vmatpush1.msra.mxu0 0.0
      %898 = vmatprep.subr.mxu0 0.0
      %899 = vmatpush1.msra.mxu0 0.0
      %900 = vmatprep.subr.mxu0 0.0
      %901 = vmatpush1.msra.mxu0 0.0
      %902 = vmatprep.subr.mxu0 0.0
      %903 = vmatpush1.msra.mxu0 0.0
      %904 = vmatprep.subr.mxu0 0.0
      %905 = vmatpush1.msra.mxu0 0.0
      %906 = vmatprep.subr.mxu0 0.0
      %907 = vmatpush1.msra.mxu0 0.0
      %908 = vmatprep.subr.mxu0 0.0
      %909 = vmatpush1.msra.mxu0 0.0
      %910 = vmatprep.subr.mxu0 0.0
      %911 = vmatpush1.msra.mxu0 0.0
      %912 = vmatprep.subr.mxu0 0.0
      %913 = vmatpush1.msra.mxu0 0.0
      %914 = vmatprep.subr.mxu0 0.0
      %915 = vmatpush1.msra.mxu0 0.0
      %916 = vmatprep.subr.mxu0 0.0
      %917 = vmatpush1.msra.mxu0 0.0
      %918 = vmatprep.subr.mxu0 0.0
      %919 = vmatpush1.msra.mxu0 0.0
      %920 = vmatprep.subr.mxu0 0.0
      %921 = vmatpush1.msra.mxu0 0.0
      %922 = vmatprep.subr.mxu0 0.0
      %923 = vmatpush1.msra.mxu0 0.0
      %924 = vmatprep.subr.mxu0 0.0
      %925 = vmatpush1.msra.mxu0 0.0
      %926 = vmatprep.subr.mxu0 0.0
      %927 = vmatpush1.msra.mxu0 0.0
      %928 = vmatprep.subr.mxu0 0.0
      %929 = vmatpush1.msra.mxu0 0.0
      %930 = vmatprep.subr.mxu0 0.0
      %931 = vmatpush1.msra.mxu0 0.0
      %932 = vmatprep.subr.mxu0 0.0
      %933 = vmatpush1.msra.mxu0 0.0
      %934 = vmatprep.subr.mxu0 0.0
      %935 = vmatpush1.msra.mxu0 0.0
      %936 = vmatprep.subr.mxu0 0.0
      %937 = vmatpush1.msra.mxu0 0.0
      %938 = vmatprep.subr.mxu0 0.0
      %939 = vmatpush1.msra.mxu0 0.0
      %940 = vmatprep.subr.mxu0 0.0
      %941 = vmatpush1.msra.mxu0 0.0
      %942 = vmatprep.subr.mxu0 0.0
      %943 = vmatpush1.msra.mxu0 0.0
      %944 = vmatprep.subr.mxu0 0.0
      %945 = vmatpush1.msra.mxu0 0.0
      %946 = vmatprep.subr.mxu0 0.0
      %947 = vmatpush1.msra.mxu0 0.0
      %948 = vmatprep.subr.mxu0 0.0
      %949 = vmatpush1.msra.mxu0 0.0
      %950 = vmatprep.subr.mxu0 0.0
      %951 = vmatpush1.msra.mxu0 0.0
      %952 = vmatprep.subr.mxu0 0.0
      %953 = vmatpush1.msra.mxu0 0.0
      %954 = vmatprep.subr.mxu0 0.0
      %955 = vmatpush1.msra.mxu0 0.0
      %956 = vmatprep.mubr.f32.mxu0 0.0
      %957 = vmatmul.mubr.f32.gmra.mrb[0].mxu0 %v723
      %v958 = vpop.f32.mrb[0].mxu0
      %v959 = vadd.f32 %v719, %v958
      %v960 = vpop.f32.mrb[0].mxu0
      %v961 = vadd.f32 %v719, %v960
      %962 = vdwg.mxu0
      %963 = vmatprep.subr.mxu0 %v748
      %964 = vmatpush1.msra.mxu0 %v745
      %965 = vmatprep.subr.mxu0 0.0
      %966 = vmatpush1.msra.mxu0 0.0
      %967 = vmatprep.subr.mxu0 0.0
      %968 = vmatpush1.msra.mxu0 0.0
      %969 = vmatprep.subr.mxu0 0.0
      %970 = vmatpush1.msra.mxu0 0.0
      %971 = vmatprep.subr.mxu0 0.0
      %972 = vmatpush1.msra.mxu0 0.0
      %973 = vmatprep.subr.mxu0 0.0
      %974 = vmatpush1.msra.mxu0 0.0
      %975 = vmatprep.subr.mxu0 0.0
      %976 = vmatpush1.msra.mxu0 0.0
      %977 = vmatprep.subr.mxu0 0.0
      %978 = vmatpush1.msra.mxu0 0.0
      %979 = vmatprep.subr.mxu0 0.0
      %980 = vmatpush1.msra.mxu0 0.0
      %981 = vmatprep.subr.mxu0 0.0
      %982 = vmatpush1.msra.mxu0 0.0
      %983 = vmatprep.subr.mxu0 0.0
      %984 = vmatpush1.msra.mxu0 0.0
      %985 = vmatprep.subr.mxu0 0.0
      %986 = vmatpush1.msra.mxu0 0.0
      %987 = vmatprep.subr.mxu0 0.0
      %988 = vmatpush1.msra.mxu0 0.0
      %989 = vmatprep.subr.mxu0 0.0
      %990 = vmatpush1.msra.mxu0 0.0
      %991 = vmatprep.subr.mxu0 0.0
      %992 = vmatpush1.msra.mxu0 0.0
      %993 = vmatprep.subr.mxu0 0.0
      %994 = vmatpush1.msra.mxu0 0.0
      %995 = vmatprep.subr.mxu0 0.0
      %996 = vmatpush1.msra.mxu0 0.0
      %997 = vmatprep.subr.mxu0 0.0
      %998 = vmatpush1.msra.mxu0 0.0
      %999 = vmatprep.subr.mxu0 0.0
      %1000 = vmatpush1.msra.mxu0 0.0
      %1001 = vmatprep.subr.mxu0 0.0
      %1002 = vmatpush1.msra.mxu0 0.0
      %1003 = vmatprep.subr.mxu0 0.0
      %1004 = vmatpush1.msra.mxu0 0.0
      %1005 = vmatprep.subr.mxu0 0.0
      %1006 = vmatpush1.msra.mxu0 0.0
      %1007 = vmatprep.subr.mxu0 0.0
      %1008 = vmatpush1.msra.mxu0 0.0
      %1009 = vmatprep.subr.mxu0 0.0
      %1010 = vmatpush1.msra.mxu0 0.0
      %1011 = vmatprep.subr.mxu0 0.0
      %1012 = vmatpush1.msra.mxu0 0.0
      %1013 = vmatprep.subr.mxu0 0.0
      %1014 = vmatpush1.msra.mxu0 0.0
      %1015 = vmatprep.subr.mxu0 0.0
      %1016 = vmatpush1.msra.mxu0 0.0
      %1017 = vmatprep.subr.mxu0 0.0
      %1018 = vmatpush1.msra.mxu0 0.0
      %1019 = vmatprep.subr.mxu0 0.0
      %1020 = vmatpush1.msra.mxu0 0.0
      %1021 = vmatprep.subr.mxu0 0.0
      %1022 = vmatpush1.msra.mxu0 0.0
      %1023 = vmatprep.subr.mxu0 0.0
      %1024 = vmatpush1.msra.mxu0 0.0
      %1025 = vmatprep.subr.mxu0 0.0
      %1026 = vmatpush1.msra.mxu0 0.0
      %1027 = vmatprep.mubr.f32.mxu0 0.0
      %1028 = vmatmul.mubr.f32.gmra.mrb[0].mxu0 %v723
      %v1029 = vpop.f32.mrb[0].mxu0
      %v1030 = vadd.f32 %v719, %v1029
      %v1031 = vpop.f32.mrb[0].mxu0
      %v1032 = vadd.f32 %v719, %v1031
      %1033 = vdwg.mxu0
      %v1034 = vld [vmem:[%s394] sm:$0xf]
      %v1035 = vld [vmem:[%s399] sm:$0xff]
      %v1036 = vld [vmem:[%s399 + $0x8] sm:$0xff]
      %v1037 = vld [vmem:[%s399 + $0x10] sm:$0xff]
      %v1038 = vld [vmem:[%s399 + $0x18] sm:$0xff]
      %v1039 = vld [vmem:[%s399 + $0x20] sm:$0xff]
      %v1040 = vld [vmem:[%s399 + $0x28] sm:$0xff]
      %v1041 = vld [vmem:[%s399 + $0x30] sm:$0xff]
      %v1042 = vld [vmem:[%s399 + $0x38] sm:$0xff]
      %v1043 = vld [vmem:[%s399 + $0x40] sm:$0x1]
      %v1044 = vld [vmem:[%s399 + $0x48] sm:$0x1]
      %v1045 = vld [vmem:[%s399 + $0x50] sm:$0x1]
      %v1046 = vld [vmem:[%s399 + $0x58] sm:$0x1]
      %v1047 = vld [vmem:[%s399 + $0x60] sm:$0x1]
      %v1048 = vld [vmem:[%s399 + $0x68] sm:$0x1]
      %v1049 = vld [vmem:[%s399 + $0x70] sm:$0x1]
      %v1050 = vld [vmem:[%s399 + $0x78] sm:$0x1]
      %v1051 = vld [vmem:[%s7] sm:$0xff]
      %vm1052 = vcmask 72704
      %v1054 = vsel %vm1052, %v1034, 0
      %vm1056 = vcmask 1040384
      %v1058 = vsel %vm1056, %v1043, 0
      %v1061 = vsel %vm1056, %v1044, 0
      %v1064 = vsel %vm1056, %v1045, 0
      %v1067 = vsel %vm1056, %v1046, 0
      %v1070 = vsel %vm1056, %v1047, 0
      %v1073 = vsel %vm1056, %v1048, 0
      %v1076 = vsel %vm1056, %v1049, 0
      %v1079 = vsel %vm1056, %v1050, 0
      %1081 = vmatprep.subr.mxu0 %v1036
      %1082 = vmatpush1.msra.mxu0 %v1035
      %1083 = vmatprep.subr.mxu0 %v1061
      %1084 = vmatpush1.msra.mxu0 %v1058
      %1085 = vmatprep.subr.mxu0 0.0
      %1086 = vmatpush1.msra.mxu0 0.0
      %1087 = vmatprep.subr.mxu0 0.0
      %1088 = vmatpush1.msra.mxu0 0.0
      %1089 = vmatprep.subr.mxu0 0.0
      %1090 = vmatpush1.msra.mxu0 0.0
      %1091 = vmatprep.subr.mxu0 0.0
      %1092 = vmatpush1.msra.mxu0 0.0
      %1093 = vmatprep.subr.mxu0 0.0
      %1094 = vmatpush1.msra.mxu0 0.0
      %1095 = vmatprep.subr.mxu0 0.0
      %1096 = vmatpush1.msra.mxu0 0.0
      %1097 = vmatprep.subr.mxu0 0.0
      %1098 = vmatpush1.msra.mxu0 0.0
      %1099 = vmatprep.subr.mxu0 0.0
      %1100 = vmatpush1.msra.mxu0 0.0
      %1101 = vmatprep.subr.mxu0 0.0
      %1102 = vmatpush1.msra.mxu0 0.0
      %1103 = vmatprep.subr.mxu0 0.0
      %1104 = vmatpush1.msra.mxu0 0.0
      %1105 = vmatprep.subr.mxu0 0.0
      %1106 = vmatpush1.msra.mxu0 0.0
      %1107 = vmatprep.subr.mxu0 0.0
      %1108 = vmatpush1.msra.mxu0 0.0
      %1109 = vmatprep.subr.mxu0 0.0
      %1110 = vmatpush1.msra.mxu0 0.0
      %1111 = vmatprep.subr.mxu0 0.0
      %1112 = vmatpush1.msra.mxu0 0.0
      %1113 = vmatprep.subr.mxu0 0.0
      %1114 = vmatpush1.msra.mxu0 0.0
      %1115 = vmatprep.subr.mxu0 0.0
      %1116 = vmatpush1.msra.mxu0 0.0
      %1117 = vmatprep.subr.mxu0 0.0
      %1118 = vmatpush1.msra.mxu0 0.0
      %1119 = vmatprep.subr.mxu0 0.0
      %1120 = vmatpush1.msra.mxu0 0.0
      %1121 = vmatprep.subr.mxu0 0.0
      %1122 = vmatpush1.msra.mxu0 0.0
      %1123 = vmatprep.subr.mxu0 0.0
      %1124 = vmatpush1.msra.mxu0 0.0
      %1125 = vmatprep.subr.mxu0 0.0
      %1126 = vmatpush1.msra.mxu0 0.0
      %1127 = vmatprep.subr.mxu0 0.0
      %1128 = vmatpush1.msra.mxu0 0.0
      %1129 = vmatprep.subr.mxu0 0.0
      %1130 = vmatpush1.msra.mxu0 0.0
      %1131 = vmatprep.subr.mxu0 0.0
      %1132 = vmatpush1.msra.mxu0 0.0
      %1133 = vmatprep.subr.mxu0 0.0
      %1134 = vmatpush1.msra.mxu0 0.0
      %1135 = vmatprep.subr.mxu0 0.0
      %1136 = vmatpush1.msra.mxu0 0.0
      %1137 = vmatprep.subr.mxu0 0.0
      %1138 = vmatpush1.msra.mxu0 0.0
      %1139 = vmatprep.subr.mxu0 0.0
      %1140 = vmatpush1.msra.mxu0 0.0
      %1141 = vmatprep.subr.mxu0 0.0
      %1142 = vmatpush1.msra.mxu0 0.0
      %1143 = vmatprep.subr.mxu0 0.0
      %1144 = vmatpush1.msra.mxu0 0.0
      %1145 = vmatprep.mubr.f32.mxu0 0.0
      %1146 = vmatmul.mubr.f32.gmra.mrb[0].mxu0 %v1054
      %v1147 = vpop.f32.mrb[0].mxu0
      %v1148 = vadd.f32 %v817, %v1147
      %v1149 = vpop.f32.mrb[0].mxu0
      %v1150 = vadd.f32 %v819, %v1149
      %1151 = vdwg.mxu0
      %1152 = vmatprep.subr.mxu0 %v1038
      %1153 = vmatpush1.msra.mxu0 %v1037
      %1154 = vmatprep.subr.mxu0 %v1067
      %1155 = vmatpush1.msra.mxu0 %v1064
      %1156 = vmatprep.subr.mxu0 0.0
      %1157 = vmatpush1.msra.mxu0 0.0
      %1158 = vmatprep.subr.mxu0 0.0
      %1159 = vmatpush1.msra.mxu0 0.0
      %1160 = vmatprep.subr.mxu0 0.0
      %1161 = vmatpush1.msra.mxu0 0.0
      %1162 = vmatprep.subr.mxu0 0.0
      %1163 = vmatpush1.msra.mxu0 0.0
      %1164 = vmatprep.subr.mxu0 0.0
      %1165 = vmatpush1.msra.mxu0 0.0
      %1166 = vmatprep.subr.mxu0 0.0
      %1167 = vmatpush1.msra.mxu0 0.0
      %1168 = vmatprep.subr.mxu0 0.0
      %1169 = vmatpush1.msra.mxu0 0.0
      %1170 = vmatprep.subr.mxu0 0.0
      %1171 = vmatpush1.msra.mxu0 0.0
      %1172 = vmatprep.subr.mxu0 0.0
      %1173 = vmatpush1.msra.mxu0 0.0
      %1174 = vmatprep.subr.mxu0 0.0
      %1175 = vmatpush1.msra.mxu0 0.0
      %1176 = vmatprep.subr.mxu0 0.0
      %1177 = vmatpush1.msra.mxu0 0.0
      %1178 = vmatprep.subr.mxu0 0.0
      %1179 = vmatpush1.msra.mxu0 0.0
      %1180 = vmatprep.subr.mxu0 0.0
      %1181 = vmatpush1.msra.mxu0 0.0
      %1182 = vmatprep.subr.mxu0 0.0
      %1183 = vmatpush1.msra.mxu0 0.0
      %1184 = vmatprep.subr.mxu0 0.0
      %1185 = vmatpush1.msra.mxu0 0.0
      %1186 = vmatprep.subr.mxu0 0.0
      %1187 = vmatpush1.msra.mxu0 0.0
      %1188 = vmatprep.subr.mxu0 0.0
      %1189 = vmatpush1.msra.mxu0 0.0
      %1190 = vmatprep.subr.mxu0 0.0
      %1191 = vmatpush1.msra.mxu0 0.0
      %1192 = vmatprep.subr.mxu0 0.0
      %1193 = vmatpush1.msra.mxu0 0.0
      %1194 = vmatprep.subr.mxu0 0.0
      %1195 = vmatpush1.msra.mxu0 0.0
      %1196 = vmatprep.subr.mxu0 0.0
      %1197 = vmatpush1.msra.mxu0 0.0
      %1198 = vmatprep.subr.mxu0 0.0
      %1199 = vmatpush1.msra.mxu0 0.0
      %1200 = vmatprep.subr.mxu0 0.0
      %1201 = vmatpush1.msra.mxu0 0.0
      %1202 = vmatprep.subr.mxu0 0.0
      %1203 = vmatpush1.msra.mxu0 0.0
      %1204 = vmatprep.subr.mxu0 0.0
      %1205 = vmatpush1.msra.mxu0 0.0
      %1206 = vmatprep.subr.mxu0 0.0
      %1207 = vmatpush1.msra.mxu0 0.0
      %1208 = vmatprep.subr.mxu0 0.0
      %1209 = vmatpush1.msra.mxu0 0.0
      %1210 = vmatprep.subr.mxu0 0.0
      %1211 = vmatpush1.msra.mxu0 0.0
      %1212 = vmatprep.subr.mxu0 0.0
      %1213 = vmatpush1.msra.mxu0 0.0
      %1214 = vmatprep.subr.mxu0 0.0
      %1215 = vmatpush1.msra.mxu0 0.0
      %1216 = vmatprep.mubr.f32.mxu0 0.0
      %1217 = vmatmul.mubr.f32.gmra.mrb[0].mxu0 %v1054
      %v1218 = vpop.f32.mrb[0].mxu0
      %v1219 = vadd.f32 %v888, %v1218
      %v1220 = vpop.f32.mrb[0].mxu0
      %v1221 = vadd.f32 %v890, %v1220
      %1222 = vdwg.mxu0
      %1223 = vmatprep.subr.mxu0 %v1040
      %1224 = vmatpush1.msra.mxu0 %v1039
      %1225 = vmatprep.subr.mxu0 %v1073
      %1226 = vmatpush1.msra.mxu0 %v1070
      %1227 = vmatprep.subr.mxu0 0.0
      %1228 = vmatpush1.msra.mxu0 0.0
      %1229 = vmatprep.subr.mxu0 0.0
      %1230 = vmatpush1.msra.mxu0 0.0
      %1231 = vmatprep.subr.mxu0 0.0
      %1232 = vmatpush1.msra.mxu0 0.0
      %1233 = vmatprep.subr.mxu0 0.0
      %1234 = vmatpush1.msra.mxu0 0.0
      %1235 = vmatprep.subr.mxu0 0.0
      %1236 = vmatpush1.msra.mxu0 0.0
      %1237 = vmatprep.subr.mxu0 0.0
      %1238 = vmatpush1.msra.mxu0 0.0
      %1239 = vmatprep.subr.mxu0 0.0
      %1240 = vmatpush1.msra.mxu0 0.0
      %1241 = vmatprep.subr.mxu0 0.0
      %1242 = vmatpush1.msra.mxu0 0.0
      %1243 = vmatprep.subr.mxu0 0.0
      %1244 = vmatpush1.msra.mxu0 0.0
      %1245 = vmatprep.subr.mxu0 0.0
      %1246 = vmatpush1.msra.mxu0 0.0
      %1247 = vmatprep.subr.mxu0 0.0
      %1248 = vmatpush1.msra.mxu0 0.0
      %1249 = vmatprep.subr.mxu0 0.0
      %1250 = vmatpush1.msra.mxu0 0.0
      %1251 = vmatprep.subr.mxu0 0.0
      %1252 = vmatpush1.msra.mxu0 0.0
      %1253 = vmatprep.subr.mxu0 0.0
      %1254 = vmatpush1.msra.mxu0 0.0
      %1255 = vmatprep.subr.mxu0 0.0
      %1256 = vmatpush1.msra.mxu0 0.0
      %1257 = vmatprep.subr.mxu0 0.0
      %1258 = vmatpush1.msra.mxu0 0.0
      %1259 = vmatprep.subr.mxu0 0.0
      %1260 = vmatpush1.msra.mxu0 0.0
      %1261 = vmatprep.subr.mxu0 0.0
      %1262 = vmatpush1.msra.mxu0 0.0
      %1263 = vmatprep.subr.mxu0 0.0
      %1264 = vmatpush1.msra.mxu0 0.0
      %1265 = vmatprep.subr.mxu0 0.0
      %1266 = vmatpush1.msra.mxu0 0.0
      %1267 = vmatprep.subr.mxu0 0.0
      %1268 = vmatpush1.msra.mxu0 0.0
      %1269 = vmatprep.subr.mxu0 0.0
      %1270 = vmatpush1.msra.mxu0 0.0
      %1271 = vmatprep.subr.mxu0 0.0
      %1272 = vmatpush1.msra.mxu0 0.0
      %1273 = vmatprep.subr.mxu0 0.0
      %1274 = vmatpush1.msra.mxu0 0.0
      %1275 = vmatprep.subr.mxu0 0.0
      %1276 = vmatpush1.msra.mxu0 0.0
      %1277 = vmatprep.subr.mxu0 0.0
      %1278 = vmatpush1.msra.mxu0 0.0
      %1279 = vmatprep.subr.mxu0 0.0
      %1280 = vmatpush1.msra.mxu0 0.0
      %1281 = vmatprep.subr.mxu0 0.0
      %1282 = vmatpush1.msra.mxu0 0.0
      %1283 = vmatprep.subr.mxu0 0.0
      %1284 = vmatpush1.msra.mxu0 0.0
      %1285 = vmatprep.subr.mxu0 0.0
      %1286 = vmatpush1.msra.mxu0 0.0
      %1287 = vmatprep.mubr.f32.mxu0 0.0
      %1288 = vmatmul.mubr.f32.gmra.mrb[0].mxu0 %v1054
      %v1289 = vpop.f32.mrb[0].mxu0
      %v1290 = vadd.f32 %v959, %v1289
      %v1291 = vpop.f32.mrb[0].mxu0
      %v1292 = vadd.f32 %v961, %v1291
      %1293 = vdwg.mxu0
      %1294 = vmatprep.subr.mxu0 %v1042
      %1295 = vmatpush1.msra.mxu0 %v1041
      %1296 = vmatprep.subr.mxu0 %v1079
      %1297 = vmatpush1.msra.mxu0 %v1076
      %1298 = vmatprep.subr.mxu0 0.0
      %1299 = vmatpush1.msra.mxu0 0.0
      %1300 = vmatprep.subr.mxu0 0.0
      %1301 = vmatpush1.msra.mxu0 0.0
      %1302 = vmatprep.subr.mxu0 0.0
      %1303 = vmatpush1.msra.mxu0 0.0
      %1304 = vmatprep.subr.mxu0 0.0
      %1305 = vmatpush1.msra.mxu0 0.0
      %1306 = vmatprep.subr.mxu0 0.0
      %1307 = vmatpush1.msra.mxu0 0.0
      %1308 = vmatprep.subr.mxu0 0.0
      %1309 = vmatpush1.msra.mxu0 0.0
      %1310 = vmatprep.subr.mxu0 0.0
      %1311 = vmatpush1.msra.mxu0 0.0
      %1312 = vmatprep.subr.mxu0 0.0
      %1313 = vmatpush1.msra.mxu0 0.0
      %1314 = vmatprep.subr.mxu0 0.0
      %1315 = vmatpush1.msra.mxu0 0.0
      %1316 = vmatprep.subr.mxu0 0.0
      %1317 = vmatpush1.msra.mxu0 0.0
      %1318 = vmatprep.subr.mxu0 0.0
      %1319 = vmatpush1.msra.mxu0 0.0
      %1320 = vmatprep.subr.mxu0 0.0
      %1321 = vmatpush1.msra.mxu0 0.0
      %1322 = vmatprep.subr.mxu0 0.0
      %1323 = vmatpush1.msra.mxu0 0.0
      %1324 = vmatprep.subr.mxu0 0.0
      %1325 = vmatpush1.msra.mxu0 0.0
      %1326 = vmatprep.subr.mxu0 0.0
      %1327 = vmatpush1.msra.mxu0 0.0
      %1328 = vmatprep.subr.mxu0 0.0
      %1329 = vmatpush1.msra.mxu0 0.0
      %1330 = vmatprep.subr.mxu0 0.0
      %1331 = vmatpush1.msra.mxu0 0.0
      %1332 = vmatprep.subr.mxu0 0.0
      %1333 = vmatpush1.msra.mxu0 0.0
      %1334 = vmatprep.subr.mxu0 0.0
      %1335 = vmatpush1.msra.mxu0 0.0
      %1336 = vmatprep.subr.mxu0 0.0
      %1337 = vmatpush1.msra.mxu0 0.0
      %1338 = vmatprep.subr.mxu0 0.0
      %1339 = vmatpush1.msra.mxu0 0.0
      %1340 = vmatprep.subr.mxu0 0.0
      %1341 = vmatpush1.msra.mxu0 0.0
      %1342 = vmatprep.subr.mxu0 0.0
      %1343 = vmatpush1.msra.mxu0 0.0
      %1344 = vmatprep.subr.mxu0 0.0
      %1345 = vmatpush1.msra.mxu0 0.0
      %1346 = vmatprep.subr.mxu0 0.0
      %1347 = vmatpush1.msra.mxu0 0.0
      %1348 = vmatprep.subr.mxu0 0.0
      %1349 = vmatpush1.msra.mxu0 0.0
      %1350 = vmatprep.subr.mxu0 0.0
      %1351 = vmatpush1.msra.mxu0 0.0
      %1352 = vmatprep.subr.mxu0 0.0
      %1353 = vmatpush1.msra.mxu0 0.0
      %1354 = vmatprep.subr.mxu0 0.0
      %1355 = vmatpush1.msra.mxu0 0.0
      %1356 = vmatprep.subr.mxu0 0.0
      %1357 = vmatpush1.msra.mxu0 0.0
      %1358 = vmatprep.mubr.f32.mxu0 0.0
      %1359 = vmatmul.mubr.f32.gmra.mrb[0].mxu0 %v1054
      %v1360 = vpop.f32.mrb[0].mxu0
      %v1361 = vadd.f32 %v1030, %v1360
      %v1362 = vpop.f32.mrb[0].mxu0
      %v1363 = vadd.f32 %v1032, %v1362
      %1364 = vdwg.mxu0
      %v1365 = vld [vmem:[%s8] sm:$0xff]
      %1367 = vset.pattern.permute.xlu0 0
      %1368 = vperm.xlu0 %1367, %v1365
      %v1369 = vpop.permute.xlu0 %1368
      %v1372 = vsel %vm721, %v1051, 0
      %v1375 = vsel %vm725, %v1148, 0
      %v1378 = vsel %vm725, %v1150, 0
      %v1381 = vsel %vm725, %v1219, 0
      %v1384 = vsel %vm725, %v1221, 0
      %v1387 = vsel %vm725, %v1290, 0
      %v1390 = vsel %vm725, %v1292, 0
      %v1393 = vsel %vm725, %v1361, 0
      %v1396 = vsel %vm725, %v1363, 0
      %1398 = vmatprep.subr.mxu0 %v1378
      %1399 = vmatpush1.msra.mxu0 %v1375
      %1400 = vmatprep.subr.mxu0 0.0
      %1401 = vmatpush1.msra.mxu0 0.0
      %1402 = vmatprep.subr.mxu0 0.0
      %1403 = vmatpush1.msra.mxu0 0.0
      %1404 = vmatprep.subr.mxu0 0.0
      %1405 = vmatpush1.msra.mxu0 0.0
      %1406 = vmatprep.subr.mxu0 0.0
      %1407 = vmatpush1.msra.mxu0 0.0
      %1408 = vmatprep.subr.mxu0 0.0
      %1409 = vmatpush1.msra.mxu0 0.0
      %1410 = vmatprep.subr.mxu0 0.0
      %1411 = vmatpush1.msra.mxu0 0.0
      %1412 = vmatprep.subr.mxu0 0.0
      %1413 = vmatpush1.msra.mxu0 0.0
      %1414 = vmatprep.subr.mxu0 0.0
      %1415 = vmatpush1.msra.mxu0 0.0
      %1416 = vmatprep.subr.mxu0 0.0
      %1417 = vmatpush1.msra.mxu0 0.0
      %1418 = vmatprep.subr.mxu0 0.0
      %1419 = vmatpush1.msra.mxu0 0.0
      %1420 = vmatprep.subr.mxu0 0.0
      %1421 = vmatpush1.msra.mxu0 0.0
      %1422 = vmatprep.subr.mxu0 0.0
      %1423 = vmatpush1.msra.mxu0 0.0
      %1424 = vmatprep.subr.mxu0 0.0
      %1425 = vmatpush1.msra.mxu0 0.0
      %1426 = vmatprep.subr.mxu0 0.0
      %1427 = vmatpush1.msra.mxu0 0.0
      %1428 = vmatprep.subr.mxu0 0.0
      %1429 = vmatpush1.msra.mxu0 0.0
      %1430 = vmatprep.subr.mxu0 0.0
      %1431 = vmatpush1.msra.mxu0 0.0
      %1432 = vmatprep.subr.mxu0 0.0
      %1433 = vmatpush1.msra.mxu0 0.0
      %1434 = vmatprep.subr.mxu0 0.0
      %1435 = vmatpush1.msra.mxu0 0.0
      %1436 = vmatprep.subr.mxu0 0.0
      %1437 = vmatpush1.msra.mxu0 0.0
      %1438 = vmatprep.subr.mxu0 0.0
      %1439 = vmatpush1.msra.mxu0 0.0
      %1440 = vmatprep.subr.mxu0 0.0
      %1441 = vmatpush1.msra.mxu0 0.0
      %1442 = vmatprep.subr.mxu0 0.0
      %1443 = vmatpush1.msra.mxu0 0.0
      %1444 = vmatprep.subr.mxu0 0.0
      %1445 = vmatpush1.msra.mxu0 0.0
      %1446 = vmatprep.subr.mxu0 0.0
      %1447 = vmatpush1.msra.mxu0 0.0
      %1448 = vmatprep.subr.mxu0 0.0
      %1449 = vmatpush1.msra.mxu0 0.0
      %1450 = vmatprep.subr.mxu0 0.0
      %1451 = vmatpush1.msra.mxu0 0.0
      %1452 = vmatprep.subr.mxu0 0.0
      %1453 = vmatpush1.msra.mxu0 0.0
      %1454 = vmatprep.subr.mxu0 0.0
      %1455 = vmatpush1.msra.mxu0 0.0
      %1456 = vmatprep.subr.mxu0 0.0
      %1457 = vmatpush1.msra.mxu0 0.0
      %1458 = vmatprep.subr.mxu0 0.0
      %1459 = vmatpush1.msra.mxu0 0.0
      %1460 = vmatprep.subr.mxu0 0.0
      %1461 = vmatpush1.msra.mxu0 0.0
      %1462 = vmatprep.mubr.f32.mxu0 0.0
      %1463 = vmatmul.mubr.f32.gmra.mrb[0].mxu0 %v1372
      %v1464 = vpop.f32.mrb[0].mxu0
      %v1465 = vadd.f32 %v1369, %v1464
      %v1466 = vpop.f32.mrb[0].mxu0
      %v1467 = vadd.f32 %v1369, %v1466
      %1468 = vdwg.mxu0
      %1469 = vmatprep.subr.mxu0 %v1384
      %1470 = vmatpush1.msra.mxu0 %v1381
      %1471 = vmatprep.subr.mxu0 0.0
      %1472 = vmatpush1.msra.mxu0 0.0
      %1473 = vmatprep.subr.mxu0 0.0
      %1474 = vmatpush1.msra.mxu0 0.0
      %1475 = vmatprep.subr.mxu0 0.0
      %1476 = vmatpush1.msra.mxu0 0.0
      %1477 = vmatprep.subr.mxu0 0.0
      %1478 = vmatpush1.msra.mxu0 0.0
      %1479 = vmatprep.subr.mxu0 0.0
      %1480 = vmatpush1.msra.mxu0 0.0
      %1481 = vmatprep.subr.mxu0 0.0
      %1482 = vmatpush1.msra.mxu0 0.0
      %1483 = vmatprep.subr.mxu0 0.0
      %1484 = vmatpush1.msra.mxu0 0.0
      %1485 = vmatprep.subr.mxu0 0.0
      %1486 = vmatpush1.msra.mxu0 0.0
      %1487 = vmatprep.subr.mxu0 0.0
      %1488 = vmatpush1.msra.mxu0 0.0
      %1489 = vmatprep.subr.mxu0 0.0
      %1490 = vmatpush1.msra.mxu0 0.0
      %1491 = vmatprep.subr.mxu0 0.0
      %1492 = vmatpush1.msra.mxu0 0.0
      %1493 = vmatprep.subr.mxu0 0.0
      %1494 = vmatpush1.msra.mxu0 0.0
      %1495 = vmatprep.subr.mxu0 0.0
      %1496 = vmatpush1.msra.mxu0 0.0
      %1497 = vmatprep.subr.mxu0 0.0
      %1498 = vmatpush1.msra.mxu0 0.0
      %1499 = vmatprep.subr.mxu0 0.0
      %1500 = vmatpush1.msra.mxu0 0.0
      %1501 = vmatprep.subr.mxu0 0.0
      %1502 = vmatpush1.msra.mxu0 0.0
      %1503 = vmatprep.subr.mxu0 0.0
      %1504 = vmatpush1.msra.mxu0 0.0
      %1505 = vmatprep.subr.mxu0 0.0
      %1506 = vmatpush1.msra.mxu0 0.0
      %1507 = vmatprep.subr.mxu0 0.0
      %1508 = vmatpush1.msra.mxu0 0.0
      %1509 = vmatprep.subr.mxu0 0.0
      %1510 = vmatpush1.msra.mxu0 0.0
      %1511 = vmatprep.subr.mxu0 0.0
      %1512 = vmatpush1.msra.mxu0 0.0
      %1513 = vmatprep.subr.mxu0 0.0
      %1514 = vmatpush1.msra.mxu0 0.0
      %1515 = vmatprep.subr.mxu0 0.0
      %1516 = vmatpush1.msra.mxu0 0.0
      %1517 = vmatprep.subr.mxu0 0.0
      %1518 = vmatpush1.msra.mxu0 0.0
      %1519 = vmatprep.subr.mxu0 0.0
      %1520 = vmatpush1.msra.mxu0 0.0
      %1521 = vmatprep.subr.mxu0 0.0
      %1522 = vmatpush1.msra.mxu0 0.0
      %1523 = vmatprep.subr.mxu0 0.0
      %1524 = vmatpush1.msra.mxu0 0.0
      %1525 = vmatprep.subr.mxu0 0.0
      %1526 = vmatpush1.msra.mxu0 0.0
      %1527 = vmatprep.subr.mxu0 0.0
      %1528 = vmatpush1.msra.mxu0 0.0
      %1529 = vmatprep.subr.mxu0 0.0
      %1530 = vmatpush1.msra.mxu0 0.0
      %1531 = vmatprep.subr.mxu0 0.0
      %1532 = vmatpush1.msra.mxu0 0.0
      %1533 = vmatprep.mubr.f32.mxu0 0.0
      %1534 = vmatmul.mubr.f32.gmra.mrb[0].mxu0 %v1372
      %v1535 = vpop.f32.mrb[0].mxu0
      %v1536 = vadd.f32 %v1369, %v1535
      %v1537 = vpop.f32.mrb[0].mxu0
      %v1538 = vadd.f32 %v1369, %v1537
      %1539 = vdwg.mxu0
      %1540 = vmatprep.subr.mxu0 %v1390
      %1541 = vmatpush1.msra.mxu0 %v1387
      %1542 = vmatprep.subr.mxu0 0.0
      %1543 = vmatpush1.msra.mxu0 0.0
      %1544 = vmatprep.subr.mxu0 0.0
      %1545 = vmatpush1.msra.mxu0 0.0
      %1546 = vmatprep.subr.mxu0 0.0
      %1547 = vmatpush1.msra.mxu0 0.0
      %1548 = vmatprep.subr.mxu0 0.0
      %1549 = vmatpush1.msra.mxu0 0.0
      %1550 = vmatprep.subr.mxu0 0.0
      %1551 = vmatpush1.msra.mxu0 0.0
      %1552 = vmatprep.subr.mxu0 0.0
      %1553 = vmatpush1.msra.mxu0 0.0
      %1554 = vmatprep.subr.mxu0 0.0
      %1555 = vmatpush1.msra.mxu0 0.0
      %1556 = vmatprep.subr.mxu0 0.0
      %1557 = vmatpush1.msra.mxu0 0.0
      %1558 = vmatprep.subr.mxu0 0.0
      %1559 = vmatpush1.msra.mxu0 0.0
      %1560 = vmatprep.subr.mxu0 0.0
      %1561 = vmatpush1.msra.mxu0 0.0
      %1562 = vmatprep.subr.mxu0 0.0
      %1563 = vmatpush1.msra.mxu0 0.0
      %1564 = vmatprep.subr.mxu0 0.0
      %1565 = vmatpush1.msra.mxu0 0.0
      %1566 = vmatprep.subr.mxu0 0.0
      %1567 = vmatpush1.msra.mxu0 0.0
      %1568 = vmatprep.subr.mxu0 0.0
      %1569 = vmatpush1.msra.mxu0 0.0
      %1570 = vmatprep.subr.mxu0 0.0
      %1571 = vmatpush1.msra.mxu0 0.0
      %1572 = vmatprep.subr.mxu0 0.0
      %1573 = vmatpush1.msra.mxu0 0.0
      %1574 = vmatprep.subr.mxu0 0.0
      %1575 = vmatpush1.msra.mxu0 0.0
      %1576 = vmatprep.subr.mxu0 0.0
      %1577 = vmatpush1.msra.mxu0 0.0
      %1578 = vmatprep.subr.mxu0 0.0
      %1579 = vmatpush1.msra.mxu0 0.0
      %1580 = vmatprep.subr.mxu0 0.0
      %1581 = vmatpush1.msra.mxu0 0.0
      %1582 = vmatprep.subr.mxu0 0.0
      %1583 = vmatpush1.msra.mxu0 0.0
      %1584 = vmatprep.subr.mxu0 0.0
      %1585 = vmatpush1.msra.mxu0 0.0
      %1586 = vmatprep.subr.mxu0 0.0
      %1587 = vmatpush1.msra.mxu0 0.0
      %1588 = vmatprep.subr.mxu0 0.0
      %1589 = vmatpush1.msra.mxu0 0.0
      %1590 = vmatprep.subr.mxu0 0.0
      %1591 = vmatpush1.msra.mxu0 0.0
      %1592 = vmatprep.subr.mxu0 0.0
      %1593 = vmatpush1.msra.mxu0 0.0
      %1594 = vmatprep.subr.mxu0 0.0
      %1595 = vmatpush1.msra.mxu0 0.0
      %1596 = vmatprep.subr.mxu0 0.0
      %1597 = vmatpush1.msra.mxu0 0.0
      %1598 = vmatprep.subr.mxu0 0.0
      %1599 = vmatpush1.msra.mxu0 0.0
      %1600 = vmatprep.subr.mxu0 0.0
      %1601 = vmatpush1.msra.mxu0 0.0
      %1602 = vmatprep.subr.mxu0 0.0
      %1603 = vmatpush1.msra.mxu0 0.0
      %1604 = vmatprep.mubr.f32.mxu0 0.0
      %1605 = vmatmul.mubr.f32.gmra.mrb[0].mxu0 %v1372
      %v1606 = vpop.f32.mrb[0].mxu0
      %v1607 = vadd.f32 %v1369, %v1606
      %v1608 = vpop.f32.mrb[0].mxu0
      %v1609 = vadd.f32 %v1369, %v1608
      %1610 = vdwg.mxu0
      %1611 = vmatprep.subr.mxu0 %v1396
      %1612 = vmatpush1.msra.mxu0 %v1393
      %1613 = vmatprep.subr.mxu0 0.0
      %1614 = vmatpush1.msra.mxu0 0.0
      %1615 = vmatprep.subr.mxu0 0.0
      %1616 = vmatpush1.msra.mxu0 0.0
      %1617 = vmatprep.subr.mxu0 0.0
      %1618 = vmatpush1.msra.mxu0 0.0
      %1619 = vmatprep.subr.mxu0 0.0
      %1620 = vmatpush1.msra.mxu0 0.0
      %1621 = vmatprep.subr.mxu0 0.0
      %1622 = vmatpush1.msra.mxu0 0.0
      %1623 = vmatprep.subr.mxu0 0.0
      %1624 = vmatpush1.msra.mxu0 0.0
      %1625 = vmatprep.subr.mxu0 0.0
      %1626 = vmatpush1.msra.mxu0 0.0
      %1627 = vmatprep.subr.mxu0 0.0
      %1628 = vmatpush1.msra.mxu0 0.0
      %1629 = vmatprep.subr.mxu0 0.0
      %1630 = vmatpush1.msra.mxu0 0.0
      %1631 = vmatprep.subr.mxu0 0.0
      %1632 = vmatpush1.msra.mxu0 0.0
      %1633 = vmatprep.subr.mxu0 0.0
      %1634 = vmatpush1.msra.mxu0 0.0
      %1635 = vmatprep.subr.mxu0 0.0
      %1636 = vmatpush1.msra.mxu0 0.0
      %1637 = vmatprep.subr.mxu0 0.0
      %1638 = vmatpush1.msra.mxu0 0.0
      %1639 = vmatprep.subr.mxu0 0.0
      %1640 = vmatpush1.msra.mxu0 0.0
      %1641 = vmatprep.subr.mxu0 0.0
      %1642 = vmatpush1.msra.mxu0 0.0
      %1643 = vmatprep.subr.mxu0 0.0
      %1644 = vmatpush1.msra.mxu0 0.0
      %1645 = vmatprep.subr.mxu0 0.0
      %1646 = vmatpush1.msra.mxu0 0.0
      %1647 = vmatprep.subr.mxu0 0.0
      %1648 = vmatpush1.msra.mxu0 0.0
      %1649 = vmatprep.subr.mxu0 0.0
      %1650 = vmatpush1.msra.mxu0 0.0
      %1651 = vmatprep.subr.mxu0 0.0
      %1652 = vmatpush1.msra.mxu0 0.0
      %1653 = vmatprep.subr.mxu0 0.0
      %1654 = vmatpush1.msra.mxu0 0.0
      %1655 = vmatprep.subr.mxu0 0.0
      %1656 = vmatpush1.msra.mxu0 0.0
      %1657 = vmatprep.subr.mxu0 0.0
      %1658 = vmatpush1.msra.mxu0 0.0
      %1659 = vmatprep.subr.mxu0 0.0
      %1660 = vmatpush1.msra.mxu0 0.0
      %1661 = vmatprep.subr.mxu0 0.0
      %1662 = vmatpush1.msra.mxu0 0.0
      %1663 = vmatprep.subr.mxu0 0.0
      %1664 = vmatpush1.msra.mxu0 0.0
      %1665 = vmatprep.subr.mxu0 0.0
      %1666 = vmatpush1.msra.mxu0 0.0
      %1667 = vmatprep.subr.mxu0 0.0
      %1668 = vmatpush1.msra.mxu0 0.0
      %1669 = vmatprep.subr.mxu0 0.0
      %1670 = vmatpush1.msra.mxu0 0.0
      %1671 = vmatprep.subr.mxu0 0.0
      %1672 = vmatpush1.msra.mxu0 0.0
      %1673 = vmatprep.subr.mxu0 0.0
      %1674 = vmatpush1.msra.mxu0 0.0
      %1675 = vmatprep.mubr.f32.mxu0 0.0
      %1676 = vmatmul.mubr.f32.gmra.mrb[0].mxu0 %v1372
      %v1677 = vpop.f32.mrb[0].mxu0
      %v1678 = vadd.f32 %v1369, %v1677
      %v1679 = vpop.f32.mrb[0].mxu0
      %v1680 = vadd.f32 %v1369, %v1679
      %1681 = vdwg.mxu0
      %v1682 = vxor.u32 %v1465, 2147483648
      %v1683 = vxor.u32 %v1467, 2147483648
      %v1684 = vxor.u32 %v1536, 2147483648
      %v1685 = vxor.u32 %v1538, 2147483648
      %v1686 = vxor.u32 %v1607, 2147483648
      %v1687 = vxor.u32 %v1609, 2147483648
      %v1688 = vxor.u32 %v1678, 2147483648
      %v1689 = vxor.u32 %v1680, 2147483648
      %v1690 = vmul.f32 %v1682, 1.442695
      %v1691 = vpow.pop %v1690
      %v1692 = vmul.f32 %v1683, 1.442695
      %v1693 = vpow.pop %v1692
      %v1694 = vmul.f32 %v1684, 1.442695
      %v1695 = vpow.pop %v1694
      %v1696 = vmul.f32 %v1685, 1.442695
      %v1697 = vpow.pop %v1696
      %v1698 = vmul.f32 %v1686, 1.442695
      %v1699 = vpow.pop %v1698
      %v1700 = vmul.f32 %v1687, 1.442695
      %v1701 = vpow.pop %v1700
      %v1702 = vmul.f32 %v1688, 1.442695
      %v1703 = vpow.pop %v1702
      %v1704 = vmul.f32 %v1689, 1.442695
      %v1705 = vpow.pop %v1704
      %v1706 = vadd.f32 %v1691, 1.0
      %v1707 = vadd.f32 %v1693, 1.0
      %v1708 = vadd.f32 %v1695, 1.0
      %v1709 = vadd.f32 %v1697, 1.0
      %v1710 = vadd.f32 %v1699, 1.0
      %v1711 = vadd.f32 %v1701, 1.0
      %v1712 = vadd.f32 %v1703, 1.0
      %v1713 = vadd.f32 %v1705, 1.0
      %v1714 = vrcp.pop %v1706
      %v1715 = vmul.f32 1.0, %v1714
      %v1716 = vrcp.pop %v1707
      %v1717 = vmul.f32 1.0, %v1716
      %v1718 = vrcp.pop %v1708
      %v1719 = vmul.f32 1.0, %v1718
      %v1720 = vrcp.pop %v1709
      %v1721 = vmul.f32 1.0, %v1720
      %v1722 = vrcp.pop %v1710
      %v1723 = vmul.f32 1.0, %v1722
      %v1724 = vrcp.pop %v1711
      %v1725 = vmul.f32 1.0, %v1724
      %v1726 = vrcp.pop %v1712
      %v1727 = vmul.f32 1.0, %v1726
      %v1728 = vrcp.pop %v1713
      %v1729 = vmul.f32 1.0, %v1728
      %v1730 = vmul.f32 %v411, %v1715
      %v1731 = vmul.f32 %v412, %v1717
      %v1732 = vmul.f32 %v413, %v1719
      %v1733 = vmul.f32 %v414, %v1721
      %v1734 = vmul.f32 %v415, %v1723
      %v1735 = vmul.f32 %v416, %v1725
      %v1736 = vmul.f32 %v417, %v1727
      %v1737 = vmul.f32 %v418, %v1729
      %1738 = vst [vmem:[%s409] sm:$0xff] %v1730
      %1739 = vst [vmem:[%s409 + $0x8] sm:$0xff] %v1731
      %1740 = vst [vmem:[%s409 + $0x10] sm:$0xff] %v1732
      %1741 = vst [vmem:[%s409 + $0x18] sm:$0xff] %v1733
      %1742 = vst [vmem:[%s409 + $0x20] sm:$0xff] %v1734
      %1743 = vst [vmem:[%s409 + $0x28] sm:$0xff] %v1735
      %1744 = vst [vmem:[%s409 + $0x30] sm:$0xff] %v1736
      %1745 = vst [vmem:[%s409 + $0x38] sm:$0xff] %v1737
      %s1746 = smul.u32 8, %s25
      %p1747 = scmp.lt.s32.totalorder %s24, 1
      %s1748 = scalar_select %p1747, %s24, 1
      %p1749 = scmp.lt.s32.totalorder %s1746, 7
      %s1750 = scalar_select %p1749, %s1746, 7
      %s1751 = smul.addr %s1748, 8
      %s1752 = sadd.s32 %s1750, %s1751
      %s1753 = smul.addr %s1752, 8
      %s1754 = scalar_lea.vmem %s9, %s1753
      // Predicated region
      $region57: #{esa_forward.9} parent=55 // pred_check
        %p1755 = pneg %p258
      $region58: #{esa_forward.9} parent=55 // pred_check_branch
        %1757 = sbr.rel (%p1755) target = $region60
      $region59: #{esa_forward.9} parent=55 // pred_region
        %s1758 = smul.u32 8, %s25
      $region60: #{esa_forward.9} parent=55 // pred_fallthru
        _
    $region56: #{esa_forward.9} parent=5 // pred_fallthru
      _
    %p1759 = scmp.le.s32.totalorder 2, %s15
    // Predicated region
    $region61: #{esa_forward.9} parent=5 // pred_check
      %p1760 = pneg %p1759
    $region62: #{esa_forward.9} parent=5 // pred_check_branch
      %1762 = sbr.rel (%p1760) target = $region64
    $region63: #{esa_forward.9} parent=5 // pred_region
      %s1763 = ssub.s32 %s15, 2
      // Predicated region
      $region65: #{esa_forward.9} parent=63 // pred_check
        %p1764 = pneg %p264
      $region66: #{esa_forward.9} parent=63 // pred_check_branch
        %1766 = sbr.rel (%p1764) target = $region68
      $region67: #{esa_forward.9} parent=63 // pred_region
        %s1767 = smul.u32 8, %s27
        %p1768 = scmp.lt.s32.totalorder %s26, 1
        %s1769 = scalar_select %p1768, %s26, 1
        %p1770 = scmp.lt.s32.totalorder %s1767, 7
        %s1771 = scalar_select %p1770, %s1767, 7
        %s1772 = smul.addr %s1769, 8
        %s1773 = sadd.s32 %s1771, %s1772
        %s1774 = smul.addr %s1773, 8
        %s1775 = scalar_lea.vmem %s9, %s1774
      $region68: #{esa_forward.9} parent=63 // pred_fallthru
        _
    $region64: #{esa_forward.9} parent=5 // pred_fallthru
      _
  $region6: #{esa_forward.9} parent=0 // loop_footer
    %s19 = sadd.s32 1, %s15
  $region7: #{esa_forward.9} parent=0 // loop_footer_branch
    %14 = sbr.rel target = $region3
  $region8: #{esa_forward.9} parent=0 // loop_exit
    _

</llo_original>
